<compile_context>
chip_gen: v5e
topology: v5e:2x2
jax: 0.10.0
libtpu: 0.0.40
codegen_flags: <defaults>
</compile_context>

<pallas_src>
import jax
import jax.numpy as jnp
from jax.experimental import pallas as pl
from jax.experimental.pallas import tpu as pltpu


def window_attn_kernel(x_ref, wqkv_ref, bqkv_ref, bias_ref, wproj_ref,
                       bproj_ref, o_ref, out_scratch):
    # x_ref      : VMEM (Bt, Np, C)       bf16 block of Bt windows (rows padded)
    # wqkv_ref   : VMEM (C, 3C)           bf16 qkv weight^T (Q cols pre-scaled)
    # bqkv_ref   : VMEM (1, 3C)           f32 qkv bias (Q part pre-scaled)
    # bias_ref   : VMEM (nh, Np, Np)      f32 dense relative-position bias
    #                                      (padded key cols = -1e9)
    # wproj_ref  : VMEM (C, C)            bf16 proj weight^T
    # bproj_ref  : VMEM (1, C)            f32 proj bias
    # o_ref      : VMEM (Bt, Np, C)       output block
    # out_scratch: VMEM (Bt*Np, C)        bf16 per-head output staging buffer
    bt, n, c = x_ref.shape
    nh = bias_ref.shape[0]
    hd = c // nh

    # One batched QKV projection for the whole block of windows (MXU).
    x2 = x_ref[...].reshape(bt * n, c)                       # free view (n % 16 == 0)
    qkv = jnp.dot(x2, wqkv_ref[...],
                  preferred_element_type=jnp.float32) + bqkv_ref[...]    # (bt*n, 3c)
    qkv = qkv.reshape(bt, n, 3 * c)                          # free view

    for h in range(nh):                                      # small static head loop
        # Static lane slices of the fused qkv activation.
        q = qkv[:, :, h * hd:(h + 1) * hd].astype(jnp.bfloat16)          # (bt, n, hd)
        k = qkv[:, :, c + h * hd:c + (h + 1) * hd].astype(jnp.bfloat16)
        v = qkv[:, :, 2 * c + h * hd:2 * c + (h + 1) * hd].astype(jnp.bfloat16)

        # q @ k^T, batched over the windows in the block (MXU, f32 acc).
        logits = jnp.einsum("bnd,bmd->bnm", q, k,
                            preferred_element_type=jnp.float32)          # (bt, n, n)
        # Bias streamed from VMEM at point of use (not hoisted into vregs).
        logits = logits + bias_ref[h]

        # Numerically stable softmax over keys (f32); division on the EUP.
        m = jnp.max(logits, axis=-1, keepdims=True)
        p = jnp.exp(logits - m)
        l = jnp.sum(p, axis=-1, keepdims=True)
        attn = (p * pl.reciprocal(l, approx=True)).astype(jnp.bfloat16)

        out_h = jnp.einsum("bnm,bmd->bnd", attn, v,
                           preferred_element_type=jnp.float32)           # (bt, n, hd)
        # Lane-contiguous staging: head h occupies a static 8-wide lane slice.
        out_scratch[:, h * hd:(h + 1) * hd] = (
            out_h.reshape(bt * n, hd).astype(out_scratch.dtype))

    # Fused head-concat + output projection: one K=C MXU matmul per block.
    y = jnp.dot(out_scratch[...], wproj_ref[...],
                preferred_element_type=jnp.float32) + bproj_ref[...]      # (bt*n, c)
    o_ref[...] = y.reshape(bt, n, c).astype(o_ref.dtype)


def _relative_position_index(wh, ww):
    """Exactly mirrors the PyTorch buffer construction."""
    coords = jnp.stack(jnp.meshgrid(jnp.arange(wh), jnp.arange(ww),
                                    indexing="ij"))                      # (2, wh, ww)
    coords_flat = coords.reshape(2, -1)                                  # (2, N)
    rel = coords_flat[:, :, None] - coords_flat[:, None, :]              # (2, N, N)
    rel = rel.transpose(1, 2, 0)                                         # (N, N, 2)
    rel = rel.at[:, :, 0].add(wh - 1)
    rel = rel.at[:, :, 1].add(ww - 1)
    rel = rel.at[:, :, 0].multiply(2 * ww - 1)
    return rel.sum(-1)                                                   # (N, N)


def window_attention_pallas(x, w_qkv, b_qkv, w_proj, b_proj, bias_table,
                            window_size, num_heads, qk_scale=None, block_b=4):
    """x: (B_, N, C). Weights in PyTorch nn.Linear layout (out, in)."""
    B, N, C = x.shape
    wh, ww = window_size
    assert N == wh * ww and C % num_heads == 0
    hd = C // num_heads
    scale = qk_scale if qk_scale is not None else hd ** -0.5
    out_dtype = x.dtype

    # Pad N so all in-kernel reshapes are free views (bf16 sublane tile = 16).
    Np = ((N + 15) // 16) * 16
    # Pad the window count so every grid step processes a full block of
    # block_b windows (no silent 1-window fallback).
    block_b = max(1, min(block_b, B))
    Bp = ((B + block_b - 1) // block_b) * block_b

    # Precompute the relative-position-bias gather once, outside the kernel.
    # Padded key columns get a large negative bias so softmax ignores them.
    idx = _relative_position_index(wh, ww).reshape(-1)
    rel_bias = bias_table[idx].reshape(N, N, num_heads).transpose(2, 0, 1)
    rel_bias_p = jnp.full((num_heads, Np, Np), -1e9, jnp.float32)
    rel_bias_p = rel_bias_p.at[:, :N, :N].set(rel_bias.astype(jnp.float32))

    # Fold the qk scale into the Q columns of the qkv projection (constant
    # transform) so the kernel never multiplies q by scale.
    wqkv_t = w_qkv.T.astype(jnp.float32)
    wqkv_t = wqkv_t.at[:, :C].multiply(scale)
    bqkv = b_qkv.astype(jnp.float32)
    bqkv = bqkv.at[:C].multiply(scale)

    # bf16 MXU operands (f32 accumulation stays inside the kernel).
    wqkv_b = wqkv_t.astype(jnp.bfloat16)                                 # (C, 3C)
    wproj_b = w_proj.T.astype(jnp.bfloat16)                              # (C, C)
    bqkv2 = bqkv.reshape(1, 3 * C)                                       # f32
    bproj2 = b_proj.reshape(1, C).astype(jnp.float32)

    # Pad + cast activations; padded rows / windows are zero.
    x_p = jnp.zeros((Bp, Np, C), jnp.bfloat16)
    x_p = x_p.at[:B, :N, :].set(x.astype(jnp.bfloat16))

    # Conservative scoped-VMEM budget (weights resident + double-buffered
    # x/out blocks + staging scratch), clamped to stay safe on v5e/v7x.
    out_isize = jnp.dtype(out_dtype).itemsize
    est = (wqkv_b.size * 2 + wproj_b.size * 2 + bqkv2.size * 4 + bproj2.size * 4
           + rel_bias_p.size * 4
           + 2 * (block_b * Np * C * 2 + block_b * Np * C * out_isize)
           + block_b * Np * C * 2)
    vmem_limit = int(min(max(2 * est + (4 << 20), 32 << 20), 48 << 20))

    out_p = pl.pallas_call(
        window_attn_kernel,
        out_shape=jax.ShapeDtypeStruct((Bp, Np, C), out_dtype),
        grid=(Bp // block_b,),
        in_specs=[
            pl.BlockSpec((block_b, Np, C), lambda b: (b, 0, 0)),          # x
            pl.BlockSpec((C, 3 * C), lambda b: (0, 0)),                   # Wqkv^T
            pl.BlockSpec((1, 3 * C), lambda b: (0, 0)),                   # b_qkv
            pl.BlockSpec((num_heads, Np, Np), lambda b: (0, 0, 0)),       # rel bias
            pl.BlockSpec((C, C), lambda b: (0, 0)),                       # Wproj^T
            pl.BlockSpec((1, C), lambda b: (0, 0)),                       # b_proj
        ],
        out_specs=pl.BlockSpec((block_b, Np, C), lambda b: (b, 0, 0)),
        scratch_shapes=[pltpu.VMEM((block_b * Np, C), jnp.bfloat16)],
        compiler_params=pltpu.CompilerParams(
            dimension_semantics=("parallel",),
            vmem_limit_bytes=vmem_limit),
    )(x_p, wqkv_b, bqkv2, rel_bias_p, wproj_b, bproj2)

    return out_p[:B, :N, :]


def window_attention_ref(x, w_qkv, b_qkv, w_proj, b_proj, bias_table,
                         window_size, num_heads):
    """Pure-JAX f32 reference replicating the PyTorch forward (mask=None)."""
    B, N, C = x.shape
    wh, ww = window_size
    hd = C // num_heads
    scale = hd ** -0.5

    qkv = x @ w_qkv.T + b_qkv                                            # (B, N, 3C)
    qkv = qkv.reshape(B, N, 3, num_heads, hd).transpose(2, 0, 3, 1, 4)
    q, k, v = qkv[0], qkv[1], qkv[2]                                     # (B, nh, N, hd)
    q = q * scale
    attn = q @ jnp.swapaxes(k, -2, -1)                                   # (B, nh, N, N)

    idx = _relative_position_index(wh, ww).reshape(-1)
    rel_bias = bias_table[idx].reshape(N, N, num_heads).transpose(2, 0, 1)
    attn = attn + rel_bias[None]
    attn = jax.nn.softmax(attn, axis=-1)

    out = jnp.swapaxes(attn @ v, 1, 2).reshape(B, N, C)
    return out @ w_proj.T + b_proj


if __name__ == "__main__":
    key = jax.random.PRNGKey(0)
    k_x, k_wq, k_bq, k_wp, k_bp, k_tab = jax.random.split(key, 6)

    dim, num_heads = 32, 4
    window_size = (7, 7)
    N = window_size[0] * window_size[1]
    B = 8                                    # (batch * num_windows) windows

    x = jax.random.normal(k_x, (B, N, dim), dtype=jnp.float32)

    bound = 1.0 / (dim ** 0.5)               # nn.Linear default init bound
    w_qkv = jax.random.uniform(k_wq, (3 * dim, dim), jnp.float32, -bound, bound)
    b_qkv = jax.random.uniform(k_bq, (3 * dim,), jnp.float32, -bound, bound)
    w_proj = jax.random.uniform(k_wp, (dim, dim), jnp.float32, -bound, bound)
    b_proj = jax.random.uniform(k_bp, (dim,), jnp.float32, -bound, bound)
    bias_table = 0.02 * jax.random.normal(
        k_tab,
        ((2 * window_size[0] - 1) * (2 * window_size[1] - 1), num_heads),
        dtype=jnp.float32)

    out = jax.block_until_ready(window_attention_pallas(
        x, w_qkv, b_qkv, w_proj, b_proj, bias_table, window_size, num_heads,
        block_b=4))
    ref = window_attention_ref(x, w_qkv, b_qkv, w_proj, b_proj, bias_table,
                               window_size, num_heads)

    assert out.shape == x.shape and out.dtype == x.dtype
    # bf16 MXU operands + approx reciprocal in the softmax denominator give
    # small (<<1e-2 at these magnitudes) deviations vs the f32 reference.
    if not bool(jnp.allclose(out, ref, atol=3e-2, rtol=3e-2)):
        raise SystemExit("mismatch vs reference")
    print("KERNEL_OK")
</pallas_src>

<mosaic_0001>
module attributes {stable_mosaic.version = 11 : i64} {
  func.func @window_attn_kernel(%arg0: i32, %arg1: memref<4x64x32xbf16, #tpu.memory_space<vmem>>, %arg2: memref<32x96xbf16, #tpu.memory_space<vmem>>, %arg3: memref<1x96xf32, #tpu.memory_space<vmem>>, %arg4: memref<4x64x64xf32, #tpu.memory_space<vmem>>, %arg5: memref<32x32xbf16, #tpu.memory_space<vmem>>, %arg6: memref<1x32xf32, #tpu.memory_space<vmem>>, %arg7: memref<4x64x32xf32, #tpu.memory_space<vmem>>, %arg8: memref<256x32xbf16, #tpu.memory_space<vmem>>) attributes {dimension_semantics = [#tpu.dimension_semantics<parallel>], iteration_bounds = array<i64: 2>, scalar_prefetch = 0 : i64, scratch_operands = 1 : i64, tpu.core_type = #tpu.core_type<tc>, window_params = [{transform_indices = @transform_0, window_bounds = array<i64: 4, 64, 32>}, {pipeline_mode = #tpu.pipeline_mode<synchronous>, transform_indices = @transform_1, window_bounds = array<i64: 32, 96>}, {pipeline_mode = #tpu.pipeline_mode<synchronous>, transform_indices = @transform_2, window_bounds = array<i64: 1, 96>}, {pipeline_mode = #tpu.pipeline_mode<synchronous>, transform_indices = @transform_3, window_bounds = array<i64: 4, 64, 64>}, {pipeline_mode = #tpu.pipeline_mode<synchronous>, transform_indices = @transform_4, window_bounds = array<i64: 32, 32>}, {pipeline_mode = #tpu.pipeline_mode<synchronous>, transform_indices = @transform_5, window_bounds = array<i64: 1, 32>}, {transform_indices = @transform_6, window_bounds = array<i64: 4, 64, 32>}]} {
    %c0 = arith.constant 0 : index
    %c0_0 = arith.constant 0 : index
    %c0_1 = arith.constant 0 : index
    %0 = vector.load %arg1[%c0, %c0_0, %c0_1] : memref<4x64x32xbf16, #tpu.memory_space<vmem>>, vector<4x64x32xbf16>
    %1 = vector.shape_cast %0 : vector<4x64x32xbf16> to vector<256x32xbf16>
    %c0_2 = arith.constant 0 : index
    %c0_3 = arith.constant 0 : index
    %2 = vector.load %arg2[%c0_2, %c0_3] : memref<32x96xbf16, #tpu.memory_space<vmem>>, vector<32x96xbf16>
    %cst = arith.constant dense<0.000000e+00> : vector<256x96xf32>
    %3 = tpu.matmul %1, %2, %cst {dimension_numbers = #tpu.dot_dimension_numbers<[1], [0], [0], [1], [0, 0, 1, 1], [], []>} : vector<256x32xbf16>, vector<32x96xbf16>, vector<256x96xf32> -> vector<256x96xf32>
    %c0_4 = arith.constant 0 : index
    %c0_5 = arith.constant 0 : index
    %4 = vector.load %arg3[%c0_4, %c0_5] : memref<1x96xf32, #tpu.memory_space<vmem>>, vector<1x96xf32>
    %5 = vector.broadcast %4 : vector<1x96xf32> to vector<256x96xf32>
    %6 = arith.addf %3, %5 : vector<256x96xf32>
    %7 = vector.shape_cast %6 : vector<256x96xf32> to vector<4x64x96xf32>
    %8 = vector.extract_strided_slice %7 {offsets = [0, 0, 0], sizes = [4, 64, 8], strides = [1, 1, 1]} : vector<4x64x96xf32> to vector<4x64x8xf32>
    %9 = arith.truncf %8 : vector<4x64x8xf32> to vector<4x64x8xbf16>
    %10 = vector.extract_strided_slice %7 {offsets = [0, 0, 32], sizes = [4, 64, 8], strides = [1, 1, 1]} : vector<4x64x96xf32> to vector<4x64x8xf32>
    %11 = arith.truncf %10 : vector<4x64x8xf32> to vector<4x64x8xbf16>
    %12 = vector.extract_strided_slice %7 {offsets = [0, 0, 64], sizes = [4, 64, 8], strides = [1, 1, 1]} : vector<4x64x96xf32> to vector<4x64x8xf32>
    %13 = arith.truncf %12 : vector<4x64x8xf32> to vector<4x64x8xbf16>
    "tpu.trace_start"() <{level = 10 : i32, message = "bnd,bmd->bnm"}> : () -> ()
    %cst_6 = arith.constant dense<0.000000e+00> : vector<4x64x64xf32>
    %14 = tpu.matmul %9, %11, %cst_6 {dimension_numbers = #tpu.dot_dimension_numbers<[2], [2], [1], [1], [0, 0, 0, 1, 1, 1], [0], [0]>} : vector<4x64x8xbf16>, vector<4x64x8xbf16>, vector<4x64x64xf32> -> vector<4x64x64xf32>
    "tpu.trace_stop"() : () -> ()
    %c0_7 = arith.constant 0 : index
    %c0_8 = arith.constant 0 : index
    %c0_9 = arith.constant 0 : index
    %15 = vector.load %arg4[%c0_7, %c0_8, %c0_9] : memref<4x64x64xf32, #tpu.memory_space<vmem>>, vector<1x64x64xf32>
    %16 = vector.shape_cast %15 : vector<1x64x64xf32> to vector<64x64xf32>
    %17 = vector.shape_cast %16 : vector<64x64xf32> to vector<1x64x64xf32>
    %18 = vector.broadcast %17 : vector<1x64x64xf32> to vector<4x64x64xf32>
    %19 = arith.addf %14, %18 : vector<4x64x64xf32>
    %cst_10 = arith.constant dense<0xFF800000> : vector<4x64xf32>
    %20 = vector.multi_reduction <maximumf>, %19, %cst_10 [2] : vector<4x64x64xf32> to vector<4x64xf32>
    %21 = vector.shape_cast %20 : vector<4x64xf32> to vector<4x64x1xf32>
    %22 = vector.broadcast %21 : vector<4x64x1xf32> to vector<4x64x64xf32>
    %23 = arith.subf %19, %22 : vector<4x64x64xf32>
    %24 = math.exp %23 : vector<4x64x64xf32>
    %cst_11 = arith.constant dense<0.000000e+00> : vector<4x64xf32>
    %25 = vector.multi_reduction <add>, %24, %cst_11 [2] : vector<4x64x64xf32> to vector<4x64xf32>
    %26 = vector.shape_cast %25 : vector<4x64xf32> to vector<4x64x1xf32>
    %27 = tpu.reciprocal %26 {approx = true} : vector<4x64x1xf32> -> vector<4x64x1xf32>
    %28 = vector.broadcast %27 : vector<4x64x1xf32> to vector<4x64x64xf32>
    %29 = arith.mulf %24, %28 : vector<4x64x64xf32>
    %30 = arith.truncf %29 : vector<4x64x64xf32> to vector<4x64x64xbf16>
    "tpu.trace_start"() <{level = 10 : i32, message = "bnm,bmd->bnd"}> : () -> ()
    %cst_12 = arith.constant dense<0.000000e+00> : vector<4x64x8xf32>
    %31 = tpu.matmul %30, %13, %cst_12 {dimension_numbers = #tpu.dot_dimension_numbers<[2], [1], [1], [2], [0, 0, 0, 1, 1, 2], [0], [0]>} : vector<4x64x64xbf16>, vector<4x64x8xbf16>, vector<4x64x8xf32> -> vector<4x64x8xf32>
    "tpu.trace_stop"() : () -> ()
    %32 = vector.shape_cast %31 : vector<4x64x8xf32> to vector<256x8xf32>
    %33 = arith.truncf %32 : vector<256x8xf32> to vector<256x8xbf16>
    %c0_13 = arith.constant 0 : index
    %c0_14 = arith.constant 0 : index
    %34 = vector.load %arg8[%c0_13, %c0_14] : memref<256x32xbf16, #tpu.memory_space<vmem>>, vector<256x8xbf16>
    tpu.vector_store %arg8[%c0_13, %c0_14], %33 {strides = array<i32>} : memref<256x32xbf16, #tpu.memory_space<vmem>>, vector<256x8xbf16>,
    %35 = vector.extract_strided_slice %7 {offsets = [0, 0, 8], sizes = [4, 64, 8], strides = [1, 1, 1]} : vector<4x64x96xf32> to vector<4x64x8xf32>
    %36 = arith.truncf %35 : vector<4x64x8xf32> to vector<4x64x8xbf16>
    %37 = vector.extract_strided_slice %7 {offsets = [0, 0, 40], sizes = [4, 64, 8], strides = [1, 1, 1]} : vector<4x64x96xf32> to vector<4x64x8xf32>
    %38 = arith.truncf %37 : vector<4x64x8xf32> to vector<4x64x8xbf16>
    %39 = vector.extract_strided_slice %7 {offsets = [0, 0, 72], sizes = [4, 64, 8], strides = [1, 1, 1]} : vector<4x64x96xf32> to vector<4x64x8xf32>
    %40 = arith.truncf %39 : vector<4x64x8xf32> to vector<4x64x8xbf16>
    "tpu.trace_start"() <{level = 10 : i32, message = "bnd,bmd->bnm"}> : () -> ()
    %cst_15 = arith.constant dense<0.000000e+00> : vector<4x64x64xf32>
    %41 = tpu.matmul %36, %38, %cst_15 {dimension_numbers = #tpu.dot_dimension_numbers<[2], [2], [1], [1], [0, 0, 0, 1, 1, 1], [0], [0]>} : vector<4x64x8xbf16>, vector<4x64x8xbf16>, vector<4x64x64xf32> -> vector<4x64x64xf32>
    "tpu.trace_stop"() : () -> ()
    %c1 = arith.constant 1 : index
    %c0_16 = arith.constant 0 : index
    %c0_17 = arith.constant 0 : index
    %42 = vector.load %arg4[%c1, %c0_16, %c0_17] : memref<4x64x64xf32, #tpu.memory_space<vmem>>, vector<1x64x64xf32>
    %43 = vector.shape_cast %42 : vector<1x64x64xf32> to vector<64x64xf32>
    %44 = vector.shape_cast %43 : vector<64x64xf32> to vector<1x64x64xf32>
    %45 = vector.broadcast %44 : vector<1x64x64xf32> to vector<4x64x64xf32>
    %46 = arith.addf %41, %45 : vector<4x64x64xf32>
    %cst_18 = arith.constant dense<0xFF800000> : vector<4x64xf32>
    %47 = vector.multi_reduction <maximumf>, %46, %cst_18 [2] : vector<4x64x64xf32> to vector<4x64xf32>
    %48 = vector.shape_cast %47 : vector<4x64xf32> to vector<4x64x1xf32>
    %49 = vector.broadcast %48 : vector<4x64x1xf32> to vector<4x64x64xf32>
    %50 = arith.subf %46, %49 : vector<4x64x64xf32>
    %51 = math.exp %50 : vector<4x64x64xf32>
    %cst_19 = arith.constant dense<0.000000e+00> : vector<4x64xf32>
    %52 = vector.multi_reduction <add>, %51, %cst_19 [2] : vector<4x64x64xf32> to vector<4x64xf32>
    %53 = vector.shape_cast %52 : vector<4x64xf32> to vector<4x64x1xf32>
    %54 = tpu.reciprocal %53 {approx = true} : vector<4x64x1xf32> -> vector<4x64x1xf32>
    %55 = vector.broadcast %54 : vector<4x64x1xf32> to vector<4x64x64xf32>
    %56 = arith.mulf %51, %55 : vector<4x64x64xf32>
    %57 = arith.truncf %56 : vector<4x64x64xf32> to vector<4x64x64xbf16>
    "tpu.trace_start"() <{level = 10 : i32, message = "bnm,bmd->bnd"}> : () -> ()
    %cst_20 = arith.constant dense<0.000000e+00> : vector<4x64x8xf32>
    %58 = tpu.matmul %57, %40, %cst_20 {dimension_numbers = #tpu.dot_dimension_numbers<[2], [1], [1], [2], [0, 0, 0, 1, 1, 2], [0], [0]>} : vector<4x64x64xbf16>, vector<4x64x8xbf16>, vector<4x64x8xf32> -> vector<4x64x8xf32>
    "tpu.trace_stop"() : () -> ()
    %59 = vector.shape_cast %58 : vector<4x64x8xf32> to vector<256x8xf32>
    %60 = arith.truncf %59 : vector<256x8xf32> to vector<256x8xbf16>
    %c0_21 = arith.constant 0 : index
    %c8 = arith.constant 8 : index
    %61 = vector.load %arg8[%c0_21, %c8] : memref<256x32xbf16, #tpu.memory_space<vmem>>, vector<256x8xbf16>
    tpu.vector_store %arg8[%c0_21, %c8], %60 {strides = array<i32>} : memref<256x32xbf16, #tpu.memory_space<vmem>>, vector<256x8xbf16>,
    %62 = vector.extract_strided_slice %7 {offsets = [0, 0, 16], sizes = [4, 64, 8], strides = [1, 1, 1]} : vector<4x64x96xf32> to vector<4x64x8xf32>
    %63 = arith.truncf %62 : vector<4x64x8xf32> to vector<4x64x8xbf16>
    %64 = vector.extract_strided_slice %7 {offsets = [0, 0, 48], sizes = [4, 64, 8], strides = [1, 1, 1]} : vector<4x64x96xf32> to vector<4x64x8xf32>
    %65 = arith.truncf %64 : vector<4x64x8xf32> to vector<4x64x8xbf16>
    %66 = vector.extract_strided_slice %7 {offsets = [0, 0, 80], sizes = [4, 64, 8], strides = [1, 1, 1]} : vector<4x64x96xf32> to vector<4x64x8xf32>
    %67 = arith.truncf %66 : vector<4x64x8xf32> to vector<4x64x8xbf16>
    "tpu.trace_start"() <{level = 10 : i32, message = "bnd,bmd->bnm"}> : () -> ()
    %cst_22 = arith.constant dense<0.000000e+00> : vector<4x64x64xf32>
    %68 = tpu.matmul %63, %65, %cst_22 {dimension_numbers = #tpu.dot_dimension_numbers<[2], [2], [1], [1], [0, 0, 0, 1, 1, 1], [0], [0]>} : vector<4x64x8xbf16>, vector<4x64x8xbf16>, vector<4x64x64xf32> -> vector<4x64x64xf32>
    "tpu.trace_stop"() : () -> ()
    %c2 = arith.constant 2 : index
    %c0_23 = arith.constant 0 : index
    %c0_24 = arith.constant 0 : index
    %69 = vector.load %arg4[%c2, %c0_23, %c0_24] : memref<4x64x64xf32, #tpu.memory_space<vmem>>, vector<1x64x64xf32>
    %70 = vector.shape_cast %69 : vector<1x64x64xf32> to vector<64x64xf32>
    %71 = vector.shape_cast %70 : vector<64x64xf32> to vector<1x64x64xf32>
    %72 = vector.broadcast %71 : vector<1x64x64xf32> to vector<4x64x64xf32>
    %73 = arith.addf %68, %72 : vector<4x64x64xf32>
    %cst_25 = arith.constant dense<0xFF800000> : vector<4x64xf32>
    %74 = vector.multi_reduction <maximumf>, %73, %cst_25 [2] : vector<4x64x64xf32> to vector<4x64xf32>
    %75 = vector.shape_cast %74 : vector<4x64xf32> to vector<4x64x1xf32>
    %76 = vector.broadcast %75 : vector<4x64x1xf32> to vector<4x64x64xf32>
    %77 = arith.subf %73, %76 : vector<4x64x64xf32>
    %78 = math.exp %77 : vector<4x64x64xf32>
    %cst_26 = arith.constant dense<0.000000e+00> : vector<4x64xf32>
    %79 = vector.multi_reduction <add>, %78, %cst_26 [2] : vector<4x64x64xf32> to vector<4x64xf32>
    %80 = vector.shape_cast %79 : vector<4x64xf32> to vector<4x64x1xf32>
    %81 = tpu.reciprocal %80 {approx = true} : vector<4x64x1xf32> -> vector<4x64x1xf32>
    %82 = vector.broadcast %81 : vector<4x64x1xf32> to vector<4x64x64xf32>
    %83 = arith.mulf %78, %82 : vector<4x64x64xf32>
    %84 = arith.truncf %83 : vector<4x64x64xf32> to vector<4x64x64xbf16>
    "tpu.trace_start"() <{level = 10 : i32, message = "bnm,bmd->bnd"}> : () -> ()
    %cst_27 = arith.constant dense<0.000000e+00> : vector<4x64x8xf32>
    %85 = tpu.matmul %84, %67, %cst_27 {dimension_numbers = #tpu.dot_dimension_numbers<[2], [1], [1], [2], [0, 0, 0, 1, 1, 2], [0], [0]>} : vector<4x64x64xbf16>, vector<4x64x8xbf16>, vector<4x64x8xf32> -> vector<4x64x8xf32>
    "tpu.trace_stop"() : () -> ()
    %86 = vector.shape_cast %85 : vector<4x64x8xf32> to vector<256x8xf32>
    %87 = arith.truncf %86 : vector<256x8xf32> to vector<256x8xbf16>
    %c0_28 = arith.constant 0 : index
    %c16 = arith.constant 16 : index
    %88 = vector.load %arg8[%c0_28, %c16] : memref<256x32xbf16, #tpu.memory_space<vmem>>, vector<256x8xbf16>
    tpu.vector_store %arg8[%c0_28, %c16], %87 {strides = array<i32>} : memref<256x32xbf16, #tpu.memory_space<vmem>>, vector<256x8xbf16>,
    %89 = vector.extract_strided_slice %7 {offsets = [0, 0, 24], sizes = [4, 64, 8], strides = [1, 1, 1]} : vector<4x64x96xf32> to vector<4x64x8xf32>
    %90 = arith.truncf %89 : vector<4x64x8xf32> to vector<4x64x8xbf16>
    %91 = vector.extract_strided_slice %7 {offsets = [0, 0, 56], sizes = [4, 64, 8], strides = [1, 1, 1]} : vector<4x64x96xf32> to vector<4x64x8xf32>
    %92 = arith.truncf %91 : vector<4x64x8xf32> to vector<4x64x8xbf16>
    %93 = vector.extract_strided_slice %7 {offsets = [0, 0, 88], sizes = [4, 64, 8], strides = [1, 1, 1]} : vector<4x64x96xf32> to vector<4x64x8xf32>
    %94 = arith.truncf %93 : vector<4x64x8xf32> to vector<4x64x8xbf16>
    "tpu.trace_start"() <{level = 10 : i32, message = "bnd,bmd->bnm"}> : () -> ()
    %cst_29 = arith.constant dense<0.000000e+00> : vector<4x64x64xf32>
    %95 = tpu.matmul %90, %92, %cst_29 {dimension_numbers = #tpu.dot_dimension_numbers<[2], [2], [1], [1], [0, 0, 0, 1, 1, 1], [0], [0]>} : vector<4x64x8xbf16>, vector<4x64x8xbf16>, vector<4x64x64xf32> -> vector<4x64x64xf32>
    "tpu.trace_stop"() : () -> ()
    %c3 = arith.constant 3 : index
    %c0_30 = arith.constant 0 : index
    %c0_31 = arith.constant 0 : index
    %96 = vector.load %arg4[%c3, %c0_30, %c0_31] : memref<4x64x64xf32, #tpu.memory_space<vmem>>, vector<1x64x64xf32>
    %97 = vector.shape_cast %96 : vector<1x64x64xf32> to vector<64x64xf32>
    %98 = vector.shape_cast %97 : vector<64x64xf32> to vector<1x64x64xf32>
    %99 = vector.broadcast %98 : vector<1x64x64xf32> to vector<4x64x64xf32>
    %100 = arith.addf %95, %99 : vector<4x64x64xf32>
    %cst_32 = arith.constant dense<0xFF800000> : vector<4x64xf32>
    %101 = vector.multi_reduction <maximumf>, %100, %cst_32 [2] : vector<4x64x64xf32> to vector<4x64xf32>
    %102 = vector.shape_cast %101 : vector<4x64xf32> to vector<4x64x1xf32>
    %103 = vector.broadcast %102 : vector<4x64x1xf32> to vector<4x64x64xf32>
    %104 = arith.subf %100, %103 : vector<4x64x64xf32>
    %105 = math.exp %104 : vector<4x64x64xf32>
    %cst_33 = arith.constant dense<0.000000e+00> : vector<4x64xf32>
    %106 = vector.multi_reduction <add>, %105, %cst_33 [2] : vector<4x64x64xf32> to vector<4x64xf32>
    %107 = vector.shape_cast %106 : vector<4x64xf32> to vector<4x64x1xf32>
    %108 = tpu.reciprocal %107 {approx = true} : vector<4x64x1xf32> -> vector<4x64x1xf32>
    %109 = vector.broadcast %108 : vector<4x64x1xf32> to vector<4x64x64xf32>
    %110 = arith.mulf %105, %109 : vector<4x64x64xf32>
    %111 = arith.truncf %110 : vector<4x64x64xf32> to vector<4x64x64xbf16>
    "tpu.trace_start"() <{level = 10 : i32, message = "bnm,bmd->bnd"}> : () -> ()
    %cst_34 = arith.constant dense<0.000000e+00> : vector<4x64x8xf32>
    %112 = tpu.matmul %111, %94, %cst_34 {dimension_numbers = #tpu.dot_dimension_numbers<[2], [1], [1], [2], [0, 0, 0, 1, 1, 2], [0], [0]>} : vector<4x64x64xbf16>, vector<4x64x8xbf16>, vector<4x64x8xf32> -> vector<4x64x8xf32>
    "tpu.trace_stop"() : () -> ()
    %113 = vector.shape_cast %112 : vector<4x64x8xf32> to vector<256x8xf32>
    %114 = arith.truncf %113 : vector<256x8xf32> to vector<256x8xbf16>
    %c0_35 = arith.constant 0 : index
    %c24 = arith.constant 24 : index
    %115 = vector.load %arg8[%c0_35, %c24] : memref<256x32xbf16, #tpu.memory_space<vmem>>, vector<256x8xbf16>
    tpu.vector_store %arg8[%c0_35, %c24], %114 {strides = array<i32>} : memref<256x32xbf16, #tpu.memory_space<vmem>>, vector<256x8xbf16>,
    %c0_36 = arith.constant 0 : index
    %c0_37 = arith.constant 0 : index
    %116 = vector.load %arg8[%c0_36, %c0_37] : memref<256x32xbf16, #tpu.memory_space<vmem>>, vector<256x32xbf16>
    %c0_38 = arith.constant 0 : index
    %c0_39 = arith.constant 0 : index
    %117 = vector.load %arg5[%c0_38, %c0_39] : memref<32x32xbf16, #tpu.memory_space<vmem>>, vector<32x32xbf16>
    %cst_40 = arith.constant dense<0.000000e+00> : vector<256x32xf32>
    %118 = tpu.matmul %116, %117, %cst_40 {dimension_numbers = #tpu.dot_dimension_numbers<[1], [0], [0], [1], [0, 0, 1, 1], [], []>} : vector<256x32xbf16>, vector<32x32xbf16>, vector<256x32xf32> -> vector<256x32xf32>
    %c0_41 = arith.constant 0 : index
    %c0_42 = arith.constant 0 : index
    %119 = vector.load %arg6[%c0_41, %c0_42] : memref<1x32xf32, #tpu.memory_space<vmem>>, vector<1x32xf32>
    %120 = vector.broadcast %119 : vector<1x32xf32> to vector<256x32xf32>
    %121 = arith.addf %118, %120 : vector<256x32xf32>
    %122 = vector.shape_cast %121 : vector<256x32xf32> to vector<4x64x32xf32>
    %c0_43 = arith.constant 0 : index
    %c0_44 = arith.constant 0 : index
    %c0_45 = arith.constant 0 : index
    %123 = vector.load %arg7[%c0_43, %c0_44, %c0_45] : memref<4x64x32xf32, #tpu.memory_space<vmem>>, vector<4x64x32xf32>
    tpu.vector_store %arg7[%c0_43, %c0_44, %c0_45], %122 {strides = array<i32>} : memref<4x64x32xf32, #tpu.memory_space<vmem>>, vector<4x64x32xf32>,
    return
  }
  func.func @transform_0(%arg0: i32) -> (i32, i32, i32) {
    %c0_i32 = arith.constant 0 : i32
    %c0_i32_0 = arith.constant 0 : i32
    %c0_i32_1 = arith.constant 0 : i32
    return %arg0, %c0_i32, %c0_i32_0 : i32, i32, i32
  }
  func.func @transform_1(%arg0: i32) -> (i32, i32) {
    %c0_i32 = arith.constant 0 : i32
    %c0_i32_0 = arith.constant 0 : i32
    %c0_i32_1 = arith.constant 0 : i32
    return %c0_i32, %c0_i32_0 : i32, i32
  }
  func.func @transform_2(%arg0: i32) -> (i32, i32) {
    %c0_i32 = arith.constant 0 : i32
    %c0_i32_0 = arith.constant 0 : i32
    %c0_i32_1 = arith.constant 0 : i32
    return %c0_i32, %c0_i32_0 : i32, i32
  }
  func.func @transform_3(%arg0: i32) -> (i32, i32, i32) {
    %c0_i32 = arith.constant 0 : i32
    %c0_i32_0 = arith.constant 0 : i32
    %c0_i32_1 = arith.constant 0 : i32
    %c0_i32_2 = arith.constant 0 : i32
    return %c0_i32, %c0_i32_0, %c0_i32_1 : i32, i32, i32
  }
  func.func @transform_4(%arg0: i32) -> (i32, i32) {
    %c0_i32 = arith.constant 0 : i32
    %c0_i32_0 = arith.constant 0 : i32
    %c0_i32_1 = arith.constant 0 : i32
    return %c0_i32, %c0_i32_0 : i32, i32
  }
  func.func @transform_5(%arg0: i32) -> (i32, i32) {
    %c0_i32 = arith.constant 0 : i32
    %c0_i32_0 = arith.constant 0 : i32
    %c0_i32_1 = arith.constant 0 : i32
    return %c0_i32, %c0_i32_0 : i32, i32
  }
  func.func @transform_6(%arg0: i32) -> (i32, i32, i32) {
    %c0_i32 = arith.constant 0 : i32
    %c0_i32_0 = arith.constant 0 : i32
    %c0_i32_1 = arith.constant 0 : i32
    return %arg0, %c0_i32, %c0_i32_0 : i32, i32, i32
  }
}

</mosaic_0001>

<llo_original>
// kernel: tpu_custom_call.1
$region0: #{tpu_custom_call.1}
  #allocation0 [shape = 'u32[]', space=smem, size = 0x4, offset = 0x4, fixed_abs, tag = 'smem constant byte address 0x4 - core index']
  #allocation1 [shape = 'u32[72,128]{1,0:T(1,128)}', space=vmem, size = 0x9000, scoped, tag = 'internal scratch']
  #allocation2 [shape = 'bf16[256,32]{1,0:T(8,128)(2,1)}', space=vmem, size = 0x10000, scoped, tag = 'scratch operand']
  %s0 = inlined_call_operand.vmem [shape: bf16[8,64,32], index: 0, kind: input, shape index: {}]
  %s1 = inlined_call_operand.vmem [shape: bf16[32,96], index: 1, kind: input, shape index: {}]
  %s2 = inlined_call_operand.vmem [shape: f32[1,96], index: 2, kind: input, shape index: {}]
  %s3 = inlined_call_operand.vmem [shape: f32[4,64,64], index: 3, kind: input, shape index: {}]
  %s4 = inlined_call_operand.vmem [shape: bf16[32,32], index: 4, kind: input, shape index: {}]
  %s5 = inlined_call_operand.vmem [shape: f32[1,32], index: 5, kind: input, shape index: {}]
  %s6 = inlined_call_operand.vmem [shape: f32[8,64,32], index: 6, kind: output, shape index: {}]
  %s7 = sld [smem:[#allocation0]]
  $region57: #{tpu_custom_call.1} parent=0
    _
  %s9 = ssub.s32 1, %s7
  %s10 = scalar_select 0, %s9, %s7
  loop: start=0, step=1, limit=4
  $region2: #{tpu_custom_call.1} parent=0 // loop_pre_header
    _
  $region3: #{tpu_custom_call.1} parent=0 // loop_header
    %s12 = sphi 0, %s16
    %p13 = scmp.ge.s32.totalorder %s12, 4
    %s22 = sphi 0, %s24
    %s25 = sphi 0, %s22
    %s26 = sphi 0, %s25
    %s42 = sphi 0, %s26
    %s46 = sphi 0, %s46
    %s48 = sphi 0, %s46
    %s49 = sphi 0, %s48
    %s63 = sphi 0, %s49
    %s67 = sphi 0, %s67
    %s69 = sphi 0, %s67
    %s70 = sphi 0, %s69
    %s84 = sphi 0, %s70
    %s88 = sphi 0, %s88
    %s90 = sphi 0, %s88
    %s91 = sphi 0, %s90
    %s105 = sphi 0, %s91
    %s109 = sphi 0, %s109
    %s111 = sphi 0, %s109
    %s112 = sphi 0, %s111
    %s126 = sphi 0, %s112
    %s130 = sphi 0, %s130
    %s132 = sphi 0, %s130
    %s133 = sphi 0, %s132
    %s147 = sphi 0, %s133
    %s153 = sphi 0, %s155
    %s156 = sphi 0, %s153
    %s157 = sphi 0, %s156
    %s173 = sphi 0, %s157
  $region4: #{tpu_custom_call.1} parent=0 // loop_header_branch
    %15 = sbr.rel (%p13) target = $region8
  $region5: #{tpu_custom_call.1} parent=0 // loop_body
    %s17 = ssub.s32 %s12, 1
    %s18 = ssub.s32 %s12, 2
    %s19 = sadd.s32 %s12, 1
    %s20 = ssub.s32 %s12, %s19
    %p21 = scmp.eq.s32.totalorder %s20, 0
    %s23 = sadd.s32 %s22, 1
    %s24 = scalar_select %p21, %s22, %s23
    %p27 = pneg %p21
    %p28 = scmp.eq.s32.totalorder %s12, 1
    %p29 = por %p27, %p28
    %p30 = scmp.ne.s32.totalorder %s22, %s25
    %p31 = scmp.eq.s32.totalorder %s12, 0
    %p32 = por %p30, %p31
    %p33 = scmp.ne.s32.totalorder %s22, %s25
    %p34 = scmp.eq.s32.totalorder %s17, 1
    %p35 = por %p33, %p34
    %p36 = scmp.ne.s32.totalorder %s25, %s26
    %p37 = scmp.eq.s32.totalorder %s17, 0
    %p38 = por %p36, %p37
    %p39 = scmp.ne.s32.totalorder %s25, %s26
    %p40 = scmp.eq.s32.totalorder %s18, 1
    %p41 = por %p39, %p40
    %p43 = scmp.ne.s32.totalorder %s26, %s42
    %p44 = scmp.eq.s32.totalorder %s18, 0
    %p45 = por %p43, %p44
    %s47 = sadd.s32 %s46, 1
    %p50 = scmp.eq.s32.totalorder %s12, 1
    %p51 = scmp.ne.s32.totalorder %s46, %s48
    %p52 = scmp.eq.s32.totalorder %s12, 0
    %p53 = por %p51, %p52
    %p54 = scmp.ne.s32.totalorder %s46, %s48
    %p55 = scmp.eq.s32.totalorder %s17, 1
    %p56 = por %p54, %p55
    %p57 = scmp.ne.s32.totalorder %s48, %s49
    %p58 = scmp.eq.s32.totalorder %s17, 0
    %p59 = por %p57, %p58
    %p60 = scmp.ne.s32.totalorder %s48, %s49
    %p61 = scmp.eq.s32.totalorder %s18, 1
    %p62 = por %p60, %p61
    %p64 = scmp.ne.s32.totalorder %s49, %s63
    %p65 = scmp.eq.s32.totalorder %s18, 0
    %p66 = por %p64, %p65
    %s68 = sadd.s32 %s67, 1
    %p71 = scmp.eq.s32.totalorder %s12, 1
    %p72 = scmp.ne.s32.totalorder %s67, %s69
    %p73 = scmp.eq.s32.totalorder %s12, 0
    %p74 = por %p72, %p73
    %p75 = scmp.ne.s32.totalorder %s67, %s69
    %p76 = scmp.eq.s32.totalorder %s17, 1
    %p77 = por %p75, %p76
    %p78 = scmp.ne.s32.totalorder %s69, %s70
    %p79 = scmp.eq.s32.totalorder %s17, 0
    %p80 = por %p78, %p79
    %p81 = scmp.ne.s32.totalorder %s69, %s70
    %p82 = scmp.eq.s32.totalorder %s18, 1
    %p83 = por %p81, %p82
    %p85 = scmp.ne.s32.totalorder %s70, %s84
    %p86 = scmp.eq.s32.totalorder %s18, 0
    %p87 = por %p85, %p86
    %s89 = sadd.s32 %s88, 1
    %p92 = scmp.eq.s32.totalorder %s12, 1
    %p93 = scmp.ne.s32.totalorder %s88, %s90
    %p94 = scmp.eq.s32.totalorder %s12, 0
    %p95 = por %p93, %p94
    %p96 = scmp.ne.s32.totalorder %s88, %s90
    %p97 = scmp.eq.s32.totalorder %s17, 1
    %p98 = por %p96, %p97
    %p99 = scmp.ne.s32.totalorder %s90, %s91
    %p100 = scmp.eq.s32.totalorder %s17, 0
    %p101 = por %p99, %p100
    %p102 = scmp.ne.s32.totalorder %s90, %s91
    %p103 = scmp.eq.s32.totalorder %s18, 1
    %p104 = por %p102, %p103
    %p106 = scmp.ne.s32.totalorder %s91, %s105
    %p107 = scmp.eq.s32.totalorder %s18, 0
    %p108 = por %p106, %p107
    %s110 = sadd.s32 %s109, 1
    %p113 = scmp.eq.s32.totalorder %s12, 1
    %p114 = scmp.ne.s32.totalorder %s109, %s111
    %p115 = scmp.eq.s32.totalorder %s12, 0
    %p116 = por %p114, %p115
    %p117 = scmp.ne.s32.totalorder %s109, %s111
    %p118 = scmp.eq.s32.totalorder %s17, 1
    %p119 = por %p117, %p118
    %p120 = scmp.ne.s32.totalorder %s111, %s112
    %p121 = scmp.eq.s32.totalorder %s17, 0
    %p122 = por %p120, %p121
    %p123 = scmp.ne.s32.totalorder %s111, %s112
    %p124 = scmp.eq.s32.totalorder %s18, 1
    %p125 = por %p123, %p124
    %p127 = scmp.ne.s32.totalorder %s112, %s126
    %p128 = scmp.eq.s32.totalorder %s18, 0
    %p129 = por %p127, %p128
    %s131 = sadd.s32 %s130, 1
    %p134 = scmp.eq.s32.totalorder %s12, 1
    %p135 = scmp.ne.s32.totalorder %s130, %s132
    %p136 = scmp.eq.s32.totalorder %s12, 0
    %p137 = por %p135, %p136
    %p138 = scmp.ne.s32.totalorder %s130, %s132
    %p139 = scmp.eq.s32.totalorder %s17, 1
    %p140 = por %p138, %p139
    %p141 = scmp.ne.s32.totalorder %s132, %s133
    %p142 = scmp.eq.s32.totalorder %s17, 0
    %p143 = por %p141, %p142
    %p144 = scmp.ne.s32.totalorder %s132, %s133
    %p145 = scmp.eq.s32.totalorder %s18, 1
    %p146 = por %p144, %p145
    %p148 = scmp.ne.s32.totalorder %s133, %s147
    %p149 = scmp.eq.s32.totalorder %s18, 0
    %p150 = por %p148, %p149
    %s151 = ssub.s32 %s12, %s19
    %p152 = scmp.eq.s32.totalorder %s151, 0
    %s154 = sadd.s32 %s153, 1
    %s155 = scalar_select %p152, %s153, %s154
    %p158 = pneg %p152
    %p159 = scmp.eq.s32.totalorder %s12, 1
    %p160 = por %p158, %p159
    %p161 = scmp.ne.s32.totalorder %s153, %s156
    %p162 = scmp.eq.s32.totalorder %s12, 0
    %p163 = por %p161, %p162
    %p164 = scmp.ne.s32.totalorder %s153, %s156
    %p165 = scmp.eq.s32.totalorder %s17, 1
    %p166 = por %p164, %p165
    %p167 = scmp.ne.s32.totalorder %s156, %s157
    %p168 = scmp.eq.s32.totalorder %s17, 0
    %p169 = por %p167, %p168
    %p170 = scmp.ne.s32.totalorder %s156, %s157
    %p171 = scmp.eq.s32.totalorder %s18, 1
    %p172 = por %p170, %p171
    %p174 = scmp.ne.s32.totalorder %s157, %s173
    %p175 = scmp.eq.s32.totalorder %s18, 0
    %p176 = por %p174, %p175
    %p177 = scmp.le.s32.totalorder 1, %s12
    %p178 = scmp.lt.s32.totalorder %s12, 3
    %p179 = pnand %p177, %p178
    %p180 = pneg %p179
    // Predicated region
    $region9: #{tpu_custom_call.1} parent=5 // pred_check
      _
    $region10: #{tpu_custom_call.1} parent=5 // pred_check_branch
      %182 = sbr.rel (%p179) target = $region12
    $region11: #{tpu_custom_call.1} parent=5 // pred_region
      %s183 = ssub.s32 %s12, 1
      // Predicated region
      $region13: #{tpu_custom_call.1} parent=11 // pred_check
        %p184 = pneg %p59
      $region14: #{tpu_custom_call.1} parent=11 // pred_check_branch
        %186 = sbr.rel (%p184) target = $region16
      $region15: #{tpu_custom_call.1} parent=11 // pred_region
        _
      $region16: #{tpu_custom_call.1} parent=11 // pred_fallthru
        _
      // Predicated region
      $region17: #{tpu_custom_call.1} parent=11 // pred_check
        %p187 = pneg %p80
      $region18: #{tpu_custom_call.1} parent=11 // pred_check_branch
        %189 = sbr.rel (%p187) target = $region20
      $region19: #{tpu_custom_call.1} parent=11 // pred_region
        _
      $region20: #{tpu_custom_call.1} parent=11 // pred_fallthru
        _
      // Predicated region
      $region21: #{tpu_custom_call.1} parent=11 // pred_check
        %p190 = pneg %p101
      $region22: #{tpu_custom_call.1} parent=11 // pred_check_branch
        %192 = sbr.rel (%p190) target = $region24
      $region23: #{tpu_custom_call.1} parent=11 // pred_region
        _
      $region24: #{tpu_custom_call.1} parent=11 // pred_fallthru
        _
      // Predicated region
      $region25: #{tpu_custom_call.1} parent=11 // pred_check
        %p193 = pneg %p122
      $region26: #{tpu_custom_call.1} parent=11 // pred_check_branch
        %195 = sbr.rel (%p193) target = $region28
      $region27: #{tpu_custom_call.1} parent=11 // pred_region
        _
      $region28: #{tpu_custom_call.1} parent=11 // pred_fallthru
        _
      // Predicated region
      $region29: #{tpu_custom_call.1} parent=11 // pred_check
        %p196 = pneg %p143
      $region30: #{tpu_custom_call.1} parent=11 // pred_check_branch
        %198 = sbr.rel (%p196) target = $region32
      $region31: #{tpu_custom_call.1} parent=11 // pred_region
        _
      $region32: #{tpu_custom_call.1} parent=11 // pred_fallthru
        _
    $region12: #{tpu_custom_call.1} parent=5 // pred_fallthru
      _
    %p199 = scmp.lt.s32.totalorder %s12, 2
    // Predicated region
    $region33: #{tpu_custom_call.1} parent=5 // pred_check
      %p200 = pneg %p199
    $region34: #{tpu_custom_call.1} parent=5 // pred_check_branch
      %202 = sbr.rel (%p200) target = $region36
    $region35: #{tpu_custom_call.1} parent=5 // pred_region
      // Predicated region
      $region37: #{tpu_custom_call.1} parent=35 // pred_check
        %p203 = pneg %p32
      $region38: #{tpu_custom_call.1} parent=35 // pred_check_branch
        %205 = sbr.rel (%p203) target = $region40
      $region39: #{tpu_custom_call.1} parent=35 // pred_region
        %s206 = smul.u32 4, %s12
        %p207 = scmp.lt.s32.totalorder %s206, 7
        %s208 = scalar_select %p207, %s206, 7
        %s209 = smul.addr %s208, 8
        %s210 = smul.addr %s209, 4
        %s211 = scalar_lea.vmem %s0, %s210
        %s212 = smul.u32 4, %s12
      $region40: #{tpu_custom_call.1} parent=35 // pred_fallthru
        _
    $region36: #{tpu_custom_call.1} parent=5 // pred_fallthru
      _
    %p213 = scmp.le.s32.totalorder 1, %s12
    %p214 = scmp.lt.s32.totalorder %s12, 3
    %p215 = pnand %p213, %p214
    %p216 = pneg %p215
    // Predicated region
    $region41: #{tpu_custom_call.1} parent=5 // pred_check
      _
    $region42: #{tpu_custom_call.1} parent=5 // pred_check_branch
      %218 = sbr.rel (%p215) target = $region44
    $region43: #{tpu_custom_call.1} parent=5 // pred_region
      %s219 = ssub.s32 %s12, 1
      %s220 = smul.u32 4, %s17
      %p221 = scmp.lt.s32.totalorder %s220, 7
      %s222 = scalar_select %p221, %s220, 7
      %s223 = smul.addr %s222, 8
      %s224 = smul.addr %s223, 4
      %s225 = scalar_lea.vmem %s0, %s224
      %p226 = pneg %p38
      %p227 = pneg %p35
      %p228 = pneg %p59
      %p229 = pneg %p56
      %p230 = pneg %p80
      %p231 = pneg %p77
      %p232 = pneg %p101
      %p233 = pneg %p98
      %p234 = pneg %p122
      %p235 = pneg %p119
      %p236 = pneg %p143
      %p237 = pneg %p140
      %p238 = pneg %p169
      %p239 = pneg %p166
      %s240 = smul.u32 4, %s17
      %p241 = scmp.lt.s32.totalorder %s240, 7
      %s242 = scalar_select %p241, %s240, 7
      %s243 = smul.addr %s242, 8
      %s244 = smul.addr %s243, 8
      %s245 = scalar_lea.vmem %s6, %s244
      %s246 = smul.u32 4, %s17
      %p247 = scmp.lt.s32.totalorder %s246, 7
      %s248 = scalar_select %p247, %s246, 7
      %s249 = smul.addr %s248, 8
      %s250 = smul.addr %s249, 4
      %s251 = scalar_lea.vmem %s0, %s250
      %s252 = smul.u32 4, %s17
      %s253 = smul.u32 4, %s17
      %p254 = scmp.lt.s32.totalorder %s253, 7
      %s255 = scalar_select %p254, %s253, 7
      %s256 = smul.addr %s255, 8
      %s257 = smul.addr %s256, 8
      %s258 = scalar_lea.vmem %s6, %s257
      %s259 = smul.u32 4, %s17
      %v261 = vld [vmem:[%s251] sm:$0xf]
      %v262 = vld [vmem:[%s251 + $0x4] sm:$0xf]
      %v263 = vld [vmem:[%s251 + $0x8] sm:$0xf]
      %v264 = vld [vmem:[%s251 + $0xc] sm:$0xf]
      %v265 = vld [vmem:[%s251 + $0x10] sm:$0xf]
      %v266 = vld [vmem:[%s251 + $0x14] sm:$0xf]
      %v267 = vld [vmem:[%s251 + $0x18] sm:$0xf]
      %v268 = vld [vmem:[%s251 + $0x1c] sm:$0xf]
      %v269 = vld [vmem:[%s251 + $0x20] sm:$0xf]
      %v270 = vld [vmem:[%s251 + $0x24] sm:$0xf]
      %v271 = vld [vmem:[%s251 + $0x28] sm:$0xf]
      %v272 = vld [vmem:[%s251 + $0x2c] sm:$0xf]
      %v273 = vld [vmem:[%s251 + $0x30] sm:$0xf]
      %v274 = vld [vmem:[%s251 + $0x34] sm:$0xf]
      %v275 = vld [vmem:[%s251 + $0x38] sm:$0xf]
      %v276 = vld [vmem:[%s251 + $0x3c] sm:$0xf]
      %v277 = vld [vmem:[%s251 + $0x40] sm:$0xf]
      %v278 = vld [vmem:[%s251 + $0x44] sm:$0xf]
      %v279 = vld [vmem:[%s251 + $0x48] sm:$0xf]
      %v280 = vld [vmem:[%s251 + $0x4c] sm:$0xf]
      %v281 = vld [vmem:[%s251 + $0x50] sm:$0xf]
      %v282 = vld [vmem:[%s251 + $0x54] sm:$0xf]
      %v283 = vld [vmem:[%s251 + $0x58] sm:$0xf]
      %v284 = vld [vmem:[%s251 + $0x5c] sm:$0xf]
      %v285 = vld [vmem:[%s251 + $0x60] sm:$0xf]
      %v286 = vld [vmem:[%s251 + $0x64] sm:$0xf]
      %v287 = vld [vmem:[%s251 + $0x68] sm:$0xf]
      %v288 = vld [vmem:[%s251 + $0x6c] sm:$0xf]
      %v289 = vld [vmem:[%s251 + $0x70] sm:$0xf]
      %v290 = vld [vmem:[%s251 + $0x74] sm:$0xf]
      %v291 = vld [vmem:[%s251 + $0x78] sm:$0xf]
      %v292 = vld [vmem:[%s251 + $0x7c] sm:$0xf]
      %v293 = vld [vmem:[%s1] sm:$0xf]
      %v294 = vld [vmem:[%s1 + $0x4] sm:$0xf]
      %v295 = vld [vmem:[%s1 + $0x8] sm:$0xf]
      %v296 = vld [vmem:[%s1 + $0xc] sm:$0xf]
      %v297 = vld [vmem:[%s2] sm:$0x1]
      %v299 = vperm.slane %v297, 0
      %v333 = vunpack.c.l.b16 %v261
      %v334 = vunpack.c.l.b16 %v262
      %v335 = vunpack.c.l.b16 %v263
      %v336 = vunpack.c.l.b16 %v264
      %v337 = vunpack.c.l.b16 %v265
      %v338 = vunpack.c.l.b16 %v266
      %v339 = vunpack.c.l.b16 %v267
      %v340 = vunpack.c.l.b16 %v268
      %v341 = vunpack.c.l.b16 %v269
      %v342 = vunpack.c.l.b16 %v270
      %v343 = vunpack.c.l.b16 %v271
      %v344 = vunpack.c.l.b16 %v272
      %v345 = vunpack.c.l.b16 %v273
      %v346 = vunpack.c.l.b16 %v274
      %v347 = vunpack.c.l.b16 %v275
      %v348 = vunpack.c.l.b16 %v276
      %v349 = vunpack.c.l.b16 %v277
      %v350 = vunpack.c.l.b16 %v278
      %v351 = vunpack.c.l.b16 %v279
      %v352 = vunpack.c.l.b16 %v280
      %v353 = vunpack.c.l.b16 %v281
      %v354 = vunpack.c.l.b16 %v282
      %v355 = vunpack.c.l.b16 %v283
      %v356 = vunpack.c.l.b16 %v284
      %v357 = vunpack.c.l.b16 %v285
      %v358 = vunpack.c.l.b16 %v286
      %v359 = vunpack.c.l.b16 %v287
      %v360 = vunpack.c.l.b16 %v288
      %v361 = vunpack.c.l.b16 %v289
      %v362 = vunpack.c.l.b16 %v290
      %v363 = vunpack.c.l.b16 %v291
      %v364 = vunpack.c.l.b16 %v292
      %v365 = vpack.c.b16 %v334, %v333
      %v366 = vpack.c.b16 %v336, %v335
      %v367 = vpack.c.b16 %v338, %v337
      %v368 = vpack.c.b16 %v340, %v339
      %v369 = vpack.c.b16 %v342, %v341
      %v370 = vpack.c.b16 %v344, %v343
      %v371 = vpack.c.b16 %v346, %v345
      %v372 = vpack.c.b16 %v348, %v347
      %v373 = vpack.c.b16 %v350, %v349
      %v374 = vpack.c.b16 %v352, %v351
      %v375 = vpack.c.b16 %v354, %v353
      %v376 = vpack.c.b16 %v356, %v355
      %v377 = vpack.c.b16 %v358, %v357
      %v378 = vpack.c.b16 %v360, %v359
      %v379 = vpack.c.b16 %v362, %v361
      %v380 = vpack.c.b16 %v364, %v363
      %v385 = vunpack.c.l.b16 %v293
      %v386 = vunpack.c.l.b16 %v294
      %v387 = vunpack.c.l.b16 %v295
      %v388 = vunpack.c.l.b16 %v296
      %v389 = vpack.c.b16 %v386, %v385
      %v390 = vpack.c.b16 %v388, %v387
      %vm393 = vcmask 261120
      %v395 = vsel %vm393, %v365, 0
      %v398 = vsel %vm393, %v366, 0
      %v401 = vsel %vm393, %v367, 0
      %v404 = vsel %vm393, %v368, 0
      %v407 = vsel %vm393, %v369, 0
      %v410 = vsel %vm393, %v370, 0
      %v413 = vsel %vm393, %v371, 0
      %v416 = vsel %vm393, %v372, 0
      %v419 = vsel %vm393, %v373, 0
      %v422 = vsel %vm393, %v374, 0
      %v425 = vsel %vm393, %v375, 0
      %v428 = vsel %vm393, %v376, 0
      %v431 = vsel %vm393, %v377, 0
      %v434 = vsel %vm393, %v378, 0
      %v437 = vsel %vm393, %v379, 0
      %v440 = vsel %vm393, %v380, 0
      %442 = vmatpush.bf16.msra.mxu0 0
      %443 = vmatpush.bf16.msra.mxu0 0
      %444 = vmatpush.bf16.msra.mxu0 0
      %445 = vmatpush.bf16.msra.mxu0 0
      %446 = vmatpush.bf16.msra.mxu0 0
      %447 = vmatpush.bf16.msra.mxu0 0
      %448 = vmatpush.bf16.msra.mxu0 %v390
      %449 = vmatpush.bf16.msra.mxu0 %v389
      %450 = vmatmul.bf16.gmra.mxu0 %v395
      %v451 = vpop.f32.mrf.mxu0
      %v452 = vadd.f32 %v299, %v451
      %v453 = vpop.f32.mrf.mxu0
      %v454 = vadd.f32 %v299, %v453
      %455 = vmatmul.bf16.gmra.mxu0 %v398
      %v456 = vpop.f32.mrf.mxu0
      %v457 = vadd.f32 %v299, %v456
      %v458 = vpop.f32.mrf.mxu0
      %v459 = vadd.f32 %v299, %v458
      %460 = vmatmul.bf16.gmra.mxu0 %v401
      %v461 = vpop.f32.mrf.mxu0
      %v462 = vadd.f32 %v299, %v461
      %v463 = vpop.f32.mrf.mxu0
      %v464 = vadd.f32 %v299, %v463
      %465 = vmatmul.bf16.gmra.mxu0 %v404
      %v466 = vpop.f32.mrf.mxu0
      %v467 = vadd.f32 %v299, %v466
      %v468 = vpop.f32.mrf.mxu0
      %v469 = vadd.f32 %v299, %v468
      %470 = vmatmul.bf16.gmra.mxu0 %v407
      %v471 = vpop.f32.mrf.mxu0
      %v472 = vadd.f32 %v299, %v471
      %v473 = vpop.f32.mrf.mxu0
      %v474 = vadd.f32 %v299, %v473
      %475 = vmatmul.bf16.gmra.mxu0 %v410
      %v476 = vpop.f32.mrf.mxu0
      %v477 = vadd.f32 %v299, %v476
      %v478 = vpop.f32.mrf.mxu0
      %v479 = vadd.f32 %v299, %v478
      %480 = vmatmul.bf16.gmra.mxu0 %v413
      %v481 = vpop.f32.mrf.mxu0
      %v482 = vadd.f32 %v299, %v481
      %v483 = vpop.f32.mrf.mxu0
      %v484 = vadd.f32 %v299, %v483
      %485 = vmatmul.bf16.gmra.mxu0 %v416
      %v486 = vpop.f32.mrf.mxu0
      %v487 = vadd.f32 %v299, %v486
      %v488 = vpop.f32.mrf.mxu0
      %v489 = vadd.f32 %v299, %v488
      %490 = vmatmul.bf16.gmra.mxu0 %v419
      %v491 = vpop.f32.mrf.mxu0
      %v492 = vadd.f32 %v299, %v491
      %v493 = vpop.f32.mrf.mxu0
      %v494 = vadd.f32 %v299, %v493
      %495 = vmatmul.bf16.gmra.mxu0 %v422
      %v496 = vpop.f32.mrf.mxu0
      %v497 = vadd.f32 %v299, %v496
      %v498 = vpop.f32.mrf.mxu0
      %v499 = vadd.f32 %v299, %v498
      %500 = vmatmul.bf16.gmra.mxu0 %v425
      %v501 = vpop.f32.mrf.mxu0
      %v502 = vadd.f32 %v299, %v501
      %v503 = vpop.f32.mrf.mxu0
      %v504 = vadd.f32 %v299, %v503
      %505 = vmatmul.bf16.gmra.mxu0 %v428
      %v506 = vpop.f32.mrf.mxu0
      %v507 = vadd.f32 %v299, %v506
      %v508 = vpop.f32.mrf.mxu0
      %v509 = vadd.f32 %v299, %v508
      %510 = vmatmul.bf16.gmra.mxu0 %v431
      %v511 = vpop.f32.mrf.mxu0
      %v512 = vadd.f32 %v299, %v511
      %v513 = vpop.f32.mrf.mxu0
      %v514 = vadd.f32 %v299, %v513
      %515 = vmatmul.bf16.gmra.mxu0 %v434
      %v516 = vpop.f32.mrf.mxu0
      %v517 = vadd.f32 %v299, %v516
      %v518 = vpop.f32.mrf.mxu0
      %v519 = vadd.f32 %v299, %v518
      %520 = vmatmul.bf16.gmra.mxu0 %v437
      %v521 = vpop.f32.mrf.mxu0
      %v522 = vadd.f32 %v299, %v521
      %v523 = vpop.f32.mrf.mxu0
      %v524 = vadd.f32 %v299, %v523
      %525 = vmatmul.bf16.gmra.mxu0 %v440
      %v526 = vpop.f32.mrf.mxu0
      %v527 = vadd.f32 %v299, %v526
      %v528 = vpop.f32.mrf.mxu0
      %v529 = vadd.f32 %v299, %v528
      %530 = vdwg.mxu0
      %v531 = vpack.c.bf16 %v452, %v452
      %v532 = vpack.c.bf16 %v454, %v454
      %v533 = vpack.c.bf16 %v457, %v457
      %v534 = vpack.c.bf16 %v459, %v459
      %v535 = vpack.c.bf16 %v462, %v462
      %v536 = vpack.c.bf16 %v464, %v464
      %v537 = vpack.c.bf16 %v467, %v467
      %v538 = vpack.c.bf16 %v469, %v469
      %v539 = vpack.c.bf16 %v472, %v472
      %v540 = vpack.c.bf16 %v474, %v474
      %v541 = vpack.c.bf16 %v477, %v477
      %v542 = vpack.c.bf16 %v479, %v479
      %v543 = vpack.c.bf16 %v482, %v482
      %v544 = vpack.c.bf16 %v484, %v484
      %v545 = vpack.c.bf16 %v487, %v487
      %v546 = vpack.c.bf16 %v489, %v489
      %v547 = vpack.c.bf16 %v492, %v492
      %v548 = vpack.c.bf16 %v494, %v494
      %v549 = vpack.c.bf16 %v497, %v497
      %v550 = vpack.c.bf16 %v499, %v499
      %v551 = vpack.c.bf16 %v502, %v502
      %v552 = vpack.c.bf16 %v504, %v504
      %v553 = vpack.c.bf16 %v507, %v507
      %v554 = vpack.c.bf16 %v509, %v509
      %v555 = vpack.c.bf16 %v512, %v512
      %v556 = vpack.c.bf16 %v514, %v514
      %v557 = vpack.c.bf16 %v517, %v517
      %v558 = vpack.c.bf16 %v519, %v519
      %v559 = vpack.c.bf16 %v522, %v522
      %v560 = vpack.c.bf16 %v524, %v524
      %v561 = vpack.c.bf16 %v527, %v527
      %v562 = vpack.c.bf16 %v529, %v529
      %v563 = vld [vmem:[%s3] sm:$0xff]
      %v564 = vld [vmem:[%s3 + $0x8] sm:$0xff]
      %v565 = vld [vmem:[%s3 + $0x10] sm:$0xff]
      %v566 = vld [vmem:[%s3 + $0x18] sm:$0xff]
      %v567 = vld [vmem:[%s3 + $0x20] sm:$0xff]
      %v568 = vld [vmem:[%s3 + $0x28] sm:$0xff]
      %v569 = vld [vmem:[%s3 + $0x30] sm:$0xff]
      %v570 = vld [vmem:[%s3 + $0x38] sm:$0xff]
      %v579 = vunpack.c.l.b16 %v531
      %v580 = vunpack.c.l.b16 %v532
      %v581 = vunpack.c.l.b16 %v533
      %v582 = vunpack.c.l.b16 %v534
      %v583 = vunpack.c.l.b16 %v535
      %v584 = vunpack.c.l.b16 %v536
      %v585 = vunpack.c.l.b16 %v537
      %v586 = vunpack.c.l.b16 %v538
      %v587 = vpack.c.b16 %v580, %v579
      %v588 = vpack.c.b16 %v582, %v581
      %v589 = vpack.c.b16 %v584, %v583
      %v590 = vpack.c.b16 %v586, %v585
      %591 = vrot.lane.b32.xlu0 %v587, 96
      %v592 = vpop.permute.xlu0 %591
      %593 = vrot.lane.b32.xlu0 %v588, 96
      %v594 = vpop.permute.xlu0 %593
      %595 = vrot.lane.b32.xlu0 %v589, 96
      %v596 = vpop.permute.xlu0 %595
      %597 = vrot.lane.b32.xlu0 %v590, 96
      %v598 = vpop.permute.xlu0 %597
      %vm599 = vcmask 64512
      %v601 = vsel %vm599, %v587, 0
      %v604 = vsel %vm599, %v588, 0
      %v607 = vsel %vm599, %v589, 0
      %v610 = vsel %vm599, %v590, 0
      %v613 = vsel %vm599, %v592, 0
      %v616 = vsel %vm599, %v594, 0
      %v619 = vsel %vm599, %v596, 0
      %v622 = vsel %vm599, %v598, 0
      %624 = vmatpush.bf16.xpose.msra.mxu0 0
      %625 = vmatpush.bf16.xpose.msra.mxu0 0
      %626 = vmatpush.bf16.xpose.msra.mxu0 0
      %627 = vmatpush.bf16.xpose.msra.mxu0 0
      %628 = vmatpush.bf16.xpose.msra.mxu0 %v622
      %629 = vmatpush.bf16.xpose.msra.mxu0 %v619
      %630 = vmatpush.bf16.xpose.msra.mxu0 %v616
      %631 = vmatpush.bf16.xpose.msra.mxu0 %v613
      %632 = vmatmul.bf16.gmra.mxu0 %v601
      %v633 = vpop.f32.mrf.mxu0
      %v634 = vadd.f32 %v563, %v633
      %v635 = vpop.f32.mrf.mxu0
      %v636 = vadd.f32 %v564, %v635
      %637 = vmatmul.bf16.gmra.mxu0 %v604
      %v638 = vpop.f32.mrf.mxu0
      %v639 = vadd.f32 %v565, %v638
      %v640 = vpop.f32.mrf.mxu0
      %v641 = vadd.f32 %v566, %v640
      %642 = vmatmul.bf16.gmra.mxu0 %v607
      %v643 = vpop.f32.mrf.mxu0
      %v644 = vadd.f32 %v567, %v643
      %v645 = vpop.f32.mrf.mxu0
      %v646 = vadd.f32 %v568, %v645
      %647 = vmatmul.bf16.gmra.mxu0 %v610
      %v648 = vpop.f32.mrf.mxu0
      %v649 = vadd.f32 %v569, %v648
      %v650 = vpop.f32.mrf.mxu0
      %v651 = vadd.f32 %v570, %v650
      %652 = vdwg.mxu0
      %v661 = vunpack.c.l.b16 %v539
      %v662 = vunpack.c.l.b16 %v540
      %v663 = vunpack.c.l.b16 %v541
      %v664 = vunpack.c.l.b16 %v542
      %v665 = vunpack.c.l.b16 %v543
      %v666 = vunpack.c.l.b16 %v544
      %v667 = vunpack.c.l.b16 %v545
      %v668 = vunpack.c.l.b16 %v546
      %v669 = vpack.c.b16 %v662, %v661
      %v670 = vpack.c.b16 %v664, %v663
      %v671 = vpack.c.b16 %v666, %v665
      %v672 = vpack.c.b16 %v668, %v667
      %673 = vrot.lane.b32.xlu0 %v669, 96
      %v674 = vpop.permute.xlu0 %673
      %675 = vrot.lane.b32.xlu0 %v670, 96
      %v676 = vpop.permute.xlu0 %675
      %677 = vrot.lane.b32.xlu0 %v671, 96
      %v678 = vpop.permute.xlu0 %677
      %679 = vrot.lane.b32.xlu0 %v672, 96
      %v680 = vpop.permute.xlu0 %679
      %v682 = vsel %vm599, %v669, 0
      %v685 = vsel %vm599, %v670, 0
      %v688 = vsel %vm599, %v671, 0
      %v691 = vsel %vm599, %v672, 0
      %v694 = vsel %vm599, %v674, 0
      %v697 = vsel %vm599, %v676, 0
      %v700 = vsel %vm599, %v678, 0
      %v703 = vsel %vm599, %v680, 0
      %705 = vmatpush.bf16.xpose.msra.mxu0 0
      %706 = vmatpush.bf16.xpose.msra.mxu0 0
      %707 = vmatpush.bf16.xpose.msra.mxu0 0
      %708 = vmatpush.bf16.xpose.msra.mxu0 0
      %709 = vmatpush.bf16.xpose.msra.mxu0 %v703
      %710 = vmatpush.bf16.xpose.msra.mxu0 %v700
      %711 = vmatpush.bf16.xpose.msra.mxu0 %v697
      %712 = vmatpush.bf16.xpose.msra.mxu0 %v694
      %713 = vmatmul.bf16.gmra.mxu0 %v682
      %v714 = vpop.f32.mrf.mxu0
      %v715 = vadd.f32 %v563, %v714
      %v716 = vpop.f32.mrf.mxu0
      %v717 = vadd.f32 %v564, %v716
      %718 = vmatmul.bf16.gmra.mxu0 %v685
      %v719 = vpop.f32.mrf.mxu0
      %v720 = vadd.f32 %v565, %v719
      %v721 = vpop.f32.mrf.mxu0
      %v722 = vadd.f32 %v566, %v721
      %723 = vmatmul.bf16.gmra.mxu0 %v688
      %v724 = vpop.f32.mrf.mxu0
      %v725 = vadd.f32 %v567, %v724
      %v726 = vpop.f32.mrf.mxu0
      %v727 = vadd.f32 %v568, %v726
      %728 = vmatmul.bf16.gmra.mxu0 %v691
      %v729 = vpop.f32.mrf.mxu0
      %v730 = vadd.f32 %v569, %v729
      %v731 = vpop.f32.mrf.mxu0
      %v732 = vadd.f32 %v570, %v731
      %733 = vdwg.mxu0
      %v742 = vunpack.c.l.b16 %v547
      %v743 = vunpack.c.l.b16 %v548
      %v744 = vunpack.c.l.b16 %v549
      %v745 = vunpack.c.l.b16 %v550
      %v746 = vunpack.c.l.b16 %v551
      %v747 = vunpack.c.l.b16 %v552
      %v748 = vunpack.c.l.b16 %v553
      %v749 = vunpack.c.l.b16 %v554
      %v750 = vpack.c.b16 %v743, %v742
      %v751 = vpack.c.b16 %v745, %v744
      %v752 = vpack.c.b16 %v747, %v746
      %v753 = vpack.c.b16 %v749, %v748
      %754 = vrot.lane.b32.xlu0 %v750, 96
      %v755 = vpop.permute.xlu0 %754
      %756 = vrot.lane.b32.xlu0 %v751, 96
      %v757 = vpop.permute.xlu0 %756
      %758 = vrot.lane.b32.xlu0 %v752, 96
      %v759 = vpop.permute.xlu0 %758
      %760 = vrot.lane.b32.xlu0 %v753, 96
      %v761 = vpop.permute.xlu0 %760
      %v763 = vsel %vm599, %v750, 0
      %v766 = vsel %vm599, %v751, 0
      %v769 = vsel %vm599, %v752, 0
      %v772 = vsel %vm599, %v753, 0
      %v775 = vsel %vm599, %v755, 0
      %v778 = vsel %vm599, %v757, 0
      %v781 = vsel %vm599, %v759, 0
      %v784 = vsel %vm599, %v761, 0
      %786 = vmatpush.bf16.xpose.msra.mxu0 0
      %787 = vmatpush.bf16.xpose.msra.mxu0 0
      %788 = vmatpush.bf16.xpose.msra.mxu0 0
      %789 = vmatpush.bf16.xpose.msra.mxu0 0
      %790 = vmatpush.bf16.xpose.msra.mxu0 %v784
      %791 = vmatpush.bf16.xpose.msra.mxu0 %v781
      %792 = vmatpush.bf16.xpose.msra.mxu0 %v778
      %793 = vmatpush.bf16.xpose.msra.mxu0 %v775
      %794 = vmatmul.bf16.gmra.mxu0 %v763
      %v795 = vpop.f32.mrf.mxu0
      %v796 = vadd.f32 %v563, %v795
      %v797 = vpop.f32.mrf.mxu0
      %v798 = vadd.f32 %v564, %v797
      %799 = vmatmul.bf16.gmra.mxu0 %v766
      %v800 = vpop.f32.mrf.mxu0
      %v801 = vadd.f32 %v565, %v800
      %v802 = vpop.f32.mrf.mxu0
      %v803 = vadd.f32 %v566, %v802
      %804 = vmatmul.bf16.gmra.mxu0 %v769
      %v805 = vpop.f32.mrf.mxu0
      %v806 = vadd.f32 %v567, %v805
      %v807 = vpop.f32.mrf.mxu0
      %v808 = vadd.f32 %v568, %v807
      %809 = vmatmul.bf16.gmra.mxu0 %v772
      %v810 = vpop.f32.mrf.mxu0
      %v811 = vadd.f32 %v569, %v810
      %v812 = vpop.f32.mrf.mxu0
      %v813 = vadd.f32 %v570, %v812
      %814 = vdwg.mxu0
      %v823 = vunpack.c.l.b16 %v555
      %v824 = vunpack.c.l.b16 %v556
      %v825 = vunpack.c.l.b16 %v557
      %v826 = vunpack.c.l.b16 %v558
      %v827 = vunpack.c.l.b16 %v559
      %v828 = vunpack.c.l.b16 %v560
      %v829 = vunpack.c.l.b16 %v561
      %v830 = vunpack.c.l.b16 %v562
      %v831 = vpack.c.b16 %v824, %v823
      %v832 = vpack.c.b16 %v826, %v825
      %v833 = vpack.c.b16 %v828, %v827
      %v834 = vpack.c.b16 %v830, %v829
      %835 = vrot.lane.b32.xlu0 %v831, 96
      %v836 = vpop.permute.xlu0 %835
      %837 = vrot.lane.b32.xlu0 %v832, 96
      %v838 = vpop.permute.xlu0 %837
      %839 = vrot.lane.b32.xlu0 %v833, 96
      %v840 = vpop.permute.xlu0 %839
      %841 = vrot.lane.b32.xlu0 %v834, 96
      %v842 = vpop.permute.xlu0 %841
      %v844 = vsel %vm599, %v831, 0
      %v847 = vsel %vm599, %v832, 0
      %v850 = vsel %vm599, %v833, 0
      %v853 = vsel %vm599, %v834, 0
      %v856 = vsel %vm599, %v836, 0
      %v859 = vsel %vm599, %v838, 0
      %v862 = vsel %vm599, %v840, 0
      %v865 = vsel %vm599, %v842, 0
      %867 = vmatpush.bf16.xpose.msra.mxu0 0
      %868 = vmatpush.bf16.xpose.msra.mxu0 0
      %869 = vmatpush.bf16.xpose.msra.mxu0 0
      %870 = vmatpush.bf16.xpose.msra.mxu0 0
      %871 = vmatpush.bf16.xpose.msra.mxu0 %v865
      %872 = vmatpush.bf16.xpose.msra.mxu0 %v862
      %873 = vmatpush.bf16.xpose.msra.mxu0 %v859
      %874 = vmatpush.bf16.xpose.msra.mxu0 %v856
      %875 = vmatmul.bf16.gmra.mxu0 %v844
      %v876 = vpop.f32.mrf.mxu0
      %v877 = vadd.f32 %v563, %v876
      %v878 = vpop.f32.mrf.mxu0
      %v879 = vadd.f32 %v564, %v878
      %880 = vmatmul.bf16.gmra.mxu0 %v847
      %v881 = vpop.f32.mrf.mxu0
      %v882 = vadd.f32 %v565, %v881
      %v883 = vpop.f32.mrf.mxu0
      %v884 = vadd.f32 %v566, %v883
      %885 = vmatmul.bf16.gmra.mxu0 %v850
      %v886 = vpop.f32.mrf.mxu0
      %v887 = vadd.f32 %v567, %v886
      %v888 = vpop.f32.mrf.mxu0
      %v889 = vadd.f32 %v568, %v888
      %890 = vmatmul.bf16.gmra.mxu0 %v853
      %v891 = vpop.f32.mrf.mxu0
      %v892 = vadd.f32 %v569, %v891
      %v893 = vpop.f32.mrf.mxu0
      %v894 = vadd.f32 %v570, %v893
      %895 = vdwg.mxu0
      %vm896 = vcmask 523264
      %v897 = vsel %vm896, %v634, -inf
      %898 = vmax.xlane.f32.xlu0 %v897
      %v899 = vpop.xlane.xlu0 %898
      %v900 = vsel %vm896, %v636, -inf
      %901 = vmax.xlane.f32.xlu0 %v900
      %v902 = vpop.xlane.xlu0 %901
      %v903 = vsel %vm896, %v639, -inf
      %904 = vmax.xlane.f32.xlu0 %v903
      %v905 = vpop.xlane.xlu0 %904
      %v906 = vsel %vm896, %v641, -inf
      %907 = vmax.xlane.f32.xlu0 %v906
      %v908 = vpop.xlane.xlu0 %907
      %v909 = vsel %vm896, %v644, -inf
      %910 = vmax.xlane.f32.xlu0 %v909
      %v911 = vpop.xlane.xlu0 %910
      %v912 = vsel %vm896, %v646, -inf
      %913 = vmax.xlane.f32.xlu0 %v912
      %v914 = vpop.xlane.xlu0 %913
      %v915 = vsel %vm896, %v649, -inf
      %916 = vmax.xlane.f32.xlu0 %v915
      %v917 = vpop.xlane.xlu0 %916
      %v918 = vsel %vm896, %v651, -inf
      %919 = vmax.xlane.f32.xlu0 %v918
      %v920 = vpop.xlane.xlu0 %919
      %v921 = vsel %vm896, %v715, -inf
      %922 = vmax.xlane.f32.xlu0 %v921
      %v923 = vpop.xlane.xlu0 %922
      %v924 = vsel %vm896, %v717, -inf
      %925 = vmax.xlane.f32.xlu0 %v924
      %v926 = vpop.xlane.xlu0 %925
      %v927 = vsel %vm896, %v720, -inf
      %928 = vmax.xlane.f32.xlu0 %v927
      %v929 = vpop.xlane.xlu0 %928
      %v930 = vsel %vm896, %v722, -inf
      %931 = vmax.xlane.f32.xlu0 %v930
      %v932 = vpop.xlane.xlu0 %931
      %v933 = vsel %vm896, %v725, -inf
      %934 = vmax.xlane.f32.xlu0 %v933
      %v935 = vpop.xlane.xlu0 %934
      %v936 = vsel %vm896, %v727, -inf
      %937 = vmax.xlane.f32.xlu0 %v936
      %v938 = vpop.xlane.xlu0 %937
      %v939 = vsel %vm896, %v730, -inf
      %940 = vmax.xlane.f32.xlu0 %v939
      %v941 = vpop.xlane.xlu0 %940
      %v942 = vsel %vm896, %v732, -inf
      %943 = vmax.xlane.f32.xlu0 %v942
      %v944 = vpop.xlane.xlu0 %943
      %v945 = vsel %vm896, %v796, -inf
      %946 = vmax.xlane.f32.xlu0 %v945
      %v947 = vpop.xlane.xlu0 %946
      %v948 = vsel %vm896, %v798, -inf
      %949 = vmax.xlane.f32.xlu0 %v948
      %v950 = vpop.xlane.xlu0 %949
      %v951 = vsel %vm896, %v801, -inf
      %952 = vmax.xlane.f32.xlu0 %v951
      %v953 = vpop.xlane.xlu0 %952
      %v954 = vsel %vm896, %v803, -inf
      %955 = vmax.xlane.f32.xlu0 %v954
      %v956 = vpop.xlane.xlu0 %955
      %v957 = vsel %vm896, %v806, -inf
      %958 = vmax.xlane.f32.xlu0 %v957
      %v959 = vpop.xlane.xlu0 %958
      %v960 = vsel %vm896, %v808, -inf
      %961 = vmax.xlane.f32.xlu0 %v960
      %v962 = vpop.xlane.xlu0 %961
      %v963 = vsel %vm896, %v811, -inf
      %964 = vmax.xlane.f32.xlu0 %v963
      %v965 = vpop.xlane.xlu0 %964
      %v966 = vsel %vm896, %v813, -inf
      %967 = vmax.xlane.f32.xlu0 %v966
      %v968 = vpop.xlane.xlu0 %967
      %v969 = vsel %vm896, %v877, -inf
      %970 = vmax.xlane.f32.xlu0 %v969
      %v971 = vpop.xlane.xlu0 %970
      %v972 = vsel %vm896, %v879, -inf
      %973 = vmax.xlane.f32.xlu0 %v972
      %v974 = vpop.xlane.xlu0 %973
      %v975 = vsel %vm896, %v882, -inf
      %976 = vmax.xlane.f32.xlu0 %v975
      %v977 = vpop.xlane.xlu0 %976
      %v978 = vsel %vm896, %v884, -inf
      %979 = vmax.xlane.f32.xlu0 %v978
      %v980 = vpop.xlane.xlu0 %979
      %v981 = vsel %vm896, %v887, -inf
      %982 = vmax.xlane.f32.xlu0 %v981
      %v983 = vpop.xlane.xlu0 %982
      %v984 = vsel %vm896, %v889, -inf
      %985 = vmax.xlane.f32.xlu0 %v984
      %v986 = vpop.xlane.xlu0 %985
      %v987 = vsel %vm896, %v892, -inf
      %988 = vmax.xlane.f32.xlu0 %v987
      %v989 = vpop.xlane.xlu0 %988
      %v990 = vsel %vm896, %v894, -inf
      %991 = vmax.xlane.f32.xlu0 %v990
      %v992 = vpop.xlane.xlu0 %991
      %v993 = vsub.f32 %v634, %v899
      %v994 = vsub.f32 %v636, %v902
      %v995 = vsub.f32 %v639, %v905
      %v996 = vsub.f32 %v641, %v908
      %v997 = vsub.f32 %v644, %v911
      %v998 = vsub.f32 %v646, %v914
      %v999 = vsub.f32 %v649, %v917
      %v1000 = vsub.f32 %v651, %v920
      %v1001 = vsub.f32 %v715, %v923
      %v1002 = vsub.f32 %v717, %v926
      %v1003 = vsub.f32 %v720, %v929
      %v1004 = vsub.f32 %v722, %v932
      %v1005 = vsub.f32 %v725, %v935
      %v1006 = vsub.f32 %v727, %v938
      %v1007 = vsub.f32 %v730, %v941
      %v1008 = vsub.f32 %v732, %v944
      %v1009 = vsub.f32 %v796, %v947
      %v1010 = vsub.f32 %v798, %v950
      %v1011 = vsub.f32 %v801, %v953
      %v1012 = vsub.f32 %v803, %v956
      %v1013 = vsub.f32 %v806, %v959
      %v1014 = vsub.f32 %v808, %v962
      %v1015 = vsub.f32 %v811, %v965
      %v1016 = vsub.f32 %v813, %v968
      %v1017 = vsub.f32 %v877, %v971
      %v1018 = vsub.f32 %v879, %v974
      %v1019 = vsub.f32 %v882, %v977
      %v1020 = vsub.f32 %v884, %v980
      %v1021 = vsub.f32 %v887, %v983
      %v1022 = vsub.f32 %v889, %v986
      %v1023 = vsub.f32 %v892, %v989
      %v1024 = vsub.f32 %v894, %v992
      %v1025 = vmul.f32 %v993, 1.442695
      %v1026 = vpow.pop %v1025
      %v1027 = vmul.f32 %v994, 1.442695
      %v1028 = vpow.pop %v1027
      %v1029 = vmul.f32 %v995, 1.442695
      %v1030 = vpow.pop %v1029
      %v1031 = vmul.f32 %v996, 1.442695
      %v1032 = vpow.pop %v1031
      %v1033 = vmul.f32 %v997, 1.442695
      %v1034 = vpow.pop %v1033
      %v1035 = vmul.f32 %v998, 1.442695
      %v1036 = vpow.pop %v1035
      %v1037 = vmul.f32 %v999, 1.442695
      %v1038 = vpow.pop %v1037
      %v1039 = vmul.f32 %v1000, 1.442695
      %v1040 = vpow.pop %v1039
      %v1041 = vmul.f32 %v1001, 1.442695
      %v1042 = vpow.pop %v1041
      %v1043 = vmul.f32 %v1002, 1.442695
      %v1044 = vpow.pop %v1043
      %v1045 = vmul.f32 %v1003, 1.442695
      %v1046 = vpow.pop %v1045
      %v1047 = vmul.f32 %v1004, 1.442695
      %v1048 = vpow.pop %v1047
      %v1049 = vmul.f32 %v1005, 1.442695
      %v1050 = vpow.pop %v1049
      %v1051 = vmul.f32 %v1006, 1.442695
      %v1052 = vpow.pop %v1051
      %v1053 = vmul.f32 %v1007, 1.442695
      %v1054 = vpow.pop %v1053
      %v1055 = vmul.f32 %v1008, 1.442695
      %v1056 = vpow.pop %v1055
      %v1057 = vmul.f32 %v1009, 1.442695
      %v1058 = vpow.pop %v1057
      %v1059 = vmul.f32 %v1010, 1.442695
      %v1060 = vpow.pop %v1059
      %v1061 = vmul.f32 %v1011, 1.442695
      %v1062 = vpow.pop %v1061
      %v1063 = vmul.f32 %v1012, 1.442695
      %v1064 = vpow.pop %v1063
      %v1065 = vmul.f32 %v1013, 1.442695
      %v1066 = vpow.pop %v1065
      %v1067 = vmul.f32 %v1014, 1.442695
      %v1068 = vpow.pop %v1067
      %v1069 = vmul.f32 %v1015, 1.442695
      %v1070 = vpow.pop %v1069
      %v1071 = vmul.f32 %v1016, 1.442695
      %v1072 = vpow.pop %v1071
      %v1073 = vmul.f32 %v1017, 1.442695
      %v1074 = vpow.pop %v1073
      %v1075 = vmul.f32 %v1018, 1.442695
      %v1076 = vpow.pop %v1075
      %v1077 = vmul.f32 %v1019, 1.442695
      %v1078 = vpow.pop %v1077
      %v1079 = vmul.f32 %v1020, 1.442695
      %v1080 = vpow.pop %v1079
      %v1081 = vmul.f32 %v1021, 1.442695
      %v1082 = vpow.pop %v1081
      %v1083 = vmul.f32 %v1022, 1.442695
      %v1084 = vpow.pop %v1083
      %v1085 = vmul.f32 %v1023, 1.442695
      %v1086 = vpow.pop %v1085
      %v1087 = vmul.f32 %v1024, 1.442695
      %v1088 = vpow.pop %v1087
      %v1089 = vsel %vm896, %v1026, 0.0
      %1090 = vadd.xlane.f32.xlu0 %v1089
      %v1091 = vpop.xlane.xlu0 %1090
      %v1092 = vsel %vm896, %v1028, 0.0
      %1093 = vadd.xlane.f32.xlu0 %v1092
      %v1094 = vpop.xlane.xlu0 %1093
      %v1095 = vsel %vm896, %v1030, 0.0
      %1096 = vadd.xlane.f32.xlu0 %v1095
      %v1097 = vpop.xlane.xlu0 %1096
      %v1098 = vsel %vm896, %v1032, 0.0
      %1099 = vadd.xlane.f32.xlu0 %v1098
      %v1100 = vpop.xlane.xlu0 %1099
      %v1101 = vsel %vm896, %v1034, 0.0
      %1102 = vadd.xlane.f32.xlu0 %v1101
      %v1103 = vpop.xlane.xlu0 %1102
      %v1104 = vsel %vm896, %v1036, 0.0
      %1105 = vadd.xlane.f32.xlu0 %v1104
      %v1106 = vpop.xlane.xlu0 %1105
      %v1107 = vsel %vm896, %v1038, 0.0
      %1108 = vadd.xlane.f32.xlu0 %v1107
      %v1109 = vpop.xlane.xlu0 %1108
      %v1110 = vsel %vm896, %v1040, 0.0
      %1111 = vadd.xlane.f32.xlu0 %v1110
      %v1112 = vpop.xlane.xlu0 %1111
      %v1113 = vsel %vm896, %v1042, 0.0
      %1114 = vadd.xlane.f32.xlu0 %v1113
      %v1115 = vpop.xlane.xlu0 %1114
      %v1116 = vsel %vm896, %v1044, 0.0
      %1117 = vadd.xlane.f32.xlu0 %v1116
      %v1118 = vpop.xlane.xlu0 %1117
      %v1119 = vsel %vm896, %v1046, 0.0
      %1120 = vadd.xlane.f32.xlu0 %v1119
      %v1121 = vpop.xlane.xlu0 %1120
      %v1122 = vsel %vm896, %v1048, 0.0
      %1123 = vadd.xlane.f32.xlu0 %v1122
      %v1124 = vpop.xlane.xlu0 %1123
      %v1125 = vsel %vm896, %v1050, 0.0
      %1126 = vadd.xlane.f32.xlu0 %v1125
      %v1127 = vpop.xlane.xlu0 %1126
      %v1128 = vsel %vm896, %v1052, 0.0
      %1129 = vadd.xlane.f32.xlu0 %v1128
      %v1130 = vpop.xlane.xlu0 %1129
      %v1131 = vsel %vm896, %v1054, 0.0
      %1132 = vadd.xlane.f32.xlu0 %v1131
      %v1133 = vpop.xlane.xlu0 %1132
      %v1134 = vsel %vm896, %v1056, 0.0
      %1135 = vadd.xlane.f32.xlu0 %v1134
      %v1136 = vpop.xlane.xlu0 %1135
      %v1137 = vsel %vm896, %v1058, 0.0
      %1138 = vadd.xlane.f32.xlu0 %v1137
      %v1139 = vpop.xlane.xlu0 %1138
      %v1140 = vsel %vm896, %v1060, 0.0
      %1141 = vadd.xlane.f32.xlu0 %v1140
      %v1142 = vpop.xlane.xlu0 %1141
      %v1143 = vsel %vm896, %v1062, 0.0
      %1144 = vadd.xlane.f32.xlu0 %v1143
      %v1145 = vpop.xlane.xlu0 %1144
      %v1146 = vsel %vm896, %v1064, 0.0
      %1147 = vadd.xlane.f32.xlu0 %v1146
      %v1148 = vpop.xlane.xlu0 %1147
      %v1149 = vsel %vm896, %v1066, 0.0
      %1150 = vadd.xlane.f32.xlu0 %v1149
      %v1151 = vpop.xlane.xlu0 %1150
      %v1152 = vsel %vm896, %v1068, 0.0
      %1153 = vadd.xlane.f32.xlu0 %v1152
      %v1154 = vpop.xlane.xlu0 %1153
      %v1155 = vsel %vm896, %v1070, 0.0
      %1156 = vadd.xlane.f32.xlu0 %v1155
      %v1157 = vpop.xlane.xlu0 %1156
      %v1158 = vsel %vm896, %v1072, 0.0
      %1159 = vadd.xlane.f32.xlu0 %v1158
      %v1160 = vpop.xlane.xlu0 %1159
      %v1161 = vsel %vm896, %v1074, 0.0
      %1162 = vadd.xlane.f32.xlu0 %v1161
      %v1163 = vpop.xlane.xlu0 %1162
      %v1164 = vsel %vm896, %v1076, 0.0
      %1165 = vadd.xlane.f32.xlu0 %v1164
      %v1166 = vpop.xlane.xlu0 %1165
      %v1167 = vsel %vm896, %v1078, 0.0
      %1168 = vadd.xlane.f32.xlu0 %v1167
      %v1169 = vpop.xlane.xlu0 %1168
      %v1170 = vsel %vm896, %v1080, 0.0
      %1171 = vadd.xlane.f32.xlu0 %v1170
      %v1172 = vpop.xlane.xlu0 %1171
      %v1173 = vsel %vm896, %v1082, 0.0
      %1174 = vadd.xlane.f32.xlu0 %v1173
      %v1175 = vpop.xlane.xlu0 %1174
      %v1176 = vsel %vm896, %v1084, 0.0
      %1177 = vadd.xlane.f32.xlu0 %v1176
      %v1178 = vpop.xlane.xlu0 %1177
      %v1179 = vsel %vm896, %v1086, 0.0
      %1180 = vadd.xlane.f32.xlu0 %v1179
      %v1181 = vpop.xlane.xlu0 %1180
      %v1182 = vsel %vm896, %v1088, 0.0
      %1183 = vadd.xlane.f32.xlu0 %v1182
      %v1184 = vpop.xlane.xlu0 %1183
      %v1185 = vrcp.pop %v1091
      %v1186 = vrcp.pop %v1094
      %v1187 = vrcp.pop %v1097
      %v1188 = vrcp.pop %v1100
      %v1189 = vrcp.pop %v1103
      %v1190 = vrcp.pop %v1106
      %v1191 = vrcp.pop %v1109
      %v1192 = vrcp.pop %v1112
      %v1193 = vrcp.pop %v1115
      %v1194 = vrcp.pop %v1118
      %v1195 = vrcp.pop %v1121
      %v1196 = vrcp.pop %v1124
      %v1197 = vrcp.pop %v1127
      %v1198 = vrcp.pop %v1130
      %v1199 = vrcp.pop %v1133
      %v1200 = vrcp.pop %v1136
      %v1201 = vrcp.pop %v1139
      %v1202 = vrcp.pop %v1142
      %v1203 = vrcp.pop %v1145
      %v1204 = vrcp.pop %v1148
      %v1205 = vrcp.pop %v1151
      %v1206 = vrcp.pop %v1154
      %v1207 = vrcp.pop %v1157
      %v1208 = vrcp.pop %v1160
      %v1209 = vrcp.pop %v1163
      %v1210 = vrcp.pop %v1166
      %v1211 = vrcp.pop %v1169
      %v1212 = vrcp.pop %v1172
      %v1213 = vrcp.pop %v1175
      %v1214 = vrcp.pop %v1178
      %v1215 = vrcp.pop %v1181
      %v1216 = vrcp.pop %v1184
      %v1217 = vmul.f32 %v1026, %v1185
      %v1218 = vmul.f32 %v1028, %v1186
      %v1219 = vmul.f32 %v1030, %v1187
      %v1220 = vmul.f32 %v1032, %v1188
      %v1221 = vmul.f32 %v1034, %v1189
      %v1222 = vmul.f32 %v1036, %v1190
      %v1223 = vmul.f32 %v1038, %v1191
      %v1224 = vmul.f32 %v1040, %v1192
      %v1225 = vmul.f32 %v1042, %v1193
      %v1226 = vmul.f32 %v1044, %v1194
      %v1227 = vmul.f32 %v1046, %v1195
      %v1228 = vmul.f32 %v1048, %v1196
      %v1229 = vmul.f32 %v1050, %v1197
      %v1230 = vmul.f32 %v1052, %v1198
      %v1231 = vmul.f32 %v1054, %v1199
      %v1232 = vmul.f32 %v1056, %v1200
      %v1233 = vmul.f32 %v1058, %v1201
      %v1234 = vmul.f32 %v1060, %v1202
      %v1235 = vmul.f32 %v1062, %v1203
      %v1236 = vmul.f32 %v1064, %v1204
      %v1237 = vmul.f32 %v1066, %v1205
      %v1238 = vmul.f32 %v1068, %v1206
      %v1239 = vmul.f32 %v1070, %v1207
      %v1240 = vmul.f32 %v1072, %v1208
      %v1241 = vmul.f32 %v1074, %v1209
      %v1242 = vmul.f32 %v1076, %v1210
      %v1243 = vmul.f32 %v1078, %v1211
      %v1244 = vmul.f32 %v1080, %v1212
      %v1245 = vmul.f32 %v1082, %v1213
      %v1246 = vmul.f32 %v1084, %v1214
      %v1247 = vmul.f32 %v1086, %v1215
      %v1248 = vmul.f32 %v1088, %v1216
      %v1249 = vpack.c.bf16 %v1217, %v1217
      %v1250 = vpack.c.bf16 %v1218, %v1218
      %v1251 = vpack.c.bf16 %v1219, %v1219
      %v1252 = vpack.c.bf16 %v1220, %v1220
      %v1253 = vpack.c.bf16 %v1221, %v1221
      %v1254 = vpack.c.bf16 %v1222, %v1222
      %v1255 = vpack.c.bf16 %v1223, %v1223
      %v1256 = vpack.c.bf16 %v1224, %v1224
      %v1257 = vpack.c.bf16 %v1225, %v1225
      %v1258 = vpack.c.bf16 %v1226, %v1226
      %v1259 = vpack.c.bf16 %v1227, %v1227
      %v1260 = vpack.c.bf16 %v1228, %v1228
      %v1261 = vpack.c.bf16 %v1229, %v1229
      %v1262 = vpack.c.bf16 %v1230, %v1230
      %v1263 = vpack.c.bf16 %v1231, %v1231
      %v1264 = vpack.c.bf16 %v1232, %v1232
      %v1265 = vpack.c.bf16 %v1233, %v1233
      %v1266 = vpack.c.bf16 %v1234, %v1234
      %v1267 = vpack.c.bf16 %v1235, %v1235
      %v1268 = vpack.c.bf16 %v1236, %v1236
      %v1269 = vpack.c.bf16 %v1237, %v1237
      %v1270 = vpack.c.bf16 %v1238, %v1238
      %v1271 = vpack.c.bf16 %v1239, %v1239
      %v1272 = vpack.c.bf16 %v1240, %v1240
      %v1273 = vpack.c.bf16 %v1241, %v1241
      %v1274 = vpack.c.bf16 %v1242, %v1242
      %v1275 = vpack.c.bf16 %v1243, %v1243
      %v1276 = vpack.c.bf16 %v1244, %v1244
      %v1277 = vpack.c.bf16 %v1245, %v1245
      %v1278 = vpack.c.bf16 %v1246, %v1246
      %v1279 = vpack.c.bf16 %v1247, %v1247
      %v1280 = vpack.c.bf16 %v1248, %v1248
      %v1289 = vunpack.c.l.b16 %v1249
      %v1290 = vunpack.c.l.b16 %v1250
      %v1291 = vunpack.c.l.b16 %v1251
      %v1292 = vunpack.c.l.b16 %v1252
      %v1293 = vunpack.c.l.b16 %v1253
      %v1294 = vunpack.c.l.b16 %v1254
      %v1295 = vunpack.c.l.b16 %v1255
      %v1296 = vunpack.c.l.b16 %v1256
      %v1297 = vpack.c.b16 %v1290, %v1289
      %v1298 = vpack.c.b16 %v1292, %v1291
      %v1299 = vpack.c.b16 %v1294, %v1293
      %v1300 = vpack.c.b16 %v1296, %v1295
      %1301 = vrot.lane.b32.xlu0 %v587, 64
      %v1302 = vpop.permute.xlu0 %1301
      %1303 = vrot.lane.b32.xlu0 %v588, 64
      %v1304 = vpop.permute.xlu0 %1303
      %1305 = vrot.lane.b32.xlu0 %v589, 64
      %v1306 = vpop.permute.xlu0 %1305
      %1307 = vrot.lane.b32.xlu0 %v590, 64
      %v1308 = vpop.permute.xlu0 %1307
      %v1314 = vsel %vm896, %v1297, 0
      %v1317 = vsel %vm896, %v1298, 0
      %v1320 = vsel %vm896, %v1299, 0
      %v1323 = vsel %vm896, %v1300, 0
      %1325 = vmatpush.bf16.msra.mxu0 0
      %1326 = vmatpush.bf16.msra.mxu0 0
      %1327 = vmatpush.bf16.msra.mxu0 0
      %1328 = vmatpush.bf16.msra.mxu0 0
      %1329 = vmatpush.bf16.msra.mxu0 %v1308
      %1330 = vmatpush.bf16.msra.mxu0 %v1306
      %1331 = vmatpush.bf16.msra.mxu0 %v1304
      %1332 = vmatpush.bf16.msra.mxu0 %v1302
      %1333 = vmatmul.bf16.gmra.mxu0 %v1314
      %v1334 = vpop.f32.mrf.mxu0
      %v1335 = vadd.f32 0.0, %v1334
      %v1336 = vpop.f32.mrf.mxu0
      %v1337 = vadd.f32 0.0, %v1336
      %1338 = vmatmul.bf16.gmra.mxu0 %v1317
      %v1339 = vpop.f32.mrf.mxu0
      %v1340 = vadd.f32 0.0, %v1339
      %v1341 = vpop.f32.mrf.mxu0
      %v1342 = vadd.f32 0.0, %v1341
      %1343 = vmatmul.bf16.gmra.mxu0 %v1320
      %v1344 = vpop.f32.mrf.mxu0
      %v1345 = vadd.f32 0.0, %v1344
      %v1346 = vpop.f32.mrf.mxu0
      %v1347 = vadd.f32 0.0, %v1346
      %1348 = vmatmul.bf16.gmra.mxu0 %v1323
      %v1349 = vpop.f32.mrf.mxu0
      %v1350 = vadd.f32 0.0, %v1349
      %v1351 = vpop.f32.mrf.mxu0
      %v1352 = vadd.f32 0.0, %v1351
      %1353 = vdwg.mxu0
      %v1362 = vunpack.c.l.b16 %v1257
      %v1363 = vunpack.c.l.b16 %v1258
      %v1364 = vunpack.c.l.b16 %v1259
      %v1365 = vunpack.c.l.b16 %v1260
      %v1366 = vunpack.c.l.b16 %v1261
      %v1367 = vunpack.c.l.b16 %v1262
      %v1368 = vunpack.c.l.b16 %v1263
      %v1369 = vunpack.c.l.b16 %v1264
      %v1370 = vpack.c.b16 %v1363, %v1362
      %v1371 = vpack.c.b16 %v1365, %v1364
      %v1372 = vpack.c.b16 %v1367, %v1366
      %v1373 = vpack.c.b16 %v1369, %v1368
      %1374 = vrot.lane.b32.xlu0 %v669, 64
      %v1375 = vpop.permute.xlu0 %1374
      %1376 = vrot.lane.b32.xlu0 %v670, 64
      %v1377 = vpop.permute.xlu0 %1376
      %1378 = vrot.lane.b32.xlu0 %v671, 64
      %v1379 = vpop.permute.xlu0 %1378
      %1380 = vrot.lane.b32.xlu0 %v672, 64
      %v1381 = vpop.permute.xlu0 %1380
      %v1387 = vsel %vm896, %v1370, 0
      %v1390 = vsel %vm896, %v1371, 0
      %v1393 = vsel %vm896, %v1372, 0
      %v1396 = vsel %vm896, %v1373, 0
      %1398 = vmatpush.bf16.msra.mxu0 0
      %1399 = vmatpush.bf16.msra.mxu0 0
      %1400 = vmatpush.bf16.msra.mxu0 0
      %1401 = vmatpush.bf16.msra.mxu0 0
      %1402 = vmatpush.bf16.msra.mxu0 %v1381
      %1403 = vmatpush.bf16.msra.mxu0 %v1379
      %1404 = vmatpush.bf16.msra.mxu0 %v1377
      %1405 = vmatpush.bf16.msra.mxu0 %v1375
      %1406 = vmatmul.bf16.gmra.mxu0 %v1387
      %v1407 = vpop.f32.mrf.mxu0
      %v1408 = vadd.f32 0.0, %v1407
      %v1409 = vpop.f32.mrf.mxu0
      %v1410 = vadd.f32 0.0, %v1409
      %1411 = vmatmul.bf16.gmra.mxu0 %v1390
      %v1412 = vpop.f32.mrf.mxu0
      %v1413 = vadd.f32 0.0, %v1412
      %v1414 = vpop.f32.mrf.mxu0
      %v1415 = vadd.f32 0.0, %v1414
      %1416 = vmatmul.bf16.gmra.mxu0 %v1393
      %v1417 = vpop.f32.mrf.mxu0
      %v1418 = vadd.f32 0.0, %v1417
      %v1419 = vpop.f32.mrf.mxu0
      %v1420 = vadd.f32 0.0, %v1419
      %1421 = vmatmul.bf16.gmra.mxu0 %v1396
      %v1422 = vpop.f32.mrf.mxu0
      %v1423 = vadd.f32 0.0, %v1422
      %v1424 = vpop.f32.mrf.mxu0
      %v1425 = vadd.f32 0.0, %v1424
      %1426 = vdwg.mxu0
      %v1435 = vunpack.c.l.b16 %v1265
      %v1436 = vunpack.c.l.b16 %v1266
      %v1437 = vunpack.c.l.b16 %v1267
      %v1438 = vunpack.c.l.b16 %v1268
      %v1439 = vunpack.c.l.b16 %v1269
      %v1440 = vunpack.c.l.b16 %v1270
      %v1441 = vunpack.c.l.b16 %v1271
      %v1442 = vunpack.c.l.b16 %v1272
      %v1443 = vpack.c.b16 %v1436, %v1435
      %v1444 = vpack.c.b16 %v1438, %v1437
      %v1445 = vpack.c.b16 %v1440, %v1439
      %v1446 = vpack.c.b16 %v1442, %v1441
      %1447 = vrot.lane.b32.xlu0 %v750, 64
      %v1448 = vpop.permute.xlu0 %1447
      %1449 = vrot.lane.b32.xlu0 %v751, 64
      %v1450 = vpop.permute.xlu0 %1449
      %1451 = vrot.lane.b32.xlu0 %v752, 64
      %v1452 = vpop.permute.xlu0 %1451
      %1453 = vrot.lane.b32.xlu0 %v753, 64
      %v1454 = vpop.permute.xlu0 %1453
      %v1460 = vsel %vm896, %v1443, 0
      %v1463 = vsel %vm896, %v1444, 0
      %v1466 = vsel %vm896, %v1445, 0
      %v1469 = vsel %vm896, %v1446, 0
      %1471 = vmatpush.bf16.msra.mxu0 0
      %1472 = vmatpush.bf16.msra.mxu0 0
      %1473 = vmatpush.bf16.msra.mxu0 0
      %1474 = vmatpush.bf16.msra.mxu0 0
      %1475 = vmatpush.bf16.msra.mxu0 %v1454
      %1476 = vmatpush.bf16.msra.mxu0 %v1452
      %1477 = vmatpush.bf16.msra.mxu0 %v1450
      %1478 = vmatpush.bf16.msra.mxu0 %v1448
      %1479 = vmatmul.bf16.gmra.mxu0 %v1460
      %v1480 = vpop.f32.mrf.mxu0
      %v1481 = vadd.f32 0.0, %v1480
      %v1482 = vpop.f32.mrf.mxu0
      %v1483 = vadd.f32 0.0, %v1482
      %1484 = vmatmul.bf16.gmra.mxu0 %v1463
      %v1485 = vpop.f32.mrf.mxu0
      %v1486 = vadd.f32 0.0, %v1485
      %v1487 = vpop.f32.mrf.mxu0
      %v1488 = vadd.f32 0.0, %v1487
      %1489 = vmatmul.bf16.gmra.mxu0 %v1466
      %v1490 = vpop.f32.mrf.mxu0
      %v1491 = vadd.f32 0.0, %v1490
      %v1492 = vpop.f32.mrf.mxu0
      %v1493 = vadd.f32 0.0, %v1492
      %1494 = vmatmul.bf16.gmra.mxu0 %v1469
      %v1495 = vpop.f32.mrf.mxu0
      %v1496 = vadd.f32 0.0, %v1495
      %v1497 = vpop.f32.mrf.mxu0
      %v1498 = vadd.f32 0.0, %v1497
      %1499 = vdwg.mxu0
      %v1508 = vunpack.c.l.b16 %v1273
      %v1509 = vunpack.c.l.b16 %v1274
      %v1510 = vunpack.c.l.b16 %v1275
      %v1511 = vunpack.c.l.b16 %v1276
      %v1512 = vunpack.c.l.b16 %v1277
      %v1513 = vunpack.c.l.b16 %v1278
      %v1514 = vunpack.c.l.b16 %v1279
      %v1515 = vunpack.c.l.b16 %v1280
      %v1516 = vpack.c.b16 %v1509, %v1508
      %v1517 = vpack.c.b16 %v1511, %v1510
      %v1518 = vpack.c.b16 %v1513, %v1512
      %v1519 = vpack.c.b16 %v1515, %v1514
      %1520 = vrot.lane.b32.xlu0 %v831, 64
      %v1521 = vpop.permute.xlu0 %1520
      %1522 = vrot.lane.b32.xlu0 %v832, 64
      %v1523 = vpop.permute.xlu0 %1522
      %1524 = vrot.lane.b32.xlu0 %v833, 64
      %v1525 = vpop.permute.xlu0 %1524
      %1526 = vrot.lane.b32.xlu0 %v834, 64
      %v1527 = vpop.permute.xlu0 %1526
      %v1533 = vsel %vm896, %v1516, 0
      %v1536 = vsel %vm896, %v1517, 0
      %v1539 = vsel %vm896, %v1518, 0
      %v1542 = vsel %vm896, %v1519, 0
      %1544 = vmatpush.bf16.msra.mxu0 0
      %1545 = vmatpush.bf16.msra.mxu0 0
      %1546 = vmatpush.bf16.msra.mxu0 0
      %1547 = vmatpush.bf16.msra.mxu0 0
      %1548 = vmatpush.bf16.msra.mxu0 %v1527
      %1549 = vmatpush.bf16.msra.mxu0 %v1525
      %1550 = vmatpush.bf16.msra.mxu0 %v1523
      %1551 = vmatpush.bf16.msra.mxu0 %v1521
      %1552 = vmatmul.bf16.gmra.mxu0 %v1533
      %v1553 = vpop.f32.mrf.mxu0
      %v1554 = vadd.f32 0.0, %v1553
      %v1555 = vpop.f32.mrf.mxu0
      %v1556 = vadd.f32 0.0, %v1555
      %1557 = vmatmul.bf16.gmra.mxu0 %v1536
      %v1558 = vpop.f32.mrf.mxu0
      %v1559 = vadd.f32 0.0, %v1558
      %v1560 = vpop.f32.mrf.mxu0
      %v1561 = vadd.f32 0.0, %v1560
      %1562 = vmatmul.bf16.gmra.mxu0 %v1539
      %v1563 = vpop.f32.mrf.mxu0
      %v1564 = vadd.f32 0.0, %v1563
      %v1565 = vpop.f32.mrf.mxu0
      %v1566 = vadd.f32 0.0, %v1565
      %1567 = vmatmul.bf16.gmra.mxu0 %v1542
      %v1568 = vpop.f32.mrf.mxu0
      %v1569 = vadd.f32 0.0, %v1568
      %v1570 = vpop.f32.mrf.mxu0
      %v1571 = vadd.f32 0.0, %v1570
      %1572 = vdwg.mxu0
      %v1573 = vpack.c.bf16 %v1335, %v1335
      %v1574 = vpack.c.bf16 %v1337, %v1337
      %v1575 = vpack.c.bf16 %v1340, %v1340
      %v1576 = vpack.c.bf16 %v1342, %v1342
      %v1577 = vpack.c.bf16 %v1345, %v1345
      %v1578 = vpack.c.bf16 %v1347, %v1347
      %v1579 = vpack.c.bf16 %v1350, %v1350
      %v1580 = vpack.c.bf16 %v1352, %v1352
      %v1581 = vpack.c.bf16 %v1408, %v1408
      %v1582 = vpack.c.bf16 %v1410, %v1410
      %v1583 = vpack.c.bf16 %v1413, %v1413
      %v1584 = vpack.c.bf16 %v1415, %v1415
      %v1585 = vpack.c.bf16 %v1418, %v1418
      %v1586 = vpack.c.bf16 %v1420, %v1420
      %v1587 = vpack.c.bf16 %v1423, %v1423
      %v1588 = vpack.c.bf16 %v1425, %v1425
      %v1589 = vpack.c.bf16 %v1481, %v1481
      %v1590 = vpack.c.bf16 %v1483, %v1483
      %v1591 = vpack.c.bf16 %v1486, %v1486
      %v1592 = vpack.c.bf16 %v1488, %v1488
      %v1593 = vpack.c.bf16 %v1491, %v1491
      %v1594 = vpack.c.bf16 %v1493, %v1493
      %v1595 = vpack.c.bf16 %v1496, %v1496
      %v1596 = vpack.c.bf16 %v1498, %v1498
      %v1597 = vpack.c.bf16 %v1554, %v1554
      %v1598 = vpack.c.bf16 %v1556, %v1556
      %v1599 = vpack.c.bf16 %v1559, %v1559
      %v1600 = vpack.c.bf16 %v1561, %v1561
      %v1601 = vpack.c.bf16 %v1564, %v1564
      %v1602 = vpack.c.bf16 %v1566, %v1566
      %v1603 = vpack.c.bf16 %v1569, %v1569
      %v1604 = vpack.c.bf16 %v1571, %v1571
      %vm1605 = vcmask 60416
      %1606 = vst.msk [vmem:[#allocation2] sm:$0xf] %vm1605, %v1573
      %1607 = vst.msk [vmem:[#allocation2 + $0x4] sm:$0xf] %vm1605, %v1574
      %1608 = vst.msk [vmem:[#allocation2 + $0x8] sm:$0xf] %vm1605, %v1575
      %1609 = vst.msk [vmem:[#allocation2 + $0xc] sm:$0xf] %vm1605, %v1576
      %1610 = vst.msk [vmem:[#allocation2 + $0x10] sm:$0xf] %vm1605, %v1577
      %1611 = vst.msk [vmem:[#allocation2 + $0x14] sm:$0xf] %vm1605, %v1578
      %1612 = vst.msk [vmem:[#allocation2 + $0x18] sm:$0xf] %vm1605, %v1579
      %1613 = vst.msk [vmem:[#allocation2 + $0x1c] sm:$0xf] %vm1605, %v1580
      %1614 = vst.msk [vmem:[#allocation2 + $0x20] sm:$0xf] %vm1605, %v1581
      %1615 = vst.msk [vmem:[#allocation2 + $0x24] sm:$0xf] %vm1605, %v1582
      %1616 = vst.msk [vmem:[#allocation2 + $0x28] sm:$0xf] %vm1605, %v1583
      %1617 = vst.msk [vmem:[#allocation2 + $0x2c] sm:$0xf] %vm1605, %v1584
      %1618 = vst.msk [vmem:[#allocation2 + $0x30] sm:$0xf] %vm1605, %v1585
      %1619 = vst.msk [vmem:[#allocation2 + $0x34] sm:$0xf] %vm1605, %v1586
      %1620 = vst.msk [vmem:[#allocation2 + $0x38] sm:$0xf] %vm1605, %v1587
      %1621 = vst.msk [vmem:[#allocation2 + $0x3c] sm:$0xf] %vm1605, %v1588
      %1622 = vst.msk [vmem:[#allocation2 + $0x40] sm:$0xf] %vm1605, %v1589
      %1623 = vst.msk [vmem:[#allocation2 + $0x44] sm:$0xf] %vm1605, %v1590
      %1624 = vst.msk [vmem:[#allocation2 + $0x48] sm:$0xf] %vm1605, %v1591
      %1625 = vst.msk [vmem:[#allocation2 + $0x4c] sm:$0xf] %vm1605, %v1592
      %1626 = vst.msk [vmem:[#allocation2 + $0x50] sm:$0xf] %vm1605, %v1593
      %1627 = vst.msk [vmem:[#allocation2 + $0x54] sm:$0xf] %vm1605, %v1594
      %1628 = vst.msk [vmem:[#allocation2 + $0x58] sm:$0xf] %vm1605, %v1595
      %1629 = vst.msk [vmem:[#allocation2 + $0x5c] sm:$0xf] %vm1605, %v1596
      %1630 = vst.msk [vmem:[#allocation2 + $0x60] sm:$0xf] %vm1605, %v1597
      %1631 = vst.msk [vmem:[#allocation2 + $0x64] sm:$0xf] %vm1605, %v1598
      %1632 = vst.msk [vmem:[#allocation2 + $0x68] sm:$0xf] %vm1605, %v1599
      %1633 = vst.msk [vmem:[#allocation2 + $0x6c] sm:$0xf] %vm1605, %v1600
      %1634 = vst.msk [vmem:[#allocation2 + $0x70] sm:$0xf] %vm1605, %v1601
      %1635 = vst.msk [vmem:[#allocation2 + $0x74] sm:$0xf] %vm1605, %v1602
      %1636 = vst.msk [vmem:[#allocation2 + $0x78] sm:$0xf] %vm1605, %v1603
      %1637 = vst.msk [vmem:[#allocation2 + $0x7c] sm:$0xf] %vm1605, %v1604
      %s1638 = scalar_lea.vmem %s3, 64
      %v1639 = vld [vmem:[%s1638] sm:$0xff]
      %v1640 = vld [vmem:[%s1638 + $0x8] sm:$0xff]
      %v1641 = vld [vmem:[%s1638 + $0x10] sm:$0xff]
      %v1642 = vld [vmem:[%s1638 + $0x18] sm:$0xff]
      %v1643 = vld [vmem:[%s1638 + $0x20] sm:$0xff]
      %v1644 = vld [vmem:[%s1638 + $0x28] sm:$0xff]
      %v1645 = vld [vmem:[%s1638 + $0x30] sm:$0xff]
      %v1646 = vld [vmem:[%s1638 + $0x38] sm:$0xff]
      %1647 = vrot.lane.b32.xlu0 %v587, 120
      %v1648 = vpop.permute.xlu0 %1647
      %1649 = vrot.lane.b32.xlu0 %v588, 120
      %v1650 = vpop.permute.xlu0 %1649
      %1651 = vrot.lane.b32.xlu0 %v589, 120
      %v1652 = vpop.permute.xlu0 %1651
      %1653 = vrot.lane.b32.xlu0 %v590, 120
      %v1654 = vpop.permute.xlu0 %1653
      %1655 = vrot.lane.b32.xlu0 %v587, 88
      %v1656 = vpop.permute.xlu0 %1655
      %1657 = vrot.lane.b32.xlu0 %v588, 88
      %v1658 = vpop.permute.xlu0 %1657
      %1659 = vrot.lane.b32.xlu0 %v589, 88
      %v1660 = vpop.permute.xlu0 %1659
      %1661 = vrot.lane.b32.xlu0 %v590, 88
      %v1662 = vpop.permute.xlu0 %1661
      %v1664 = vsel %vm599, %v1648, 0
      %v1667 = vsel %vm599, %v1650, 0
      %v1670 = vsel %vm599, %v1652, 0
      %v1673 = vsel %vm599, %v1654, 0
      %v1676 = vsel %vm599, %v1656, 0
      %v1679 = vsel %vm599, %v1658, 0
      %v1682 = vsel %vm599, %v1660, 0
      %v1685 = vsel %vm599, %v1662, 0
      %1687 = vmatpush.bf16.xpose.msra.mxu0 0
      %1688 = vmatpush.bf16.xpose.msra.mxu0 0
      %1689 = vmatpush.bf16.xpose.msra.mxu0 0
      %1690 = vmatpush.bf16.xpose.msra.mxu0 0
      %1691 = vmatpush.bf16.xpose.msra.mxu0 %v1685
      %1692 = vmatpush.bf16.xpose.msra.mxu0 %v1682
      %1693 = vmatpush.bf16.xpose.msra.mxu0 %v1679
      %1694 = vmatpush.bf16.xpose.msra.mxu0 %v1676
      %1695 = vmatmul.bf16.gmra.mxu0 %v1664
      %v1696 = vpop.f32.mrf.mxu0
      %v1697 = vadd.f32 %v1639, %v1696
      %v1698 = vpop.f32.mrf.mxu0
      %v1699 = vadd.f32 %v1640, %v1698
      %1700 = vmatmul.bf16.gmra.mxu0 %v1667
      %v1701 = vpop.f32.mrf.mxu0
      %v1702 = vadd.f32 %v1641, %v1701
      %v1703 = vpop.f32.mrf.mxu0
      %v1704 = vadd.f32 %v1642, %v1703
      %1705 = vmatmul.bf16.gmra.mxu0 %v1670
      %v1706 = vpop.f32.mrf.mxu0
      %v1707 = vadd.f32 %v1643, %v1706
      %v1708 = vpop.f32.mrf.mxu0
      %v1709 = vadd.f32 %v1644, %v1708
      %1710 = vmatmul.bf16.gmra.mxu0 %v1673
      %v1711 = vpop.f32.mrf.mxu0
      %v1712 = vadd.f32 %v1645, %v1711
      %v1713 = vpop.f32.mrf.mxu0
      %v1714 = vadd.f32 %v1646, %v1713
      %1715 = vdwg.mxu0
      %1716 = vrot.lane.b32.xlu0 %v669, 120
      %v1717 = vpop.permute.xlu0 %1716
      %1718 = vrot.lane.b32.xlu0 %v670, 120
      %v1719 = vpop.permute.xlu0 %1718
      %1720 = vrot.lane.b32.xlu0 %v671, 120
      %v1721 = vpop.permute.xlu0 %1720
      %1722 = vrot.lane.b32.xlu0 %v672, 120
      %v1723 = vpop.permute.xlu0 %1722
      %1724 = vrot.lane.b32.xlu0 %v669, 88
      %v1725 = vpop.permute.xlu0 %1724
      %1726 = vrot.lane.b32.xlu0 %v670, 88
      %v1727 = vpop.permute.xlu0 %1726
      %1728 = vrot.lane.b32.xlu0 %v671, 88
      %v1729 = vpop.permute.xlu0 %1728
      %1730 = vrot.lane.b32.xlu0 %v672, 88
      %v1731 = vpop.permute.xlu0 %1730
      %v1733 = vsel %vm599, %v1717, 0
      %v1736 = vsel %vm599, %v1719, 0
      %v1739 = vsel %vm599, %v1721, 0
      %v1742 = vsel %vm599, %v1723, 0
      %v1745 = vsel %vm599, %v1725, 0
      %v1748 = vsel %vm599, %v1727, 0
      %v1751 = vsel %vm599, %v1729, 0
      %v1754 = vsel %vm599, %v1731, 0
      %1756 = vmatpush.bf16.xpose.msra.mxu0 0
      %1757 = vmatpush.bf16.xpose.msra.mxu0 0
      %1758 = vmatpush.bf16.xpose.msra.mxu0 0
      %1759 = vmatpush.bf16.xpose.msra.mxu0 0
      %1760 = vmatpush.bf16.xpose.msra.mxu0 %v1754
      %1761 = vmatpush.bf16.xpose.msra.mxu0 %v1751
      %1762 = vmatpush.bf16.xpose.msra.mxu0 %v1748
      %1763 = vmatpush.bf16.xpose.msra.mxu0 %v1745
      %1764 = vmatmul.bf16.gmra.mxu0 %v1733
      %v1765 = vpop.f32.mrf.mxu0
      %v1766 = vadd.f32 %v1639, %v1765
      %v1767 = vpop.f32.mrf.mxu0
      %v1768 = vadd.f32 %v1640, %v1767
      %1769 = vmatmul.bf16.gmra.mxu0 %v1736
      %v1770 = vpop.f32.mrf.mxu0
      %v1771 = vadd.f32 %v1641, %v1770
      %v1772 = vpop.f32.mrf.mxu0
      %v1773 = vadd.f32 %v1642, %v1772
      %1774 = vmatmul.bf16.gmra.mxu0 %v1739
      %v1775 = vpop.f32.mrf.mxu0
      %v1776 = vadd.f32 %v1643, %v1775
      %v1777 = vpop.f32.mrf.mxu0
      %v1778 = vadd.f32 %v1644, %v1777
      %1779 = vmatmul.bf16.gmra.mxu0 %v1742
      %v1780 = vpop.f32.mrf.mxu0
      %v1781 = vadd.f32 %v1645, %v1780
      %v1782 = vpop.f32.mrf.mxu0
      %v1783 = vadd.f32 %v1646, %v1782
      %1784 = vdwg.mxu0
      %1785 = vrot.lane.b32.xlu0 %v750, 120
      %v1786 = vpop.permute.xlu0 %1785
      %1787 = vrot.lane.b32.xlu0 %v751, 120
      %v1788 = vpop.permute.xlu0 %1787
      %1789 = vrot.lane.b32.xlu0 %v752, 120
      %v1790 = vpop.permute.xlu0 %1789
      %1791 = vrot.lane.b32.xlu0 %v753, 120
      %v1792 = vpop.permute.xlu0 %1791
      %1793 = vrot.lane.b32.xlu0 %v750, 88
      %v1794 = vpop.permute.xlu0 %1793
      %1795 = vrot.lane.b32.xlu0 %v751, 88
      %v1796 = vpop.permute.xlu0 %1795
      %1797 = vrot.lane.b32.xlu0 %v752, 88
      %v1798 = vpop.permute.xlu0 %1797
      %1799 = vrot.lane.b32.xlu0 %v753, 88
      %v1800 = vpop.permute.xlu0 %1799
      %v1802 = vsel %vm599, %v1786, 0
      %v1805 = vsel %vm599, %v1788, 0
      %v1808 = vsel %vm599, %v1790, 0
      %v1811 = vsel %vm599, %v1792, 0
      %v1814 = vsel %vm599, %v1794, 0
      %v1817 = vsel %vm599, %v1796, 0
      %v1820 = vsel %vm599, %v1798, 0
      %v1823 = vsel %vm599, %v1800, 0
      %1825 = vmatpush.bf16.xpose.msra.mxu0 0
      %1826 = vmatpush.bf16.xpose.msra.mxu0 0
      %1827 = vmatpush.bf16.xpose.msra.mxu0 0
      %1828 = vmatpush.bf16.xpose.msra.mxu0 0
      %1829 = vmatpush.bf16.xpose.msra.mxu0 %v1823
      %1830 = vmatpush.bf16.xpose.msra.mxu0 %v1820
      %1831 = vmatpush.bf16.xpose.msra.mxu0 %v1817
      %1832 = vmatpush.bf16.xpose.msra.mxu0 %v1814
      %1833 = vmatmul.bf16.gmra.mxu0 %v1802
      %v1834 = vpop.f32.mrf.mxu0
      %v1835 = vadd.f32 %v1639, %v1834
      %v1836 = vpop.f32.mrf.mxu0
      %v1837 = vadd.f32 %v1640, %v1836
      %1838 = vmatmul.bf16.gmra.mxu0 %v1805
      %v1839 = vpop.f32.mrf.mxu0
      %v1840 = vadd.f32 %v1641, %v1839
      %v1841 = vpop.f32.mrf.mxu0
      %v1842 = vadd.f32 %v1642, %v1841
      %1843 = vmatmul.bf16.gmra.mxu0 %v1808
      %v1844 = vpop.f32.mrf.mxu0
      %v1845 = vadd.f32 %v1643, %v1844
      %v1846 = vpop.f32.mrf.mxu0
      %v1847 = vadd.f32 %v1644, %v1846
      %1848 = vmatmul.bf16.gmra.mxu0 %v1811
      %v1849 = vpop.f32.mrf.mxu0
      %v1850 = vadd.f32 %v1645, %v1849
      %v1851 = vpop.f32.mrf.mxu0
      %v1852 = vadd.f32 %v1646, %v1851
      %1853 = vdwg.mxu0
      %1854 = vrot.lane.b32.xlu0 %v831, 120
      %v1855 = vpop.permute.xlu0 %1854
      %1856 = vrot.lane.b32.xlu0 %v832, 120
      %v1857 = vpop.permute.xlu0 %1856
      %1858 = vrot.lane.b32.xlu0 %v833, 120
      %v1859 = vpop.permute.xlu0 %1858
      %1860 = vrot.lane.b32.xlu0 %v834, 120
      %v1861 = vpop.permute.xlu0 %1860
      %1862 = vrot.lane.b32.xlu0 %v831, 88
      %v1863 = vpop.permute.xlu0 %1862
      %1864 = vrot.lane.b32.xlu0 %v832, 88
      %v1865 = vpop.permute.xlu0 %1864
      %1866 = vrot.lane.b32.xlu0 %v833, 88
      %v1867 = vpop.permute.xlu0 %1866
      %1868 = vrot.lane.b32.xlu0 %v834, 88
      %v1869 = vpop.permute.xlu0 %1868
      %v1871 = vsel %vm599, %v1855, 0
      %v1874 = vsel %vm599, %v1857, 0
      %v1877 = vsel %vm599, %v1859, 0
      %v1880 = vsel %vm599, %v1861, 0
      %v1883 = vsel %vm599, %v1863, 0
      %v1886 = vsel %vm599, %v1865, 0
      %v1889 = vsel %vm599, %v1867, 0
      %v1892 = vsel %vm599, %v1869, 0
      %1894 = vmatpush.bf16.xpose.msra.mxu0 0
      %1895 = vmatpush.bf16.xpose.msra.mxu0 0
      %1896 = vmatpush.bf16.xpose.msra.mxu0 0
      %1897 = vmatpush.bf16.xpose.msra.mxu0 0
      %1898 = vmatpush.bf16.xpose.msra.mxu0 %v1892
      %1899 = vmatpush.bf16.xpose.msra.mxu0 %v1889
      %1900 = vmatpush.bf16.xpose.msra.mxu0 %v1886
      %1901 = vmatpush.bf16.xpose.msra.mxu0 %v1883
      %1902 = vmatmul.bf16.gmra.mxu0 %v1871
      %v1903 = vpop.f32.mrf.mxu0
      %v1904 = vadd.f32 %v1639, %v1903
      %v1905 = vpop.f32.mrf.mxu0
      %v1906 = vadd.f32 %v1640, %v1905
      %1907 = vmatmul.bf16.gmra.mxu0 %v1874
      %v1908 = vpop.f32.mrf.mxu0
      %v1909 = vadd.f32 %v1641, %v1908
      %v1910 = vpop.f32.mrf.mxu0
      %v1911 = vadd.f32 %v1642, %v1910
      %1912 = vmatmul.bf16.gmra.mxu0 %v1877
      %v1913 = vpop.f32.mrf.mxu0
      %v1914 = vadd.f32 %v1643, %v1913
      %v1915 = vpop.f32.mrf.mxu0
      %v1916 = vadd.f32 %v1644, %v1915
      %1917 = vmatmul.bf16.gmra.mxu0 %v1880
      %v1918 = vpop.f32.mrf.mxu0
      %v1919 = vadd.f32 %v1645, %v1918
      %v1920 = vpop.f32.mrf.mxu0
      %v1921 = vadd.f32 %v1646, %v1920
      %1922 = vdwg.mxu0
      %v1923 = vsel %vm896, %v1697, -inf
      %1924 = vmax.xlane.f32.xlu0 %v1923
      %v1925 = vpop.xlane.xlu0 %1924
      %v1926 = vsel %vm896, %v1699, -inf
      %1927 = vmax.xlane.f32.xlu0 %v1926
      %v1928 = vpop.xlane.xlu0 %1927
      %v1929 = vsel %vm896, %v1702, -inf
      %1930 = vmax.xlane.f32.xlu0 %v1929
      %v1931 = vpop.xlane.xlu0 %1930
      %v1932 = vsel %vm896, %v1704, -inf
      %1933 = vmax.xlane.f32.xlu0 %v1932
      %v1934 = vpop.xlane.xlu0 %1933
      %v1935 = vsel %vm896, %v1707, -inf
      %1936 = vmax.xlane.f32.xlu0 %v1935
      %v1937 = vpop.xlane.xlu0 %1936
      %v1938 = vsel %vm896, %v1709, -inf
      %1939 = vmax.xlane.f32.xlu0 %v1938
      %v1940 = vpop.xlane.xlu0 %1939
      %v1941 = vsel %vm896, %v1712, -inf
      %1942 = vmax.xlane.f32.xlu0 %v1941
      %v1943 = vpop.xlane.xlu0 %1942
      %v1944 = vsel %vm896, %v1714, -inf
      %1945 = vmax.xlane.f32.xlu0 %v1944
      %v1946 = vpop.xlane.xlu0 %1945
      %v1947 = vsel %vm896, %v1766, -inf
      %1948 = vmax.xlane.f32.xlu0 %v1947
      %v1949 = vpop.xlane.xlu0 %1948
      %v1950 = vsel %vm896, %v1768, -inf
      %1951 = vmax.xlane.f32.xlu0 %v1950
      %v1952 = vpop.xlane.xlu0 %1951
      %v1953 = vsel %vm896, %v1771, -inf
      %1954 = vmax.xlane.f32.xlu0 %v1953
      %v1955 = vpop.xlane.xlu0 %1954
      %v1956 = vsel %vm896, %v1773, -inf
      %1957 = vmax.xlane.f32.xlu0 %v1956
      %v1958 = vpop.xlane.xlu0 %1957
      %v1959 = vsel %vm896, %v1776, -inf
      %1960 = vmax.xlane.f32.xlu0 %v1959
      %v1961 = vpop.xlane.xlu0 %1960
      %v1962 = vsel %vm896, %v1778, -inf
      %1963 = vmax.xlane.f32.xlu0 %v1962
      %v1964 = vpop.xlane.xlu0 %1963
      %v1965 = vsel %vm896, %v1781, -inf
      %1966 = vmax.xlane.f32.xlu0 %v1965
      %v1967 = vpop.xlane.xlu0 %1966
      %v1968 = vsel %vm896, %v1783, -inf
      %1969 = vmax.xlane.f32.xlu0 %v1968
      %v1970 = vpop.xlane.xlu0 %1969
      %v1971 = vsel %vm896, %v1835, -inf
      %1972 = vmax.xlane.f32.xlu0 %v1971
      %v1973 = vpop.xlane.xlu0 %1972
      %v1974 = vsel %vm896, %v1837, -inf
      %1975 = vmax.xlane.f32.xlu0 %v1974
      %v1976 = vpop.xlane.xlu0 %1975
      %v1977 = vsel %vm896, %v1840, -inf
      %1978 = vmax.xlane.f32.xlu0 %v1977
      %v1979 = vpop.xlane.xlu0 %1978
      %v1980 = vsel %vm896, %v1842, -inf
      %1981 = vmax.xlane.f32.xlu0 %v1980
      %v1982 = vpop.xlane.xlu0 %1981
      %v1983 = vsel %vm896, %v1845, -inf
      %1984 = vmax.xlane.f32.xlu0 %v1983
      %v1985 = vpop.xlane.xlu0 %1984
      %v1986 = vsel %vm896, %v1847, -inf
      %1987 = vmax.xlane.f32.xlu0 %v1986
      %v1988 = vpop.xlane.xlu0 %1987
      %v1989 = vsel %vm896, %v1850, -inf
      %1990 = vmax.xlane.f32.xlu0 %v1989
      %v1991 = vpop.xlane.xlu0 %1990
      %v1992 = vsel %vm896, %v1852, -inf
      %1993 = vmax.xlane.f32.xlu0 %v1992
      %v1994 = vpop.xlane.xlu0 %1993
      %v1995 = vsel %vm896, %v1904, -inf
      %1996 = vmax.xlane.f32.xlu0 %v1995
      %v1997 = vpop.xlane.xlu0 %1996
      %v1998 = vsel %vm896, %v1906, -inf
      %1999 = vmax.xlane.f32.xlu0 %v1998
      %v2000 = vpop.xlane.xlu0 %1999
      %v2001 = vsel %vm896, %v1909, -inf
      %2002 = vmax.xlane.f32.xlu0 %v2001
      %v2003 = vpop.xlane.xlu0 %2002
      %v2004 = vsel %vm896, %v1911, -inf
      %2005 = vmax.xlane.f32.xlu0 %v2004
      %v2006 = vpop.xlane.xlu0 %2005
      %v2007 = vsel %vm896, %v1914, -inf
      %2008 = vmax.xlane.f32.xlu0 %v2007
      %v2009 = vpop.xlane.xlu0 %2008
      %v2010 = vsel %vm896, %v1916, -inf
      %2011 = vmax.xlane.f32.xlu0 %v2010
      %v2012 = vpop.xlane.xlu0 %2011
      %v2013 = vsel %vm896, %v1919, -inf
      %2014 = vmax.xlane.f32.xlu0 %v2013
      %v2015 = vpop.xlane.xlu0 %2014
      %v2016 = vsel %vm896, %v1921, -inf
      %2017 = vmax.xlane.f32.xlu0 %v2016
      %v2018 = vpop.xlane.xlu0 %2017
      %v2019 = vsub.f32 %v1697, %v1925
      %v2020 = vsub.f32 %v1699, %v1928
      %v2021 = vsub.f32 %v1702, %v1931
      %v2022 = vsub.f32 %v1704, %v1934
      %v2023 = vsub.f32 %v1707, %v1937
      %v2024 = vsub.f32 %v1709, %v1940
      %v2025 = vsub.f32 %v1712, %v1943
      %v2026 = vsub.f32 %v1714, %v1946
      %v2027 = vsub.f32 %v1766, %v1949
      %v2028 = vsub.f32 %v1768, %v1952
      %v2029 = vsub.f32 %v1771, %v1955
      %v2030 = vsub.f32 %v1773, %v1958
      %v2031 = vsub.f32 %v1776, %v1961
      %v2032 = vsub.f32 %v1778, %v1964
      %v2033 = vsub.f32 %v1781, %v1967
      %v2034 = vsub.f32 %v1783, %v1970
      %v2035 = vsub.f32 %v1835, %v1973
      %v2036 = vsub.f32 %v1837, %v1976
      %v2037 = vsub.f32 %v1840, %v1979
      %v2038 = vsub.f32 %v1842, %v1982
      %v2039 = vsub.f32 %v1845, %v1985
      %v2040 = vsub.f32 %v1847, %v1988
      %v2041 = vsub.f32 %v1850, %v1991
      %v2042 = vsub.f32 %v1852, %v1994
      %v2043 = vsub.f32 %v1904, %v1997
      %v2044 = vsub.f32 %v1906, %v2000
      %v2045 = vsub.f32 %v1909, %v2003
      %v2046 = vsub.f32 %v1911, %v2006
      %v2047 = vsub.f32 %v1914, %v2009
      %v2048 = vsub.f32 %v1916, %v2012
      %v2049 = vsub.f32 %v1919, %v2015
      %v2050 = vsub.f32 %v1921, %v2018
      %v2051 = vmul.f32 %v2019, 1.442695
      %v2052 = vpow.pop %v2051
      %v2053 = vmul.f32 %v2020, 1.442695
      %v2054 = vpow.pop %v2053
      %v2055 = vmul.f32 %v2021, 1.442695
      %v2056 = vpow.pop %v2055
      %v2057 = vmul.f32 %v2022, 1.442695
      %v2058 = vpow.pop %v2057
      %v2059 = vmul.f32 %v2023, 1.442695
      %v2060 = vpow.pop %v2059
      %v2061 = vmul.f32 %v2024, 1.442695
      %v2062 = vpow.pop %v2061
      %v2063 = vmul.f32 %v2025, 1.442695
      %v2064 = vpow.pop %v2063
      %v2065 = vmul.f32 %v2026, 1.442695
      %v2066 = vpow.pop %v2065
      %v2067 = vmul.f32 %v2027, 1.442695
      %v2068 = vpow.pop %v2067
      %v2069 = vmul.f32 %v2028, 1.442695
      %v2070 = vpow.pop %v2069
      %v2071 = vmul.f32 %v2029, 1.442695
      %v2072 = vpow.pop %v2071
      %v2073 = vmul.f32 %v2030, 1.442695
      %v2074 = vpow.pop %v2073
      %v2075 = vmul.f32 %v2031, 1.442695
      %v2076 = vpow.pop %v2075
      %v2077 = vmul.f32 %v2032, 1.442695
      %v2078 = vpow.pop %v2077
      %v2079 = vmul.f32 %v2033, 1.442695
      %v2080 = vpow.pop %v2079
      %v2081 = vmul.f32 %v2034, 1.442695
      %v2082 = vpow.pop %v2081
      %v2083 = vmul.f32 %v2035, 1.442695
      %v2084 = vpow.pop %v2083
      %v2085 = vmul.f32 %v2036, 1.442695
      %v2086 = vpow.pop %v2085
      %v2087 = vmul.f32 %v2037, 1.442695
      %v2088 = vpow.pop %v2087
      %v2089 = vmul.f32 %v2038, 1.442695
      %v2090 = vpow.pop %v2089
      %v2091 = vmul.f32 %v2039, 1.442695
      %v2092 = vpow.pop %v2091
      %v2093 = vmul.f32 %v2040, 1.442695
      %v2094 = vpow.pop %v2093
      %v2095 = vmul.f32 %v2041, 1.442695
      %v2096 = vpow.pop %v2095
      %v2097 = vmul.f32 %v2042, 1.442695
      %v2098 = vpow.pop %v2097
      %v2099 = vmul.f32 %v2043, 1.442695
      %v2100 = vpow.pop %v2099
      %v2101 = vmul.f32 %v2044, 1.442695
      %v2102 = vpow.pop %v2101
      %v2103 = vmul.f32 %v2045, 1.442695
      %v2104 = vpow.pop %v2103
      %v2105 = vmul.f32 %v2046, 1.442695
      %v2106 = vpow.pop %v2105
      %v2107 = vmul.f32 %v2047, 1.442695
      %v2108 = vpow.pop %v2107
      %v2109 = vmul.f32 %v2048, 1.442695
      %v2110 = vpow.pop %v2109
      %v2111 = vmul.f32 %v2049, 1.442695
      %v2112 = vpow.pop %v2111
      %v2113 = vmul.f32 %v2050, 1.442695
      %v2114 = vpow.pop %v2113
      %v2115 = vsel %vm896, %v2052, 0.0
      %2116 = vadd.xlane.f32.xlu0 %v2115
      %v2117 = vpop.xlane.xlu0 %2116
      %v2118 = vsel %vm896, %v2054, 0.0
      %2119 = vadd.xlane.f32.xlu0 %v2118
      %v2120 = vpop.xlane.xlu0 %2119
      %v2121 = vsel %vm896, %v2056, 0.0
      %2122 = vadd.xlane.f32.xlu0 %v2121
      %v2123 = vpop.xlane.xlu0 %2122
      %v2124 = vsel %vm896, %v2058, 0.0
      %2125 = vadd.xlane.f32.xlu0 %v2124
      %v2126 = vpop.xlane.xlu0 %2125
      %v2127 = vsel %vm896, %v2060, 0.0
      %2128 = vadd.xlane.f32.xlu0 %v2127
      %v2129 = vpop.xlane.xlu0 %2128
      %v2130 = vsel %vm896, %v2062, 0.0
      %2131 = vadd.xlane.f32.xlu0 %v2130
      %v2132 = vpop.xlane.xlu0 %2131
      %v2133 = vsel %vm896, %v2064, 0.0
      %2134 = vadd.xlane.f32.xlu0 %v2133
      %v2135 = vpop.xlane.xlu0 %2134
      %v2136 = vsel %vm896, %v2066, 0.0
      %2137 = vadd.xlane.f32.xlu0 %v2136
      %v2138 = vpop.xlane.xlu0 %2137
      %v2139 = vsel %vm896, %v2068, 0.0
      %2140 = vadd.xlane.f32.xlu0 %v2139
      %v2141 = vpop.xlane.xlu0 %2140
      %v2142 = vsel %vm896, %v2070, 0.0
      %2143 = vadd.xlane.f32.xlu0 %v2142
      %v2144 = vpop.xlane.xlu0 %2143
      %v2145 = vsel %vm896, %v2072, 0.0
      %2146 = vadd.xlane.f32.xlu0 %v2145
      %v2147 = vpop.xlane.xlu0 %2146
      %v2148 = vsel %vm896, %v2074, 0.0
      %2149 = vadd.xlane.f32.xlu0 %v2148
      %v2150 = vpop.xlane.xlu0 %2149
      %v2151 = vsel %vm896, %v2076, 0.0
      %2152 = vadd.xlane.f32.xlu0 %v2151
      %v2153 = vpop.xlane.xlu0 %2152
      %v2154 = vsel %vm896, %v2078, 0.0
      %2155 = vadd.xlane.f32.xlu0 %v2154
      %v2156 = vpop.xlane.xlu0 %2155
      %v2157 = vsel %vm896, %v2080, 0.0
      %2158 = vadd.xlane.f32.xlu0 %v2157
      %v2159 = vpop.xlane.xlu0 %2158
      %v2160 = vsel %vm896, %v2082, 0.0
      %2161 = vadd.xlane.f32.xlu0 %v2160
      %v2162 = vpop.xlane.xlu0 %2161
      %v2163 = vsel %vm896, %v2084, 0.0
      %2164 = vadd.xlane.f32.xlu0 %v2163
      %v2165 = vpop.xlane.xlu0 %2164
      %v2166 = vsel %vm896, %v2086, 0.0
      %2167 = vadd.xlane.f32.xlu0 %v2166
      %v2168 = vpop.xlane.xlu0 %2167
      %v2169 = vsel %vm896, %v2088, 0.0
      %2170 = vadd.xlane.f32.xlu0 %v2169
      %v2171 = vpop.xlane.xlu0 %2170
      %v2172 = vsel %vm896, %v2090, 0.0
      %2173 = vadd.xlane.f32.xlu0 %v2172
      %v2174 = vpop.xlane.xlu0 %2173
      %v2175 = vsel %vm896, %v2092, 0.0
      %2176 = vadd.xlane.f32.xlu0 %v2175
      %v2177 = vpop.xlane.xlu0 %2176
      %v2178 = vsel %vm896, %v2094, 0.0
      %2179 = vadd.xlane.f32.xlu0 %v2178
      %v2180 = vpop.xlane.xlu0 %2179
      %v2181 = vsel %vm896, %v2096, 0.0
      %2182 = vadd.xlane.f32.xlu0 %v2181
      %v2183 = vpop.xlane.xlu0 %2182
      %v2184 = vsel %vm896, %v2098, 0.0
      %2185 = vadd.xlane.f32.xlu0 %v2184
      %v2186 = vpop.xlane.xlu0 %2185
      %v2187 = vsel %vm896, %v2100, 0.0
      %2188 = vadd.xlane.f32.xlu0 %v2187
      %v2189 = vpop.xlane.xlu0 %2188
      %v2190 = vsel %vm896, %v2102, 0.0
      %2191 = vadd.xlane.f32.xlu0 %v2190
      %v2192 = vpop.xlane.xlu0 %2191
      %v2193 = vsel %vm896, %v2104, 0.0
      %2194 = vadd.xlane.f32.xlu0 %v2193
      %v2195 = vpop.xlane.xlu0 %2194
      %v2196 = vsel %vm896, %v2106, 0.0
      %2197 = vadd.xlane.f32.xlu0 %v2196
      %v2198 = vpop.xlane.xlu0 %2197
      %v2199 = vsel %vm896, %v2108, 0.0
      %2200 = vadd.xlane.f32.xlu0 %v2199
      %v2201 = vpop.xlane.xlu0 %2200
      %v2202 = vsel %vm896, %v2110, 0.0
      %2203 = vadd.xlane.f32.xlu0 %v2202
      %v2204 = vpop.xlane.xlu0 %2203
      %v2205 = vsel %vm896, %v2112, 0.0
      %2206 = vadd.xlane.f32.xlu0 %v2205
      %v2207 = vpop.xlane.xlu0 %2206
      %v2208 = vsel %vm896, %v2114, 0.0
      %2209 = vadd.xlane.f32.xlu0 %v2208
      %v2210 = vpop.xlane.xlu0 %2209
      %v2211 = vrcp.pop %v2117
      %v2212 = vrcp.pop %v2120
      %v2213 = vrcp.pop %v2123
      %v2214 = vrcp.pop %v2126
      %v2215 = vrcp.pop %v2129
      %v2216 = vrcp.pop %v2132
      %v2217 = vrcp.pop %v2135
      %v2218 = vrcp.pop %v2138
      %v2219 = vrcp.pop %v2141
      %v2220 = vrcp.pop %v2144
      %v2221 = vrcp.pop %v2147
      %v2222 = vrcp.pop %v2150
      %v2223 = vrcp.pop %v2153
      %v2224 = vrcp.pop %v2156
      %v2225 = vrcp.pop %v2159
      %v2226 = vrcp.pop %v2162
      %v2227 = vrcp.pop %v2165
      %v2228 = vrcp.pop %v2168
      %v2229 = vrcp.pop %v2171
      %v2230 = vrcp.pop %v2174
      %v2231 = vrcp.pop %v2177
      %v2232 = vrcp.pop %v2180
      %v2233 = vrcp.pop %v2183
      %v2234 = vrcp.pop %v2186
      %v2235 = vrcp.pop %v2189
      %v2236 = vrcp.pop %v2192
      %v2237 = vrcp.pop %v2195
      %v2238 = vrcp.pop %v2198
      %v2239 = vrcp.pop %v2201
      %v2240 = vrcp.pop %v2204
      %v2241 = vrcp.pop %v2207
      %v2242 = vrcp.pop %v2210
      %v2243 = vmul.f32 %v2052, %v2211
      %v2244 = vmul.f32 %v2054, %v2212
      %v2245 = vmul.f32 %v2056, %v2213
      %v2246 = vmul.f32 %v2058, %v2214
      %v2247 = vmul.f32 %v2060, %v2215
      %v2248 = vmul.f32 %v2062, %v2216
      %v2249 = vmul.f32 %v2064, %v2217
      %v2250 = vmul.f32 %v2066, %v2218
      %v2251 = vmul.f32 %v2068, %v2219
      %v2252 = vmul.f32 %v2070, %v2220
      %v2253 = vmul.f32 %v2072, %v2221
      %v2254 = vmul.f32 %v2074, %v2222
      %v2255 = vmul.f32 %v2076, %v2223
      %v2256 = vmul.f32 %v2078, %v2224
      %v2257 = vmul.f32 %v2080, %v2225
      %v2258 = vmul.f32 %v2082, %v2226
      %v2259 = vmul.f32 %v2084, %v2227
      %v2260 = vmul.f32 %v2086, %v2228
      %v2261 = vmul.f32 %v2088, %v2229
      %v2262 = vmul.f32 %v2090, %v2230
      %v2263 = vmul.f32 %v2092, %v2231
      %v2264 = vmul.f32 %v2094, %v2232
      %v2265 = vmul.f32 %v2096, %v2233
      %v2266 = vmul.f32 %v2098, %v2234
      %v2267 = vmul.f32 %v2100, %v2235
      %v2268 = vmul.f32 %v2102, %v2236
      %v2269 = vmul.f32 %v2104, %v2237
      %v2270 = vmul.f32 %v2106, %v2238
      %v2271 = vmul.f32 %v2108, %v2239
      %v2272 = vmul.f32 %v2110, %v2240
      %v2273 = vmul.f32 %v2112, %v2241
      %v2274 = vmul.f32 %v2114, %v2242
      %v2275 = vpack.c.bf16 %v2243, %v2243
      %v2276 = vpack.c.bf16 %v2244, %v2244
      %v2277 = vpack.c.bf16 %v2245, %v2245
      %v2278 = vpack.c.bf16 %v2246, %v2246
      %v2279 = vpack.c.bf16 %v2247, %v2247
      %v2280 = vpack.c.bf16 %v2248, %v2248
      %v2281 = vpack.c.bf16 %v2249, %v2249
      %v2282 = vpack.c.bf16 %v2250, %v2250
      %v2283 = vpack.c.bf16 %v2251, %v2251
      %v2284 = vpack.c.bf16 %v2252, %v2252
      %v2285 = vpack.c.bf16 %v2253, %v2253
      %v2286 = vpack.c.bf16 %v2254, %v2254
      %v2287 = vpack.c.bf16 %v2255, %v2255
      %v2288 = vpack.c.bf16 %v2256, %v2256
      %v2289 = vpack.c.bf16 %v2257, %v2257
      %v2290 = vpack.c.bf16 %v2258, %v2258
      %v2291 = vpack.c.bf16 %v2259, %v2259
      %v2292 = vpack.c.bf16 %v2260, %v2260
      %v2293 = vpack.c.bf16 %v2261, %v2261
      %v2294 = vpack.c.bf16 %v2262, %v2262
      %v2295 = vpack.c.bf16 %v2263, %v2263
      %v2296 = vpack.c.bf16 %v2264, %v2264
      %v2297 = vpack.c.bf16 %v2265, %v2265
      %v2298 = vpack.c.bf16 %v2266, %v2266
      %v2299 = vpack.c.bf16 %v2267, %v2267
      %v2300 = vpack.c.bf16 %v2268, %v2268
      %v2301 = vpack.c.bf16 %v2269, %v2269
      %v2302 = vpack.c.bf16 %v2270, %v2270
      %v2303 = vpack.c.bf16 %v2271, %v2271
      %v2304 = vpack.c.bf16 %v2272, %v2272
      %v2305 = vpack.c.bf16 %v2273, %v2273
      %v2306 = vpack.c.bf16 %v2274, %v2274
      %v2315 = vunpack.c.l.b16 %v2275
      %v2316 = vunpack.c.l.b16 %v2276
      %v2317 = vunpack.c.l.b16 %v2277
      %v2318 = vunpack.c.l.b16 %v2278
      %v2319 = vunpack.c.l.b16 %v2279
      %v2320 = vunpack.c.l.b16 %v2280
      %v2321 = vunpack.c.l.b16 %v2281
      %v2322 = vunpack.c.l.b16 %v2282
      %v2323 = vpack.c.b16 %v2316, %v2315
      %v2324 = vpack.c.b16 %v2318, %v2317
      %v2325 = vpack.c.b16 %v2320, %v2319
      %v2326 = vpack.c.b16 %v2322, %v2321
      %2327 = vrot.lane.b32.xlu0 %v587, 56
      %v2328 = vpop.permute.xlu0 %2327
      %2329 = vrot.lane.b32.xlu0 %v588, 56
      %v2330 = vpop.permute.xlu0 %2329
      %2331 = vrot.lane.b32.xlu0 %v589, 56
      %v2332 = vpop.permute.xlu0 %2331
      %2333 = vrot.lane.b32.xlu0 %v590, 56
      %v2334 = vpop.permute.xlu0 %2333
      %v2340 = vsel %vm896, %v2323, 0
      %v2343 = vsel %vm896, %v2324, 0
      %v2346 = vsel %vm896, %v2325, 0
      %v2349 = vsel %vm896, %v2326, 0
      %2351 = vmatpush.bf16.msra.mxu0 0
      %2352 = vmatpush.bf16.msra.mxu0 0
      %2353 = vmatpush.bf16.msra.mxu0 0
      %2354 = vmatpush.bf16.msra.mxu0 0
      %2355 = vmatpush.bf16.msra.mxu0 %v2334
      %2356 = vmatpush.bf16.msra.mxu0 %v2332
      %2357 = vmatpush.bf16.msra.mxu0 %v2330
      %2358 = vmatpush.bf16.msra.mxu0 %v2328
      %2359 = vmatmul.bf16.gmra.mxu0 %v2340
      %v2360 = vpop.f32.mrf.mxu0
      %v2361 = vadd.f32 0.0, %v2360
      %v2362 = vpop.f32.mrf.mxu0
      %v2363 = vadd.f32 0.0, %v2362
      %2364 = vmatmul.bf16.gmra.mxu0 %v2343
      %v2365 = vpop.f32.mrf.mxu0
      %v2366 = vadd.f32 0.0, %v2365
      %v2367 = vpop.f32.mrf.mxu0
      %v2368 = vadd.f32 0.0, %v2367
      %2369 = vmatmul.bf16.gmra.mxu0 %v2346
      %v2370 = vpop.f32.mrf.mxu0
      %v2371 = vadd.f32 0.0, %v2370
      %v2372 = vpop.f32.mrf.mxu0
      %v2373 = vadd.f32 0.0, %v2372
      %2374 = vmatmul.bf16.gmra.mxu0 %v2349
      %v2375 = vpop.f32.mrf.mxu0
      %v2376 = vadd.f32 0.0, %v2375
      %v2377 = vpop.f32.mrf.mxu0
      %v2378 = vadd.f32 0.0, %v2377
      %2379 = vdwg.mxu0
      %v2388 = vunpack.c.l.b16 %v2283
      %v2389 = vunpack.c.l.b16 %v2284
      %v2390 = vunpack.c.l.b16 %v2285
      %v2391 = vunpack.c.l.b16 %v2286
      %v2392 = vunpack.c.l.b16 %v2287
      %v2393 = vunpack.c.l.b16 %v2288
      %v2394 = vunpack.c.l.b16 %v2289
      %v2395 = vunpack.c.l.b16 %v2290
      %v2396 = vpack.c.b16 %v2389, %v2388
      %v2397 = vpack.c.b16 %v2391, %v2390
      %v2398 = vpack.c.b16 %v2393, %v2392
      %v2399 = vpack.c.b16 %v2395, %v2394
      %2400 = vrot.lane.b32.xlu0 %v669, 56
      %v2401 = vpop.permute.xlu0 %2400
      %2402 = vrot.lane.b32.xlu0 %v670, 56
      %v2403 = vpop.permute.xlu0 %2402
      %2404 = vrot.lane.b32.xlu0 %v671, 56
      %v2405 = vpop.permute.xlu0 %2404
      %2406 = vrot.lane.b32.xlu0 %v672, 56
      %v2407 = vpop.permute.xlu0 %2406
      %v2413 = vsel %vm896, %v2396, 0
      %v2416 = vsel %vm896, %v2397, 0
      %v2419 = vsel %vm896, %v2398, 0
      %v2422 = vsel %vm896, %v2399, 0
      %2424 = vmatpush.bf16.msra.mxu0 0
      %2425 = vmatpush.bf16.msra.mxu0 0
      %2426 = vmatpush.bf16.msra.mxu0 0
      %2427 = vmatpush.bf16.msra.mxu0 0
      %2428 = vmatpush.bf16.msra.mxu0 %v2407
      %2429 = vmatpush.bf16.msra.mxu0 %v2405
      %2430 = vmatpush.bf16.msra.mxu0 %v2403
      %2431 = vmatpush.bf16.msra.mxu0 %v2401
      %2432 = vmatmul.bf16.gmra.mxu0 %v2413
      %v2433 = vpop.f32.mrf.mxu0
      %v2434 = vadd.f32 0.0, %v2433
      %v2435 = vpop.f32.mrf.mxu0
      %v2436 = vadd.f32 0.0, %v2435
      %2437 = vmatmul.bf16.gmra.mxu0 %v2416
      %v2438 = vpop.f32.mrf.mxu0
      %v2439 = vadd.f32 0.0, %v2438
      %v2440 = vpop.f32.mrf.mxu0
      %v2441 = vadd.f32 0.0, %v2440
      %2442 = vmatmul.bf16.gmra.mxu0 %v2419
      %v2443 = vpop.f32.mrf.mxu0
      %v2444 = vadd.f32 0.0, %v2443
      %v2445 = vpop.f32.mrf.mxu0
      %v2446 = vadd.f32 0.0, %v2445
      %2447 = vmatmul.bf16.gmra.mxu0 %v2422
      %v2448 = vpop.f32.mrf.mxu0
      %v2449 = vadd.f32 0.0, %v2448
      %v2450 = vpop.f32.mrf.mxu0
      %v2451 = vadd.f32 0.0, %v2450
      %2452 = vdwg.mxu0
      %v2461 = vunpack.c.l.b16 %v2291
      %v2462 = vunpack.c.l.b16 %v2292
      %v2463 = vunpack.c.l.b16 %v2293
      %v2464 = vunpack.c.l.b16 %v2294
      %v2465 = vunpack.c.l.b16 %v2295
      %v2466 = vunpack.c.l.b16 %v2296
      %v2467 = vunpack.c.l.b16 %v2297
      %v2468 = vunpack.c.l.b16 %v2298
      %v2469 = vpack.c.b16 %v2462, %v2461
      %v2470 = vpack.c.b16 %v2464, %v2463
      %v2471 = vpack.c.b16 %v2466, %v2465
      %v2472 = vpack.c.b16 %v2468, %v2467
      %2473 = vrot.lane.b32.xlu0 %v750, 56
      %v2474 = vpop.permute.xlu0 %2473
      %2475 = vrot.lane.b32.xlu0 %v751, 56
      %v2476 = vpop.permute.xlu0 %2475
      %2477 = vrot.lane.b32.xlu0 %v752, 56
      %v2478 = vpop.permute.xlu0 %2477
      %2479 = vrot.lane.b32.xlu0 %v753, 56
      %v2480 = vpop.permute.xlu0 %2479
      %v2486 = vsel %vm896, %v2469, 0
      %v2489 = vsel %vm896, %v2470, 0
      %v2492 = vsel %vm896, %v2471, 0
      %v2495 = vsel %vm896, %v2472, 0
      %2497 = vmatpush.bf16.msra.mxu0 0
      %2498 = vmatpush.bf16.msra.mxu0 0
      %2499 = vmatpush.bf16.msra.mxu0 0
      %2500 = vmatpush.bf16.msra.mxu0 0
      %2501 = vmatpush.bf16.msra.mxu0 %v2480
      %2502 = vmatpush.bf16.msra.mxu0 %v2478
      %2503 = vmatpush.bf16.msra.mxu0 %v2476
      %2504 = vmatpush.bf16.msra.mxu0 %v2474
      %2505 = vmatmul.bf16.gmra.mxu0 %v2486
      %v2506 = vpop.f32.mrf.mxu0
      %v2507 = vadd.f32 0.0, %v2506
      %v2508 = vpop.f32.mrf.mxu0
      %v2509 = vadd.f32 0.0, %v2508
      %2510 = vmatmul.bf16.gmra.mxu0 %v2489
      %v2511 = vpop.f32.mrf.mxu0
      %v2512 = vadd.f32 0.0, %v2511
      %v2513 = vpop.f32.mrf.mxu0
      %v2514 = vadd.f32 0.0, %v2513
      %2515 = vmatmul.bf16.gmra.mxu0 %v2492
      %v2516 = vpop.f32.mrf.mxu0
      %v2517 = vadd.f32 0.0, %v2516
      %v2518 = vpop.f32.mrf.mxu0
      %v2519 = vadd.f32 0.0, %v2518
      %2520 = vmatmul.bf16.gmra.mxu0 %v2495
      %v2521 = vpop.f32.mrf.mxu0
      %v2522 = vadd.f32 0.0, %v2521
      %v2523 = vpop.f32.mrf.mxu0
      %v2524 = vadd.f32 0.0, %v2523
      %2525 = vdwg.mxu0
      %v2534 = vunpack.c.l.b16 %v2299
      %v2535 = vunpack.c.l.b16 %v2300
      %v2536 = vunpack.c.l.b16 %v2301
      %v2537 = vunpack.c.l.b16 %v2302
      %v2538 = vunpack.c.l.b16 %v2303
      %v2539 = vunpack.c.l.b16 %v2304
      %v2540 = vunpack.c.l.b16 %v2305
      %v2541 = vunpack.c.l.b16 %v2306
      %v2542 = vpack.c.b16 %v2535, %v2534
      %v2543 = vpack.c.b16 %v2537, %v2536
      %v2544 = vpack.c.b16 %v2539, %v2538
      %v2545 = vpack.c.b16 %v2541, %v2540
      %2546 = vrot.lane.b32.xlu0 %v831, 56
      %v2547 = vpop.permute.xlu0 %2546
      %2548 = vrot.lane.b32.xlu0 %v832, 56
      %v2549 = vpop.permute.xlu0 %2548
      %2550 = vrot.lane.b32.xlu0 %v833, 56
      %v2551 = vpop.permute.xlu0 %2550
      %2552 = vrot.lane.b32.xlu0 %v834, 56
      %v2553 = vpop.permute.xlu0 %2552
      %v2559 = vsel %vm896, %v2542, 0
      %v2562 = vsel %vm896, %v2543, 0
      %v2565 = vsel %vm896, %v2544, 0
      %v2568 = vsel %vm896, %v2545, 0
      %2570 = vmatpush.bf16.msra.mxu0 0
      %2571 = vmatpush.bf16.msra.mxu0 0
      %2572 = vmatpush.bf16.msra.mxu0 0
      %2573 = vmatpush.bf16.msra.mxu0 0
      %2574 = vmatpush.bf16.msra.mxu0 %v2553
      %2575 = vmatpush.bf16.msra.mxu0 %v2551
      %2576 = vmatpush.bf16.msra.mxu0 %v2549
      %2577 = vmatpush.bf16.msra.mxu0 %v2547
      %2578 = vmatmul.bf16.gmra.mxu0 %v2559
      %v2579 = vpop.f32.mrf.mxu0
      %v2580 = vadd.f32 0.0, %v2579
      %v2581 = vpop.f32.mrf.mxu0
      %v2582 = vadd.f32 0.0, %v2581
      %2583 = vmatmul.bf16.gmra.mxu0 %v2562
      %v2584 = vpop.f32.mrf.mxu0
      %v2585 = vadd.f32 0.0, %v2584
      %v2586 = vpop.f32.mrf.mxu0
      %v2587 = vadd.f32 0.0, %v2586
      %2588 = vmatmul.bf16.gmra.mxu0 %v2565
      %v2589 = vpop.f32.mrf.mxu0
      %v2590 = vadd.f32 0.0, %v2589
      %v2591 = vpop.f32.mrf.mxu0
      %v2592 = vadd.f32 0.0, %v2591
      %2593 = vmatmul.bf16.gmra.mxu0 %v2568
      %v2594 = vpop.f32.mrf.mxu0
      %v2595 = vadd.f32 0.0, %v2594
      %v2596 = vpop.f32.mrf.mxu0
      %v2597 = vadd.f32 0.0, %v2596
      %2598 = vdwg.mxu0
      %v2599 = vpack.c.bf16 %v2361, %v2361
      %v2600 = vpack.c.bf16 %v2363, %v2363
      %v2601 = vpack.c.bf16 %v2366, %v2366
      %v2602 = vpack.c.bf16 %v2368, %v2368
      %v2603 = vpack.c.bf16 %v2371, %v2371
      %v2604 = vpack.c.bf16 %v2373, %v2373
      %v2605 = vpack.c.bf16 %v2376, %v2376
      %v2606 = vpack.c.bf16 %v2378, %v2378
      %v2607 = vpack.c.bf16 %v2434, %v2434
      %v2608 = vpack.c.bf16 %v2436, %v2436
      %v2609 = vpack.c.bf16 %v2439, %v2439
      %v2610 = vpack.c.bf16 %v2441, %v2441
      %v2611 = vpack.c.bf16 %v2444, %v2444
      %v2612 = vpack.c.bf16 %v2446, %v2446
      %v2613 = vpack.c.bf16 %v2449, %v2449
      %v2614 = vpack.c.bf16 %v2451, %v2451
      %v2615 = vpack.c.bf16 %v2507, %v2507
      %v2616 = vpack.c.bf16 %v2509, %v2509
      %v2617 = vpack.c.bf16 %v2512, %v2512
      %v2618 = vpack.c.bf16 %v2514, %v2514
      %v2619 = vpack.c.bf16 %v2517, %v2517
      %v2620 = vpack.c.bf16 %v2519, %v2519
      %v2621 = vpack.c.bf16 %v2522, %v2522
      %v2622 = vpack.c.bf16 %v2524, %v2524
      %v2623 = vpack.c.bf16 %v2580, %v2580
      %v2624 = vpack.c.bf16 %v2582, %v2582
      %v2625 = vpack.c.bf16 %v2585, %v2585
      %v2626 = vpack.c.bf16 %v2587, %v2587
      %v2627 = vpack.c.bf16 %v2590, %v2590
      %v2628 = vpack.c.bf16 %v2592, %v2592
      %v2629 = vpack.c.bf16 %v2595, %v2595
      %v2630 = vpack.c.bf16 %v2597, %v2597
      %2663 = vrot.lane.b32.xlu0 %v2599, 8
      %v2664 = vpop.permute.xlu0 %2663
      %2665 = vrot.lane.b32.xlu0 %v2600, 8
      %v2666 = vpop.permute.xlu0 %2665
      %2667 = vrot.lane.b32.xlu0 %v2601, 8
      %v2668 = vpop.permute.xlu0 %2667
      %2669 = vrot.lane.b32.xlu0 %v2602, 8
      %v2670 = vpop.permute.xlu0 %2669
      %2671 = vrot.lane.b32.xlu0 %v2603, 8
      %v2672 = vpop.permute.xlu0 %2671
      %2673 = vrot.lane.b32.xlu0 %v2604, 8
      %v2674 = vpop.permute.xlu0 %2673
      %2675 = vrot.lane.b32.xlu0 %v2605, 8
      %v2676 = vpop.permute.xlu0 %2675
      %2677 = vrot.lane.b32.xlu0 %v2606, 8
      %v2678 = vpop.permute.xlu0 %2677
      %2679 = vrot.lane.b32.xlu0 %v2607, 8
      %v2680 = vpop.permute.xlu0 %2679
      %2681 = vrot.lane.b32.xlu0 %v2608, 8
      %v2682 = vpop.permute.xlu0 %2681
      %2683 = vrot.lane.b32.xlu0 %v2609, 8
      %v2684 = vpop.permute.xlu0 %2683
      %2685 = vrot.lane.b32.xlu0 %v2610, 8
      %v2686 = vpop.permute.xlu0 %2685
      %2687 = vrot.lane.b32.xlu0 %v2611, 8
      %v2688 = vpop.permute.xlu0 %2687
      %2689 = vrot.lane.b32.xlu0 %v2612, 8
      %v2690 = vpop.permute.xlu0 %2689
      %2691 = vrot.lane.b32.xlu0 %v2613, 8
      %v2692 = vpop.permute.xlu0 %2691
      %2693 = vrot.lane.b32.xlu0 %v2614, 8
      %v2694 = vpop.permute.xlu0 %2693
      %2695 = vrot.lane.b32.xlu0 %v2615, 8
      %v2696 = vpop.permute.xlu0 %2695
      %2697 = vrot.lane.b32.xlu0 %v2616, 8
      %v2698 = vpop.permute.xlu0 %2697
      %2699 = vrot.lane.b32.xlu0 %v2617, 8
      %v2700 = vpop.permute.xlu0 %2699
      %2701 = vrot.lane.b32.xlu0 %v2618, 8
      %v2702 = vpop.permute.xlu0 %2701
      %2703 = vrot.lane.b32.xlu0 %v2619, 8
      %v2704 = vpop.permute.xlu0 %2703
      %2705 = vrot.lane.b32.xlu0 %v2620, 8
      %v2706 = vpop.permute.xlu0 %2705
      %2707 = vrot.lane.b32.xlu0 %v2621, 8
      %v2708 = vpop.permute.xlu0 %2707
      %2709 = vrot.lane.b32.xlu0 %v2622, 8
      %v2710 = vpop.permute.xlu0 %2709
      %2711 = vrot.lane.b32.xlu0 %v2623, 8
      %v2712 = vpop.permute.xlu0 %2711
      %2713 = vrot.lane.b32.xlu0 %v2624, 8
      %v2714 = vpop.permute.xlu0 %2713
      %2715 = vrot.lane.b32.xlu0 %v2625, 8
      %v2716 = vpop.permute.xlu0 %2715
      %2717 = vrot.lane.b32.xlu0 %v2626, 8
      %v2718 = vpop.permute.xlu0 %2717
      %2719 = vrot.lane.b32.xlu0 %v2627, 8
      %v2720 = vpop.permute.xlu0 %2719
      %2721 = vrot.lane.b32.xlu0 %v2628, 8
      %v2722 = vpop.permute.xlu0 %2721
      %2723 = vrot.lane.b32.xlu0 %v2629, 8
      %v2724 = vpop.permute.xlu0 %2723
      %2725 = vrot.lane.b32.xlu0 %v2630, 8
      %v2726 = vpop.permute.xlu0 %2725
      %vm2759 = vcmask 126016
      %2760 = vst.msk [vmem:[#allocation2] sm:$0xf] %vm2759, %v2664
      %2761 = vst.msk [vmem:[#allocation2 + $0x4] sm:$0xf] %vm2759, %v2666
      %2762 = vst.msk [vmem:[#allocation2 + $0x8] sm:$0xf] %vm2759, %v2668
      %2763 = vst.msk [vmem:[#allocation2 + $0xc] sm:$0xf] %vm2759, %v2670
      %2764 = vst.msk [vmem:[#allocation2 + $0x10] sm:$0xf] %vm2759, %v2672
      %2765 = vst.msk [vmem:[#allocation2 + $0x14] sm:$0xf] %vm2759, %v2674
      %2766 = vst.msk [vmem:[#allocation2 + $0x18] sm:$0xf] %vm2759, %v2676
      %2767 = vst.msk [vmem:[#allocation2 + $0x1c] sm:$0xf] %vm2759, %v2678
      %2768 = vst.msk [vmem:[#allocation2 + $0x20] sm:$0xf] %vm2759, %v2680
      %2769 = vst.msk [vmem:[#allocation2 + $0x24] sm:$0xf] %vm2759, %v2682
      %2770 = vst.msk [vmem:[#allocation2 + $0x28] sm:$0xf] %vm2759, %v2684
      %2771 = vst.msk [vmem:[#allocation2 + $0x2c] sm:$0xf] %vm2759, %v2686
      %2772 = vst.msk [vmem:[#allocation2 + $0x30] sm:$0xf] %vm2759, %v2688
      %2773 = vst.msk [vmem:[#allocation2 + $0x34] sm:$0xf] %vm2759, %v2690
      %2774 = vst.msk [vmem:[#allocation2 + $0x38] sm:$0xf] %vm2759, %v2692
      %2775 = vst.msk [vmem:[#allocation2 + $0x3c] sm:$0xf] %vm2759, %v2694
      %2776 = vst.msk [vmem:[#allocation2 + $0x40] sm:$0xf] %vm2759, %v2696
      %2777 = vst.msk [vmem:[#allocation2 + $0x44] sm:$0xf] %vm2759, %v2698
      %2778 = vst.msk [vmem:[#allocation2 + $0x48] sm:$0xf] %vm2759, %v2700
      %2779 = vst.msk [vmem:[#allocation2 + $0x4c] sm:$0xf] %vm2759, %v2702
      %2780 = vst.msk [vmem:[#allocation2 + $0x50] sm:$0xf] %vm2759, %v2704
      %2781 = vst.msk [vmem:[#allocation2 + $0x54] sm:$0xf] %vm2759, %v2706
      %2782 = vst.msk [vmem:[#allocation2 + $0x58] sm:$0xf] %vm2759, %v2708
      %2783 = vst.msk [vmem:[#allocation2 + $0x5c] sm:$0xf] %vm2759, %v2710
      %2784 = vst.msk [vmem:[#allocation2 + $0x60] sm:$0xf] %vm2759, %v2712
      %2785 = vst.msk [vmem:[#allocation2 + $0x64] sm:$0xf] %vm2759, %v2714
      %2786 = vst.msk [vmem:[#allocation2 + $0x68] sm:$0xf] %vm2759, %v2716
      %2787 = vst.msk [vmem:[#allocation2 + $0x6c] sm:$0xf] %vm2759, %v2718
      %2788 = vst.msk [vmem:[#allocation2 + $0x70] sm:$0xf] %vm2759, %v2720
      %2789 = vst.msk [vmem:[#allocation2 + $0x74] sm:$0xf] %vm2759, %v2722
      %2790 = vst.msk [vmem:[#allocation2 + $0x78] sm:$0xf] %vm2759, %v2724
      %2791 = vst.msk [vmem:[#allocation2 + $0x7c] sm:$0xf] %vm2759, %v2726
      %s2792 = scalar_lea.vmem %s3, 128
      %v2793 = vld [vmem:[%s2792] sm:$0xff]
      %v2794 = vld [vmem:[%s2792 + $0x8] sm:$0xff]
      %v2795 = vld [vmem:[%s2792 + $0x10] sm:$0xff]
      %v2796 = vld [vmem:[%s2792 + $0x18] sm:$0xff]
      %v2797 = vld [vmem:[%s2792 + $0x20] sm:$0xff]
      %v2798 = vld [vmem:[%s2792 + $0x28] sm:$0xff]
      %v2799 = vld [vmem:[%s2792 + $0x30] sm:$0xff]
      %v2800 = vld [vmem:[%s2792 + $0x38] sm:$0xff]
      %2801 = vrot.lane.b32.xlu0 %v587, 112
      %v2802 = vpop.permute.xlu0 %2801
      %2803 = vrot.lane.b32.xlu0 %v588, 112
      %v2804 = vpop.permute.xlu0 %2803
      %2805 = vrot.lane.b32.xlu0 %v589, 112
      %v2806 = vpop.permute.xlu0 %2805
      %2807 = vrot.lane.b32.xlu0 %v590, 112
      %v2808 = vpop.permute.xlu0 %2807
      %2809 = vrot.lane.b32.xlu0 %v587, 80
      %v2810 = vpop.permute.xlu0 %2809
      %2811 = vrot.lane.b32.xlu0 %v588, 80
      %v2812 = vpop.permute.xlu0 %2811
      %2813 = vrot.lane.b32.xlu0 %v589, 80
      %v2814 = vpop.permute.xlu0 %2813
      %2815 = vrot.lane.b32.xlu0 %v590, 80
      %v2816 = vpop.permute.xlu0 %2815
      %v2818 = vsel %vm599, %v2802, 0
      %v2821 = vsel %vm599, %v2804, 0
      %v2824 = vsel %vm599, %v2806, 0
      %v2827 = vsel %vm599, %v2808, 0
      %v2830 = vsel %vm599, %v2810, 0
      %v2833 = vsel %vm599, %v2812, 0
      %v2836 = vsel %vm599, %v2814, 0
      %v2839 = vsel %vm599, %v2816, 0
      %2841 = vmatpush.bf16.xpose.msra.mxu0 0
      %2842 = vmatpush.bf16.xpose.msra.mxu0 0
      %2843 = vmatpush.bf16.xpose.msra.mxu0 0
      %2844 = vmatpush.bf16.xpose.msra.mxu0 0
      %2845 = vmatpush.bf16.xpose.msra.mxu0 %v2839
      %2846 = vmatpush.bf16.xpose.msra.mxu0 %v2836
      %2847 = vmatpush.bf16.xpose.msra.mxu0 %v2833
      %2848 = vmatpush.bf16.xpose.msra.mxu0 %v2830
      %2849 = vmatmul.bf16.gmra.mxu0 %v2818
      %v2850 = vpop.f32.mrf.mxu0
      %v2851 = vadd.f32 %v2793, %v2850
      %v2852 = vpop.f32.mrf.mxu0
      %v2853 = vadd.f32 %v2794, %v2852
      %2854 = vmatmul.bf16.gmra.mxu0 %v2821
      %v2855 = vpop.f32.mrf.mxu0
      %v2856 = vadd.f32 %v2795, %v2855
      %v2857 = vpop.f32.mrf.mxu0
      %v2858 = vadd.f32 %v2796, %v2857
      %2859 = vmatmul.bf16.gmra.mxu0 %v2824
      %v2860 = vpop.f32.mrf.mxu0
      %v2861 = vadd.f32 %v2797, %v2860
      %v2862 = vpop.f32.mrf.mxu0
      %v2863 = vadd.f32 %v2798, %v2862
      %2864 = vmatmul.bf16.gmra.mxu0 %v2827
      %v2865 = vpop.f32.mrf.mxu0
      %v2866 = vadd.f32 %v2799, %v2865
      %v2867 = vpop.f32.mrf.mxu0
      %v2868 = vadd.f32 %v2800, %v2867
      %2869 = vdwg.mxu0
      %2870 = vrot.lane.b32.xlu0 %v669, 112
      %v2871 = vpop.permute.xlu0 %2870
      %2872 = vrot.lane.b32.xlu0 %v670, 112
      %v2873 = vpop.permute.xlu0 %2872
      %2874 = vrot.lane.b32.xlu0 %v671, 112
      %v2875 = vpop.permute.xlu0 %2874
      %2876 = vrot.lane.b32.xlu0 %v672, 112
      %v2877 = vpop.permute.xlu0 %2876
      %2878 = vrot.lane.b32.xlu0 %v669, 80
      %v2879 = vpop.permute.xlu0 %2878
      %2880 = vrot.lane.b32.xlu0 %v670, 80
      %v2881 = vpop.permute.xlu0 %2880
      %2882 = vrot.lane.b32.xlu0 %v671, 80
      %v2883 = vpop.permute.xlu0 %2882
      %2884 = vrot.lane.b32.xlu0 %v672, 80
      %v2885 = vpop.permute.xlu0 %2884
      %v2887 = vsel %vm599, %v2871, 0
      %v2890 = vsel %vm599, %v2873, 0
      %v2893 = vsel %vm599, %v2875, 0
      %v2896 = vsel %vm599, %v2877, 0
      %v2899 = vsel %vm599, %v2879, 0
      %v2902 = vsel %vm599, %v2881, 0
      %v2905 = vsel %vm599, %v2883, 0
      %v2908 = vsel %vm599, %v2885, 0
      %2910 = vmatpush.bf16.xpose.msra.mxu0 0
      %2911 = vmatpush.bf16.xpose.msra.mxu0 0
      %2912 = vmatpush.bf16.xpose.msra.mxu0 0
      %2913 = vmatpush.bf16.xpose.msra.mxu0 0
      %2914 = vmatpush.bf16.xpose.msra.mxu0 %v2908
      %2915 = vmatpush.bf16.xpose.msra.mxu0 %v2905
      %2916 = vmatpush.bf16.xpose.msra.mxu0 %v2902
      %2917 = vmatpush.bf16.xpose.msra.mxu0 %v2899
      %2918 = vmatmul.bf16.gmra.mxu0 %v2887
      %v2919 = vpop.f32.mrf.mxu0
      %v2920 = vadd.f32 %v2793, %v2919
      %v2921 = vpop.f32.mrf.mxu0
      %v2922 = vadd.f32 %v2794, %v2921
      %2923 = vmatmul.bf16.gmra.mxu0 %v2890
      %v2924 = vpop.f32.mrf.mxu0
      %v2925 = vadd.f32 %v2795, %v2924
      %v2926 = vpop.f32.mrf.mxu0
      %v2927 = vadd.f32 %v2796, %v2926
      %2928 = vmatmul.bf16.gmra.mxu0 %v2893
      %v2929 = vpop.f32.mrf.mxu0
      %v2930 = vadd.f32 %v2797, %v2929
      %v2931 = vpop.f32.mrf.mxu0
      %v2932 = vadd.f32 %v2798, %v2931
      %2933 = vmatmul.bf16.gmra.mxu0 %v2896
      %v2934 = vpop.f32.mrf.mxu0
      %v2935 = vadd.f32 %v2799, %v2934
      %v2936 = vpop.f32.mrf.mxu0
      %v2937 = vadd.f32 %v2800, %v2936
      %2938 = vdwg.mxu0
      %2939 = vrot.lane.b32.xlu0 %v750, 112
      %v2940 = vpop.permute.xlu0 %2939
      %2941 = vrot.lane.b32.xlu0 %v751, 112
      %v2942 = vpop.permute.xlu0 %2941
      %2943 = vrot.lane.b32.xlu0 %v752, 112
      %v2944 = vpop.permute.xlu0 %2943
      %2945 = vrot.lane.b32.xlu0 %v753, 112
      %v2946 = vpop.permute.xlu0 %2945
      %2947 = vrot.lane.b32.xlu0 %v750, 80
      %v2948 = vpop.permute.xlu0 %2947
      %2949 = vrot.lane.b32.xlu0 %v751, 80
      %v2950 = vpop.permute.xlu0 %2949
      %2951 = vrot.lane.b32.xlu0 %v752, 80
      %v2952 = vpop.permute.xlu0 %2951
      %2953 = vrot.lane.b32.xlu0 %v753, 80
      %v2954 = vpop.permute.xlu0 %2953
      %v2956 = vsel %vm599, %v2940, 0
      %v2959 = vsel %vm599, %v2942, 0
      %v2962 = vsel %vm599, %v2944, 0
      %v2965 = vsel %vm599, %v2946, 0
      %v2968 = vsel %vm599, %v2948, 0
      %v2971 = vsel %vm599, %v2950, 0
      %v2974 = vsel %vm599, %v2952, 0
      %v2977 = vsel %vm599, %v2954, 0
      %2979 = vmatpush.bf16.xpose.msra.mxu0 0
      %2980 = vmatpush.bf16.xpose.msra.mxu0 0
      %2981 = vmatpush.bf16.xpose.msra.mxu0 0
      %2982 = vmatpush.bf16.xpose.msra.mxu0 0
      %2983 = vmatpush.bf16.xpose.msra.mxu0 %v2977
      %2984 = vmatpush.bf16.xpose.msra.mxu0 %v2974
      %2985 = vmatpush.bf16.xpose.msra.mxu0 %v2971
      %2986 = vmatpush.bf16.xpose.msra.mxu0 %v2968
      %2987 = vmatmul.bf16.gmra.mxu0 %v2956
      %v2988 = vpop.f32.mrf.mxu0
      %v2989 = vadd.f32 %v2793, %v2988
      %v2990 = vpop.f32.mrf.mxu0
      %v2991 = vadd.f32 %v2794, %v2990
      %2992 = vmatmul.bf16.gmra.mxu0 %v2959
      %v2993 = vpop.f32.mrf.mxu0
      %v2994 = vadd.f32 %v2795, %v2993
      %v2995 = vpop.f32.mrf.mxu0
      %v2996 = vadd.f32 %v2796, %v2995
      %2997 = vmatmul.bf16.gmra.mxu0 %v2962
      %v2998 = vpop.f32.mrf.mxu0
      %v2999 = vadd.f32 %v2797, %v2998
      %v3000 = vpop.f32.mrf.mxu0
      %v3001 = vadd.f32 %v2798, %v3000
      %3002 = vmatmul.bf16.gmra.mxu0 %v2965
      %v3003 = vpop.f32.mrf.mxu0
      %v3004 = vadd.f32 %v2799, %v3003
      %v3005 = vpop.f32.mrf.mxu0
      %v3006 = vadd.f32 %v2800, %v3005
      %3007 = vdwg.mxu0
      %3008 = vrot.lane.b32.xlu0 %v831, 112
      %v3009 = vpop.permute.xlu0 %3008
      %3010 = vrot.lane.b32.xlu0 %v832, 112
      %v3011 = vpop.permute.xlu0 %3010
      %3012 = vrot.lane.b32.xlu0 %v833, 112
      %v3013 = vpop.permute.xlu0 %3012
      %3014 = vrot.lane.b32.xlu0 %v834, 112
      %v3015 = vpop.permute.xlu0 %3014
      %3016 = vrot.lane.b32.xlu0 %v831, 80
      %v3017 = vpop.permute.xlu0 %3016
      %3018 = vrot.lane.b32.xlu0 %v832, 80
      %v3019 = vpop.permute.xlu0 %3018
      %3020 = vrot.lane.b32.xlu0 %v833, 80
      %v3021 = vpop.permute.xlu0 %3020
      %3022 = vrot.lane.b32.xlu0 %v834, 80
      %v3023 = vpop.permute.xlu0 %3022
      %v3025 = vsel %vm599, %v3009, 0
      %v3028 = vsel %vm599, %v3011, 0
      %v3031 = vsel %vm599, %v3013, 0
      %v3034 = vsel %vm599, %v3015, 0
      %v3037 = vsel %vm599, %v3017, 0
      %v3040 = vsel %vm599, %v3019, 0
      %v3043 = vsel %vm599, %v3021, 0
      %v3046 = vsel %vm599, %v3023, 0
      %3048 = vmatpush.bf16.xpose.msra.mxu0 0
      %3049 = vmatpush.bf16.xpose.msra.mxu0 0
      %3050 = vmatpush.bf16.xpose.msra.mxu0 0
      %3051 = vmatpush.bf16.xpose.msra.mxu0 0
      %3052 = vmatpush.bf16.xpose.msra.mxu0 %v3046
      %3053 = vmatpush.bf16.xpose.msra.mxu0 %v3043
      %3054 = vmatpush.bf16.xpose.msra.mxu0 %v3040
      %3055 = vmatpush.bf16.xpose.msra.mxu0 %v3037
      %3056 = vmatmul.bf16.gmra.mxu0 %v3025
      %v3057 = vpop.f32.mrf.mxu0
      %v3058 = vadd.f32 %v2793, %v3057
      %v3059 = vpop.f32.mrf.mxu0
      %v3060 = vadd.f32 %v2794, %v3059
      %3061 = vmatmul.bf16.gmra.mxu0 %v3028
      %v3062 = vpop.f32.mrf.mxu0
      %v3063 = vadd.f32 %v2795, %v3062
      %v3064 = vpop.f32.mrf.mxu0
      %v3065 = vadd.f32 %v2796, %v3064
      %3066 = vmatmul.bf16.gmra.mxu0 %v3031
      %v3067 = vpop.f32.mrf.mxu0
      %v3068 = vadd.f32 %v2797, %v3067
      %v3069 = vpop.f32.mrf.mxu0
      %v3070 = vadd.f32 %v2798, %v3069
      %3071 = vmatmul.bf16.gmra.mxu0 %v3034
      %v3072 = vpop.f32.mrf.mxu0
      %v3073 = vadd.f32 %v2799, %v3072
      %v3074 = vpop.f32.mrf.mxu0
      %v3075 = vadd.f32 %v2800, %v3074
      %3076 = vdwg.mxu0
      %v3077 = vsel %vm896, %v2851, -inf
      %3078 = vmax.xlane.f32.xlu0 %v3077
      %v3079 = vpop.xlane.xlu0 %3078
      %v3080 = vsel %vm896, %v2853, -inf
      %3081 = vmax.xlane.f32.xlu0 %v3080
      %v3082 = vpop.xlane.xlu0 %3081
      %v3083 = vsel %vm896, %v2856, -inf
      %3084 = vmax.xlane.f32.xlu0 %v3083
      %v3085 = vpop.xlane.xlu0 %3084
      %v3086 = vsel %vm896, %v2858, -inf
      %3087 = vmax.xlane.f32.xlu0 %v3086
      %v3088 = vpop.xlane.xlu0 %3087
      %v3089 = vsel %vm896, %v2861, -inf
      %3090 = vmax.xlane.f32.xlu0 %v3089
      %v3091 = vpop.xlane.xlu0 %3090
      %v3092 = vsel %vm896, %v2863, -inf
      %3093 = vmax.xlane.f32.xlu0 %v3092
      %v3094 = vpop.xlane.xlu0 %3093
      %v3095 = vsel %vm896, %v2866, -inf
      %3096 = vmax.xlane.f32.xlu0 %v3095
      %v3097 = vpop.xlane.xlu0 %3096
      %v3098 = vsel %vm896, %v2868, -inf
      %3099 = vmax.xlane.f32.xlu0 %v3098
      %v3100 = vpop.xlane.xlu0 %3099
      %v3101 = vsel %vm896, %v2920, -inf
      %3102 = vmax.xlane.f32.xlu0 %v3101
      %v3103 = vpop.xlane.xlu0 %3102
      %v3104 = vsel %vm896, %v2922, -inf
      %3105 = vmax.xlane.f32.xlu0 %v3104
      %v3106 = vpop.xlane.xlu0 %3105
      %v3107 = vsel %vm896, %v2925, -inf
      %3108 = vmax.xlane.f32.xlu0 %v3107
      %v3109 = vpop.xlane.xlu0 %3108
      %v3110 = vsel %vm896, %v2927, -inf
      %3111 = vmax.xlane.f32.xlu0 %v3110
      %v3112 = vpop.xlane.xlu0 %3111
      %v3113 = vsel %vm896, %v2930, -inf
      %3114 = vmax.xlane.f32.xlu0 %v3113
      %v3115 = vpop.xlane.xlu0 %3114
      %v3116 = vsel %vm896, %v2932, -inf
      %3117 = vmax.xlane.f32.xlu0 %v3116
      %v3118 = vpop.xlane.xlu0 %3117
      %v3119 = vsel %vm896, %v2935, -inf
      %3120 = vmax.xlane.f32.xlu0 %v3119
      %v3121 = vpop.xlane.xlu0 %3120
      %v3122 = vsel %vm896, %v2937, -inf
      %3123 = vmax.xlane.f32.xlu0 %v3122
      %v3124 = vpop.xlane.xlu0 %3123
      %v3125 = vsel %vm896, %v2989, -inf
      %3126 = vmax.xlane.f32.xlu0 %v3125
      %v3127 = vpop.xlane.xlu0 %3126
      %v3128 = vsel %vm896, %v2991, -inf
      %3129 = vmax.xlane.f32.xlu0 %v3128
      %v3130 = vpop.xlane.xlu0 %3129
      %v3131 = vsel %vm896, %v2994, -inf
      %3132 = vmax.xlane.f32.xlu0 %v3131
      %v3133 = vpop.xlane.xlu0 %3132
      %v3134 = vsel %vm896, %v2996, -inf
      %3135 = vmax.xlane.f32.xlu0 %v3134
      %v3136 = vpop.xlane.xlu0 %3135
      %v3137 = vsel %vm896, %v2999, -inf
      %3138 = vmax.xlane.f32.xlu0 %v3137
      %v3139 = vpop.xlane.xlu0 %3138
      %v3140 = vsel %vm896, %v3001, -inf
      %3141 = vmax.xlane.f32.xlu0 %v3140
      %v3142 = vpop.xlane.xlu0 %3141
      %v3143 = vsel %vm896, %v3004, -inf
      %3144 = vmax.xlane.f32.xlu0 %v3143
      %v3145 = vpop.xlane.xlu0 %3144
      %v3146 = vsel %vm896, %v3006, -inf
      %3147 = vmax.xlane.f32.xlu0 %v3146
      %v3148 = vpop.xlane.xlu0 %3147
      %v3149 = vsel %vm896, %v3058, -inf
      %3150 = vmax.xlane.f32.xlu0 %v3149
      %v3151 = vpop.xlane.xlu0 %3150
      %v3152 = vsel %vm896, %v3060, -inf
      %3153 = vmax.xlane.f32.xlu0 %v3152
      %v3154 = vpop.xlane.xlu0 %3153
      %v3155 = vsel %vm896, %v3063, -inf
      %3156 = vmax.xlane.f32.xlu0 %v3155
      %v3157 = vpop.xlane.xlu0 %3156
      %v3158 = vsel %vm896, %v3065, -inf
      %3159 = vmax.xlane.f32.xlu0 %v3158
      %v3160 = vpop.xlane.xlu0 %3159
      %v3161 = vsel %vm896, %v3068, -inf
      %3162 = vmax.xlane.f32.xlu0 %v3161
      %v3163 = vpop.xlane.xlu0 %3162
      %v3164 = vsel %vm896, %v3070, -inf
      %3165 = vmax.xlane.f32.xlu0 %v3164
      %v3166 = vpop.xlane.xlu0 %3165
      %v3167 = vsel %vm896, %v3073, -inf
      %3168 = vmax.xlane.f32.xlu0 %v3167
      %v3169 = vpop.xlane.xlu0 %3168
      %v3170 = vsel %vm896, %v3075, -inf
      %3171 = vmax.xlane.f32.xlu0 %v3170
      %v3172 = vpop.xlane.xlu0 %3171
      %v3173 = vsub.f32 %v2851, %v3079
      %v3174 = vsub.f32 %v2853, %v3082
      %v3175 = vsub.f32 %v2856, %v3085
      %v3176 = vsub.f32 %v2858, %v3088
      %v3177 = vsub.f32 %v2861, %v3091
      %v3178 = vsub.f32 %v2863, %v3094
      %v3179 = vsub.f32 %v2866, %v3097
      %v3180 = vsub.f32 %v2868, %v3100
      %v3181 = vsub.f32 %v2920, %v3103
      %v3182 = vsub.f32 %v2922, %v3106
      %v3183 = vsub.f32 %v2925, %v3109
      %v3184 = vsub.f32 %v2927, %v3112
      %v3185 = vsub.f32 %v2930, %v3115
      %v3186 = vsub.f32 %v2932, %v3118
      %v3187 = vsub.f32 %v2935, %v3121
      %v3188 = vsub.f32 %v2937, %v3124
      %v3189 = vsub.f32 %v2989, %v3127
      %v3190 = vsub.f32 %v2991, %v3130
      %v3191 = vsub.f32 %v2994, %v3133
      %v3192 = vsub.f32 %v2996, %v3136
      %v3193 = vsub.f32 %v2999, %v3139
      %v3194 = vsub.f32 %v3001, %v3142
      %v3195 = vsub.f32 %v3004, %v3145
      %v3196 = vsub.f32 %v3006, %v3148
      %v3197 = vsub.f32 %v3058, %v3151
      %v3198 = vsub.f32 %v3060, %v3154
      %v3199 = vsub.f32 %v3063, %v3157
      %v3200 = vsub.f32 %v3065, %v3160
      %v3201 = vsub.f32 %v3068, %v3163
      %v3202 = vsub.f32 %v3070, %v3166
      %v3203 = vsub.f32 %v3073, %v3169
      %v3204 = vsub.f32 %v3075, %v3172
      %v3205 = vmul.f32 %v3173, 1.442695
      %v3206 = vpow.pop %v3205
      %v3207 = vmul.f32 %v3174, 1.442695
      %v3208 = vpow.pop %v3207
      %v3209 = vmul.f32 %v3175, 1.442695
      %v3210 = vpow.pop %v3209
      %v3211 = vmul.f32 %v3176, 1.442695
      %v3212 = vpow.pop %v3211
      %v3213 = vmul.f32 %v3177, 1.442695
      %v3214 = vpow.pop %v3213
      %v3215 = vmul.f32 %v3178, 1.442695
      %v3216 = vpow.pop %v3215
      %v3217 = vmul.f32 %v3179, 1.442695
      %v3218 = vpow.pop %v3217
      %v3219 = vmul.f32 %v3180, 1.442695
      %v3220 = vpow.pop %v3219
      %v3221 = vmul.f32 %v3181, 1.442695
      %v3222 = vpow.pop %v3221
      %v3223 = vmul.f32 %v3182, 1.442695
      %v3224 = vpow.pop %v3223
      %v3225 = vmul.f32 %v3183, 1.442695
      %v3226 = vpow.pop %v3225
      %v3227 = vmul.f32 %v3184, 1.442695
      %v3228 = vpow.pop %v3227
      %v3229 = vmul.f32 %v3185, 1.442695
      %v3230 = vpow.pop %v3229
      %v3231 = vmul.f32 %v3186, 1.442695
      %v3232 = vpow.pop %v3231
      %v3233 = vmul.f32 %v3187, 1.442695
      %v3234 = vpow.pop %v3233
      %v3235 = vmul.f32 %v3188, 1.442695
      %v3236 = vpow.pop %v3235
      %v3237 = vmul.f32 %v3189, 1.442695
      %v3238 = vpow.pop %v3237
      %v3239 = vmul.f32 %v3190, 1.442695
      %v3240 = vpow.pop %v3239
      %v3241 = vmul.f32 %v3191, 1.442695
      %v3242 = vpow.pop %v3241
      %v3243 = vmul.f32 %v3192, 1.442695
      %v3244 = vpow.pop %v3243
      %v3245 = vmul.f32 %v3193, 1.442695
      %v3246 = vpow.pop %v3245
      %v3247 = vmul.f32 %v3194, 1.442695
      %v3248 = vpow.pop %v3247
      %v3249 = vmul.f32 %v3195, 1.442695
      %v3250 = vpow.pop %v3249
      %v3251 = vmul.f32 %v3196, 1.442695
      %v3252 = vpow.pop %v3251
      %v3253 = vmul.f32 %v3197, 1.442695
      %v3254 = vpow.pop %v3253
      %v3255 = vmul.f32 %v3198, 1.442695
      %v3256 = vpow.pop %v3255
      %v3257 = vmul.f32 %v3199, 1.442695
      %v3258 = vpow.pop %v3257
      %v3259 = vmul.f32 %v3200, 1.442695
      %v3260 = vpow.pop %v3259
      %v3261 = vmul.f32 %v3201, 1.442695
      %v3262 = vpow.pop %v3261
      %v3263 = vmul.f32 %v3202, 1.442695
      %v3264 = vpow.pop %v3263
      %v3265 = vmul.f32 %v3203, 1.442695
      %v3266 = vpow.pop %v3265
      %v3267 = vmul.f32 %v3204, 1.442695
      %v3268 = vpow.pop %v3267
      %v3269 = vsel %vm896, %v3206, 0.0
      %3270 = vadd.xlane.f32.xlu0 %v3269
      %v3271 = vpop.xlane.xlu0 %3270
      %v3272 = vsel %vm896, %v3208, 0.0
      %3273 = vadd.xlane.f32.xlu0 %v3272
      %v3274 = vpop.xlane.xlu0 %3273
      %v3275 = vsel %vm896, %v3210, 0.0
      %3276 = vadd.xlane.f32.xlu0 %v3275
      %v3277 = vpop.xlane.xlu0 %3276
      %v3278 = vsel %vm896, %v3212, 0.0
      %3279 = vadd.xlane.f32.xlu0 %v3278
      %v3280 = vpop.xlane.xlu0 %3279
      %v3281 = vsel %vm896, %v3214, 0.0
      %3282 = vadd.xlane.f32.xlu0 %v3281
      %v3283 = vpop.xlane.xlu0 %3282
      %v3284 = vsel %vm896, %v3216, 0.0
      %3285 = vadd.xlane.f32.xlu0 %v3284
      %v3286 = vpop.xlane.xlu0 %3285
      %v3287 = vsel %vm896, %v3218, 0.0
      %3288 = vadd.xlane.f32.xlu0 %v3287
      %v3289 = vpop.xlane.xlu0 %3288
      %v3290 = vsel %vm896, %v3220, 0.0
      %3291 = vadd.xlane.f32.xlu0 %v3290
      %v3292 = vpop.xlane.xlu0 %3291
      %v3293 = vsel %vm896, %v3222, 0.0
      %3294 = vadd.xlane.f32.xlu0 %v3293
      %v3295 = vpop.xlane.xlu0 %3294
      %v3296 = vsel %vm896, %v3224, 0.0
      %3297 = vadd.xlane.f32.xlu0 %v3296
      %v3298 = vpop.xlane.xlu0 %3297
      %v3299 = vsel %vm896, %v3226, 0.0
      %3300 = vadd.xlane.f32.xlu0 %v3299
      %v3301 = vpop.xlane.xlu0 %3300
      %v3302 = vsel %vm896, %v3228, 0.0
      %3303 = vadd.xlane.f32.xlu0 %v3302
      %v3304 = vpop.xlane.xlu0 %3303
      %v3305 = vsel %vm896, %v3230, 0.0
      %3306 = vadd.xlane.f32.xlu0 %v3305
      %v3307 = vpop.xlane.xlu0 %3306
      %v3308 = vsel %vm896, %v3232, 0.0
      %3309 = vadd.xlane.f32.xlu0 %v3308
      %v3310 = vpop.xlane.xlu0 %3309
      %v3311 = vsel %vm896, %v3234, 0.0
      %3312 = vadd.xlane.f32.xlu0 %v3311
      %v3313 = vpop.xlane.xlu0 %3312
      %v3314 = vsel %vm896, %v3236, 0.0
      %3315 = vadd.xlane.f32.xlu0 %v3314
      %v3316 = vpop.xlane.xlu0 %3315
      %v3317 = vsel %vm896, %v3238, 0.0
      %3318 = vadd.xlane.f32.xlu0 %v3317
      %v3319 = vpop.xlane.xlu0 %3318
      %v3320 = vsel %vm896, %v3240, 0.0
      %3321 = vadd.xlane.f32.xlu0 %v3320
      %v3322 = vpop.xlane.xlu0 %3321
      %v3323 = vsel %vm896, %v3242, 0.0
      %3324 = vadd.xlane.f32.xlu0 %v3323
      %v3325 = vpop.xlane.xlu0 %3324
      %v3326 = vsel %vm896, %v3244, 0.0
      %3327 = vadd.xlane.f32.xlu0 %v3326
      %v3328 = vpop.xlane.xlu0 %3327
      %v3329 = vsel %vm896, %v3246, 0.0
      %3330 = vadd.xlane.f32.xlu0 %v3329
      %v3331 = vpop.xlane.xlu0 %3330
      %v3332 = vsel %vm896, %v3248, 0.0
      %3333 = vadd.xlane.f32.xlu0 %v3332
      %v3334 = vpop.xlane.xlu0 %3333
      %v3335 = vsel %vm896, %v3250, 0.0
      %3336 = vadd.xlane.f32.xlu0 %v3335
      %v3337 = vpop.xlane.xlu0 %3336
      %v3338 = vsel %vm896, %v3252, 0.0
      %3339 = vadd.xlane.f32.xlu0 %v3338
      %v3340 = vpop.xlane.xlu0 %3339
      %v3341 = vsel %vm896, %v3254, 0.0
      %3342 = vadd.xlane.f32.xlu0 %v3341
      %v3343 = vpop.xlane.xlu0 %3342
      %v3344 = vsel %vm896, %v3256, 0.0
      %3345 = vadd.xlane.f32.xlu0 %v3344
      %v3346 = vpop.xlane.xlu0 %3345
      %v3347 = vsel %vm896, %v3258, 0.0
      %3348 = vadd.xlane.f32.xlu0 %v3347
      %v3349 = vpop.xlane.xlu0 %3348
      %v3350 = vsel %vm896, %v3260, 0.0
      %3351 = vadd.xlane.f32.xlu0 %v3350
      %v3352 = vpop.xlane.xlu0 %3351
      %v3353 = vsel %vm896, %v3262, 0.0
      %3354 = vadd.xlane.f32.xlu0 %v3353
      %v3355 = vpop.xlane.xlu0 %3354
      %v3356 = vsel %vm896, %v3264, 0.0
      %3357 = vadd.xlane.f32.xlu0 %v3356
      %v3358 = vpop.xlane.xlu0 %3357
      %v3359 = vsel %vm896, %v3266, 0.0
      %3360 = vadd.xlane.f32.xlu0 %v3359
      %v3361 = vpop.xlane.xlu0 %3360
      %v3362 = vsel %vm896, %v3268, 0.0
      %3363 = vadd.xlane.f32.xlu0 %v3362
      %v3364 = vpop.xlane.xlu0 %3363
      %v3365 = vrcp.pop %v3271
      %v3366 = vrcp.pop %v3274
      %v3367 = vrcp.pop %v3277
      %v3368 = vrcp.pop %v3280
      %v3369 = vrcp.pop %v3283
      %v3370 = vrcp.pop %v3286
      %v3371 = vrcp.pop %v3289
      %v3372 = vrcp.pop %v3292
      %v3373 = vrcp.pop %v3295
      %v3374 = vrcp.pop %v3298
      %v3375 = vrcp.pop %v3301
      %v3376 = vrcp.pop %v3304
      %v3377 = vrcp.pop %v3307
      %v3378 = vrcp.pop %v3310
      %v3379 = vrcp.pop %v3313
      %v3380 = vrcp.pop %v3316
      %v3381 = vrcp.pop %v3319
      %v3382 = vrcp.pop %v3322
      %v3383 = vrcp.pop %v3325
      %v3384 = vrcp.pop %v3328
      %v3385 = vrcp.pop %v3331
      %v3386 = vrcp.pop %v3334
      %v3387 = vrcp.pop %v3337
      %v3388 = vrcp.pop %v3340
      %v3389 = vrcp.pop %v3343
      %v3390 = vrcp.pop %v3346
      %v3391 = vrcp.pop %v3349
      %v3392 = vrcp.pop %v3352
      %v3393 = vrcp.pop %v3355
      %v3394 = vrcp.pop %v3358
      %v3395 = vrcp.pop %v3361
      %v3396 = vrcp.pop %v3364
      %v3397 = vmul.f32 %v3206, %v3365
      %v3398 = vmul.f32 %v3208, %v3366
      %v3399 = vmul.f32 %v3210, %v3367
      %v3400 = vmul.f32 %v3212, %v3368
      %v3401 = vmul.f32 %v3214, %v3369
      %v3402 = vmul.f32 %v3216, %v3370
      %v3403 = vmul.f32 %v3218, %v3371
      %v3404 = vmul.f32 %v3220, %v3372
      %v3405 = vmul.f32 %v3222, %v3373
      %v3406 = vmul.f32 %v3224, %v3374
      %v3407 = vmul.f32 %v3226, %v3375
      %v3408 = vmul.f32 %v3228, %v3376
      %v3409 = vmul.f32 %v3230, %v3377
      %v3410 = vmul.f32 %v3232, %v3378
      %v3411 = vmul.f32 %v3234, %v3379
      %v3412 = vmul.f32 %v3236, %v3380
      %v3413 = vmul.f32 %v3238, %v3381
      %v3414 = vmul.f32 %v3240, %v3382
      %v3415 = vmul.f32 %v3242, %v3383
      %v3416 = vmul.f32 %v3244, %v3384
      %v3417 = vmul.f32 %v3246, %v3385
      %v3418 = vmul.f32 %v3248, %v3386
      %v3419 = vmul.f32 %v3250, %v3387
      %v3420 = vmul.f32 %v3252, %v3388
      %v3421 = vmul.f32 %v3254, %v3389
      %v3422 = vmul.f32 %v3256, %v3390
      %v3423 = vmul.f32 %v3258, %v3391
      %v3424 = vmul.f32 %v3260, %v3392
      %v3425 = vmul.f32 %v3262, %v3393
      %v3426 = vmul.f32 %v3264, %v3394
      %v3427 = vmul.f32 %v3266, %v3395
      %v3428 = vmul.f32 %v3268, %v3396
      %v3429 = vpack.c.bf16 %v3397, %v3397
      %v3430 = vpack.c.bf16 %v3398, %v3398
      %v3431 = vpack.c.bf16 %v3399, %v3399
      %v3432 = vpack.c.bf16 %v3400, %v3400
      %v3433 = vpack.c.bf16 %v3401, %v3401
      %v3434 = vpack.c.bf16 %v3402, %v3402
      %v3435 = vpack.c.bf16 %v3403, %v3403
      %v3436 = vpack.c.bf16 %v3404, %v3404
      %v3437 = vpack.c.bf16 %v3405, %v3405
      %v3438 = vpack.c.bf16 %v3406, %v3406
      %v3439 = vpack.c.bf16 %v3407, %v3407
      %v3440 = vpack.c.bf16 %v3408, %v3408
      %v3441 = vpack.c.bf16 %v3409, %v3409
      %v3442 = vpack.c.bf16 %v3410, %v3410
      %v3443 = vpack.c.bf16 %v3411, %v3411
      %v3444 = vpack.c.bf16 %v3412, %v3412
      %v3445 = vpack.c.bf16 %v3413, %v3413
      %v3446 = vpack.c.bf16 %v3414, %v3414
      %v3447 = vpack.c.bf16 %v3415, %v3415
      %v3448 = vpack.c.bf16 %v3416, %v3416
      %v3449 = vpack.c.bf16 %v3417, %v3417
      %v3450 = vpack.c.bf16 %v3418, %v3418
      %v3451 = vpack.c.bf16 %v3419, %v3419
      %v3452 = vpack.c.bf16 %v3420, %v3420
      %v3453 = vpack.c.bf16 %v3421, %v3421
      %v3454 = vpack.c.bf16 %v3422, %v3422
      %v3455 = vpack.c.bf16 %v3423, %v3423
      %v3456 = vpack.c.bf16 %v3424, %v3424
      %v3457 = vpack.c.bf16 %v3425, %v3425
      %v3458 = vpack.c.bf16 %v3426, %v3426
      %v3459 = vpack.c.bf16 %v3427, %v3427
      %v3460 = vpack.c.bf16 %v3428, %v3428
      %v3469 = vunpack.c.l.b16 %v3429
      %v3470 = vunpack.c.l.b16 %v3430
      %v3471 = vunpack.c.l.b16 %v3431
      %v3472 = vunpack.c.l.b16 %v3432
      %v3473 = vunpack.c.l.b16 %v3433
      %v3474 = vunpack.c.l.b16 %v3434
      %v3475 = vunpack.c.l.b16 %v3435
      %v3476 = vunpack.c.l.b16 %v3436
      %v3477 = vpack.c.b16 %v3470, %v3469
      %v3478 = vpack.c.b16 %v3472, %v3471
      %v3479 = vpack.c.b16 %v3474, %v3473
      %v3480 = vpack.c.b16 %v3476, %v3475
      %3481 = vrot.lane.b32.xlu0 %v587, 48
      %v3482 = vpop.permute.xlu0 %3481
      %3483 = vrot.lane.b32.xlu0 %v588, 48
      %v3484 = vpop.permute.xlu0 %3483
      %3485 = vrot.lane.b32.xlu0 %v589, 48
      %v3486 = vpop.permute.xlu0 %3485
      %3487 = vrot.lane.b32.xlu0 %v590, 48
      %v3488 = vpop.permute.xlu0 %3487
      %v3494 = vsel %vm896, %v3477, 0
      %v3497 = vsel %vm896, %v3478, 0
      %v3500 = vsel %vm896, %v3479, 0
      %v3503 = vsel %vm896, %v3480, 0
      %3505 = vmatpush.bf16.msra.mxu0 0
      %3506 = vmatpush.bf16.msra.mxu0 0
      %3507 = vmatpush.bf16.msra.mxu0 0
      %3508 = vmatpush.bf16.msra.mxu0 0
      %3509 = vmatpush.bf16.msra.mxu0 %v3488
      %3510 = vmatpush.bf16.msra.mxu0 %v3486
      %3511 = vmatpush.bf16.msra.mxu0 %v3484
      %3512 = vmatpush.bf16.msra.mxu0 %v3482
      %3513 = vmatmul.bf16.gmra.mxu0 %v3494
      %v3514 = vpop.f32.mrf.mxu0
      %v3515 = vadd.f32 0.0, %v3514
      %v3516 = vpop.f32.mrf.mxu0
      %v3517 = vadd.f32 0.0, %v3516
      %3518 = vmatmul.bf16.gmra.mxu0 %v3497
      %v3519 = vpop.f32.mrf.mxu0
      %v3520 = vadd.f32 0.0, %v3519
      %v3521 = vpop.f32.mrf.mxu0
      %v3522 = vadd.f32 0.0, %v3521
      %3523 = vmatmul.bf16.gmra.mxu0 %v3500
      %v3524 = vpop.f32.mrf.mxu0
      %v3525 = vadd.f32 0.0, %v3524
      %v3526 = vpop.f32.mrf.mxu0
      %v3527 = vadd.f32 0.0, %v3526
      %3528 = vmatmul.bf16.gmra.mxu0 %v3503
      %v3529 = vpop.f32.mrf.mxu0
      %v3530 = vadd.f32 0.0, %v3529
      %v3531 = vpop.f32.mrf.mxu0
      %v3532 = vadd.f32 0.0, %v3531
      %3533 = vdwg.mxu0
      %v3542 = vunpack.c.l.b16 %v3437
      %v3543 = vunpack.c.l.b16 %v3438
      %v3544 = vunpack.c.l.b16 %v3439
      %v3545 = vunpack.c.l.b16 %v3440
      %v3546 = vunpack.c.l.b16 %v3441
      %v3547 = vunpack.c.l.b16 %v3442
      %v3548 = vunpack.c.l.b16 %v3443
      %v3549 = vunpack.c.l.b16 %v3444
      %v3550 = vpack.c.b16 %v3543, %v3542
      %v3551 = vpack.c.b16 %v3545, %v3544
      %v3552 = vpack.c.b16 %v3547, %v3546
      %v3553 = vpack.c.b16 %v3549, %v3548
      %3554 = vrot.lane.b32.xlu0 %v669, 48
      %v3555 = vpop.permute.xlu0 %3554
      %3556 = vrot.lane.b32.xlu0 %v670, 48
      %v3557 = vpop.permute.xlu0 %3556
      %3558 = vrot.lane.b32.xlu0 %v671, 48
      %v3559 = vpop.permute.xlu0 %3558
      %3560 = vrot.lane.b32.xlu0 %v672, 48
      %v3561 = vpop.permute.xlu0 %3560
      %v3567 = vsel %vm896, %v3550, 0
      %v3570 = vsel %vm896, %v3551, 0
      %v3573 = vsel %vm896, %v3552, 0
      %v3576 = vsel %vm896, %v3553, 0
      %3578 = vmatpush.bf16.msra.mxu0 0
      %3579 = vmatpush.bf16.msra.mxu0 0
      %3580 = vmatpush.bf16.msra.mxu0 0
      %3581 = vmatpush.bf16.msra.mxu0 0
      %3582 = vmatpush.bf16.msra.mxu0 %v3561
      %3583 = vmatpush.bf16.msra.mxu0 %v3559
      %3584 = vmatpush.bf16.msra.mxu0 %v3557
      %3585 = vmatpush.bf16.msra.mxu0 %v3555
      %3586 = vmatmul.bf16.gmra.mxu0 %v3567
      %v3587 = vpop.f32.mrf.mxu0
      %v3588 = vadd.f32 0.0, %v3587
      %v3589 = vpop.f32.mrf.mxu0
      %v3590 = vadd.f32 0.0, %v3589
      %3591 = vmatmul.bf16.gmra.mxu0 %v3570
      %v3592 = vpop.f32.mrf.mxu0
      %v3593 = vadd.f32 0.0, %v3592
      %v3594 = vpop.f32.mrf.mxu0
      %v3595 = vadd.f32 0.0, %v3594
      %3596 = vmatmul.bf16.gmra.mxu0 %v3573
      %v3597 = vpop.f32.mrf.mxu0
      %v3598 = vadd.f32 0.0, %v3597
      %v3599 = vpop.f32.mrf.mxu0
      %v3600 = vadd.f32 0.0, %v3599
      %3601 = vmatmul.bf16.gmra.mxu0 %v3576
      %v3602 = vpop.f32.mrf.mxu0
      %v3603 = vadd.f32 0.0, %v3602
      %v3604 = vpop.f32.mrf.mxu0
      %v3605 = vadd.f32 0.0, %v3604
      %3606 = vdwg.mxu0
      %v3615 = vunpack.c.l.b16 %v3445
      %v3616 = vunpack.c.l.b16 %v3446
      %v3617 = vunpack.c.l.b16 %v3447
      %v3618 = vunpack.c.l.b16 %v3448
      %v3619 = vunpack.c.l.b16 %v3449
      %v3620 = vunpack.c.l.b16 %v3450
      %v3621 = vunpack.c.l.b16 %v3451
      %v3622 = vunpack.c.l.b16 %v3452
      %v3623 = vpack.c.b16 %v3616, %v3615
      %v3624 = vpack.c.b16 %v3618, %v3617
      %v3625 = vpack.c.b16 %v3620, %v3619
      %v3626 = vpack.c.b16 %v3622, %v3621
      %3627 = vrot.lane.b32.xlu0 %v750, 48
      %v3628 = vpop.permute.xlu0 %3627
      %3629 = vrot.lane.b32.xlu0 %v751, 48
      %v3630 = vpop.permute.xlu0 %3629
      %3631 = vrot.lane.b32.xlu0 %v752, 48
      %v3632 = vpop.permute.xlu0 %3631
      %3633 = vrot.lane.b32.xlu0 %v753, 48
      %v3634 = vpop.permute.xlu0 %3633
      %v3640 = vsel %vm896, %v3623, 0
      %v3643 = vsel %vm896, %v3624, 0
      %v3646 = vsel %vm896, %v3625, 0
      %v3649 = vsel %vm896, %v3626, 0
      %3651 = vmatpush.bf16.msra.mxu0 0
      %3652 = vmatpush.bf16.msra.mxu0 0
      %3653 = vmatpush.bf16.msra.mxu0 0
      %3654 = vmatpush.bf16.msra.mxu0 0
      %3655 = vmatpush.bf16.msra.mxu0 %v3634
      %3656 = vmatpush.bf16.msra.mxu0 %v3632
      %3657 = vmatpush.bf16.msra.mxu0 %v3630
      %3658 = vmatpush.bf16.msra.mxu0 %v3628
      %3659 = vmatmul.bf16.gmra.mxu0 %v3640
      %v3660 = vpop.f32.mrf.mxu0
      %v3661 = vadd.f32 0.0, %v3660
      %v3662 = vpop.f32.mrf.mxu0
      %v3663 = vadd.f32 0.0, %v3662
      %3664 = vmatmul.bf16.gmra.mxu0 %v3643
      %v3665 = vpop.f32.mrf.mxu0
      %v3666 = vadd.f32 0.0, %v3665
      %v3667 = vpop.f32.mrf.mxu0
      %v3668 = vadd.f32 0.0, %v3667
      %3669 = vmatmul.bf16.gmra.mxu0 %v3646
      %v3670 = vpop.f32.mrf.mxu0
      %v3671 = vadd.f32 0.0, %v3670
      %v3672 = vpop.f32.mrf.mxu0
      %v3673 = vadd.f32 0.0, %v3672
      %3674 = vmatmul.bf16.gmra.mxu0 %v3649
      %v3675 = vpop.f32.mrf.mxu0
      %v3676 = vadd.f32 0.0, %v3675
      %v3677 = vpop.f32.mrf.mxu0
      %v3678 = vadd.f32 0.0, %v3677
      %3679 = vdwg.mxu0
      %v3688 = vunpack.c.l.b16 %v3453
      %v3689 = vunpack.c.l.b16 %v3454
      %v3690 = vunpack.c.l.b16 %v3455
      %v3691 = vunpack.c.l.b16 %v3456
      %v3692 = vunpack.c.l.b16 %v3457
      %v3693 = vunpack.c.l.b16 %v3458
      %v3694 = vunpack.c.l.b16 %v3459
      %v3695 = vunpack.c.l.b16 %v3460
      %v3696 = vpack.c.b16 %v3689, %v3688
      %v3697 = vpack.c.b16 %v3691, %v3690
      %v3698 = vpack.c.b16 %v3693, %v3692
      %v3699 = vpack.c.b16 %v3695, %v3694
      %3700 = vrot.lane.b32.xlu0 %v831, 48
      %v3701 = vpop.permute.xlu0 %3700
      %3702 = vrot.lane.b32.xlu0 %v832, 48
      %v3703 = vpop.permute.xlu0 %3702
      %3704 = vrot.lane.b32.xlu0 %v833, 48
      %v3705 = vpop.permute.xlu0 %3704
      %3706 = vrot.lane.b32.xlu0 %v834, 48
      %v3707 = vpop.permute.xlu0 %3706
      %v3713 = vsel %vm896, %v3696, 0
      %v3716 = vsel %vm896, %v3697, 0
      %v3719 = vsel %vm896, %v3698, 0
      %v3722 = vsel %vm896, %v3699, 0
      %3724 = vmatpush.bf16.msra.mxu0 0
      %3725 = vmatpush.bf16.msra.mxu0 0
      %3726 = vmatpush.bf16.msra.mxu0 0
      %3727 = vmatpush.bf16.msra.mxu0 0
      %3728 = vmatpush.bf16.msra.mxu0 %v3707
      %3729 = vmatpush.bf16.msra.mxu0 %v3705
      %3730 = vmatpush.bf16.msra.mxu0 %v3703
      %3731 = vmatpush.bf16.msra.mxu0 %v3701
      %3732 = vmatmul.bf16.gmra.mxu0 %v3713
      %v3733 = vpop.f32.mrf.mxu0
      %v3734 = vadd.f32 0.0, %v3733
      %v3735 = vpop.f32.mrf.mxu0
      %v3736 = vadd.f32 0.0, %v3735
      %3737 = vmatmul.bf16.gmra.mxu0 %v3716
      %v3738 = vpop.f32.mrf.mxu0
      %v3739 = vadd.f32 0.0, %v3738
      %v3740 = vpop.f32.mrf.mxu0
      %v3741 = vadd.f32 0.0, %v3740
      %3742 = vmatmul.bf16.gmra.mxu0 %v3719
      %v3743 = vpop.f32.mrf.mxu0
      %v3744 = vadd.f32 0.0, %v3743
      %v3745 = vpop.f32.mrf.mxu0
      %v3746 = vadd.f32 0.0, %v3745
      %3747 = vmatmul.bf16.gmra.mxu0 %v3722
      %v3748 = vpop.f32.mrf.mxu0
      %v3749 = vadd.f32 0.0, %v3748
      %v3750 = vpop.f32.mrf.mxu0
      %v3751 = vadd.f32 0.0, %v3750
      %3752 = vdwg.mxu0
      %v3753 = vpack.c.bf16 %v3515, %v3515
      %v3754 = vpack.c.bf16 %v3517, %v3517
      %v3755 = vpack.c.bf16 %v3520, %v3520
      %v3756 = vpack.c.bf16 %v3522, %v3522
      %v3757 = vpack.c.bf16 %v3525, %v3525
      %v3758 = vpack.c.bf16 %v3527, %v3527
      %v3759 = vpack.c.bf16 %v3530, %v3530
      %v3760 = vpack.c.bf16 %v3532, %v3532
      %v3761 = vpack.c.bf16 %v3588, %v3588
      %v3762 = vpack.c.bf16 %v3590, %v3590
      %v3763 = vpack.c.bf16 %v3593, %v3593
      %v3764 = vpack.c.bf16 %v3595, %v3595
      %v3765 = vpack.c.bf16 %v3598, %v3598
      %v3766 = vpack.c.bf16 %v3600, %v3600
      %v3767 = vpack.c.bf16 %v3603, %v3603
      %v3768 = vpack.c.bf16 %v3605, %v3605
      %v3769 = vpack.c.bf16 %v3661, %v3661
      %v3770 = vpack.c.bf16 %v3663, %v3663
      %v3771 = vpack.c.bf16 %v3666, %v3666
      %v3772 = vpack.c.bf16 %v3668, %v3668
      %v3773 = vpack.c.bf16 %v3671, %v3671
      %v3774 = vpack.c.bf16 %v3673, %v3673
      %v3775 = vpack.c.bf16 %v3676, %v3676
      %v3776 = vpack.c.bf16 %v3678, %v3678
      %v3777 = vpack.c.bf16 %v3734, %v3734
      %v3778 = vpack.c.bf16 %v3736, %v3736
      %v3779 = vpack.c.bf16 %v3739, %v3739
      %v3780 = vpack.c.bf16 %v3741, %v3741
      %v3781 = vpack.c.bf16 %v3744, %v3744
      %v3782 = vpack.c.bf16 %v3746, %v3746
      %v3783 = vpack.c.bf16 %v3749, %v3749
      %v3784 = vpack.c.bf16 %v3751, %v3751
      %3817 = vrot.lane.b32.xlu0 %v3753, 16
      %v3818 = vpop.permute.xlu0 %3817
      %3819 = vrot.lane.b32.xlu0 %v3754, 16
      %v3820 = vpop.permute.xlu0 %3819
      %3821 = vrot.lane.b32.xlu0 %v3755, 16
      %v3822 = vpop.permute.xlu0 %3821
      %3823 = vrot.lane.b32.xlu0 %v3756, 16
      %v3824 = vpop.permute.xlu0 %3823
      %3825 = vrot.lane.b32.xlu0 %v3757, 16
      %v3826 = vpop.permute.xlu0 %3825
      %3827 = vrot.lane.b32.xlu0 %v3758, 16
      %v3828 = vpop.permute.xlu0 %3827
      %3829 = vrot.lane.b32.xlu0 %v3759, 16
      %v3830 = vpop.permute.xlu0 %3829
      %3831 = vrot.lane.b32.xlu0 %v3760, 16
      %v3832 = vpop.permute.xlu0 %3831
      %3833 = vrot.lane.b32.xlu0 %v3761, 16
      %v3834 = vpop.permute.xlu0 %3833
      %3835 = vrot.lane.b32.xlu0 %v3762, 16
      %v3836 = vpop.permute.xlu0 %3835
      %3837 = vrot.lane.b32.xlu0 %v3763, 16
      %v3838 = vpop.permute.xlu0 %3837
      %3839 = vrot.lane.b32.xlu0 %v3764, 16
      %v3840 = vpop.permute.xlu0 %3839
      %3841 = vrot.lane.b32.xlu0 %v3765, 16
      %v3842 = vpop.permute.xlu0 %3841
      %3843 = vrot.lane.b32.xlu0 %v3766, 16
      %v3844 = vpop.permute.xlu0 %3843
      %3845 = vrot.lane.b32.xlu0 %v3767, 16
      %v3846 = vpop.permute.xlu0 %3845
      %3847 = vrot.lane.b32.xlu0 %v3768, 16
      %v3848 = vpop.permute.xlu0 %3847
      %3849 = vrot.lane.b32.xlu0 %v3769, 16
      %v3850 = vpop.permute.xlu0 %3849
      %3851 = vrot.lane.b32.xlu0 %v3770, 16
      %v3852 = vpop.permute.xlu0 %3851
      %3853 = vrot.lane.b32.xlu0 %v3771, 16
      %v3854 = vpop.permute.xlu0 %3853
      %3855 = vrot.lane.b32.xlu0 %v3772, 16
      %v3856 = vpop.permute.xlu0 %3855
      %3857 = vrot.lane.b32.xlu0 %v3773, 16
      %v3858 = vpop.permute.xlu0 %3857
      %3859 = vrot.lane.b32.xlu0 %v3774, 16
      %v3860 = vpop.permute.xlu0 %3859
      %3861 = vrot.lane.b32.xlu0 %v3775, 16
      %v3862 = vpop.permute.xlu0 %3861
      %3863 = vrot.lane.b32.xlu0 %v3776, 16
      %v3864 = vpop.permute.xlu0 %3863
      %3865 = vrot.lane.b32.xlu0 %v3777, 16
      %v3866 = vpop.permute.xlu0 %3865
      %3867 = vrot.lane.b32.xlu0 %v3778, 16
      %v3868 = vpop.permute.xlu0 %3867
      %3869 = vrot.lane.b32.xlu0 %v3779, 16
      %v3870 = vpop.permute.xlu0 %3869
      %3871 = vrot.lane.b32.xlu0 %v3780, 16
      %v3872 = vpop.permute.xlu0 %3871
      %3873 = vrot.lane.b32.xlu0 %v3781, 16
      %v3874 = vpop.permute.xlu0 %3873
      %3875 = vrot.lane.b32.xlu0 %v3782, 16
      %v3876 = vpop.permute.xlu0 %3875
      %3877 = vrot.lane.b32.xlu0 %v3783, 16
      %v3878 = vpop.permute.xlu0 %3877
      %3879 = vrot.lane.b32.xlu0 %v3784, 16
      %v3880 = vpop.permute.xlu0 %3879
      %vm3913 = vcmask 191616
      %3914 = vst.msk [vmem:[#allocation2] sm:$0xf] %vm3913, %v3818
      %3915 = vst.msk [vmem:[#allocation2 + $0x4] sm:$0xf] %vm3913, %v3820
      %3916 = vst.msk [vmem:[#allocation2 + $0x8] sm:$0xf] %vm3913, %v3822
      %3917 = vst.msk [vmem:[#allocation2 + $0xc] sm:$0xf] %vm3913, %v3824
      %3918 = vst.msk [vmem:[#allocation2 + $0x10] sm:$0xf] %vm3913, %v3826
      %3919 = vst.msk [vmem:[#allocation2 + $0x14] sm:$0xf] %vm3913, %v3828
      %3920 = vst.msk [vmem:[#allocation2 + $0x18] sm:$0xf] %vm3913, %v3830
      %3921 = vst.msk [vmem:[#allocation2 + $0x1c] sm:$0xf] %vm3913, %v3832
      %3922 = vst.msk [vmem:[#allocation2 + $0x20] sm:$0xf] %vm3913, %v3834
      %3923 = vst.msk [vmem:[#allocation2 + $0x24] sm:$0xf] %vm3913, %v3836
      %3924 = vst.msk [vmem:[#allocation2 + $0x28] sm:$0xf] %vm3913, %v3838
      %3925 = vst.msk [vmem:[#allocation2 + $0x2c] sm:$0xf] %vm3913, %v3840
      %3926 = vst.msk [vmem:[#allocation2 + $0x30] sm:$0xf] %vm3913, %v3842
      %3927 = vst.msk [vmem:[#allocation2 + $0x34] sm:$0xf] %vm3913, %v3844
      %3928 = vst.msk [vmem:[#allocation2 + $0x38] sm:$0xf] %vm3913, %v3846
      %3929 = vst.msk [vmem:[#allocation2 + $0x3c] sm:$0xf] %vm3913, %v3848
      %3930 = vst.msk [vmem:[#allocation2 + $0x40] sm:$0xf] %vm3913, %v3850
      %3931 = vst.msk [vmem:[#allocation2 + $0x44] sm:$0xf] %vm3913, %v3852
      %3932 = vst.msk [vmem:[#allocation2 + $0x48] sm:$0xf] %vm3913, %v3854
      %3933 = vst.msk [vmem:[#allocation2 + $0x4c] sm:$0xf] %vm3913, %v3856
      %3934 = vst.msk [vmem:[#allocation2 + $0x50] sm:$0xf] %vm3913, %v3858
      %3935 = vst.msk [vmem:[#allocation2 + $0x54] sm:$0xf] %vm3913, %v3860
      %3936 = vst.msk [vmem:[#allocation2 + $0x58] sm:$0xf] %vm3913, %v3862
      %3937 = vst.msk [vmem:[#allocation2 + $0x5c] sm:$0xf] %vm3913, %v3864
      %3938 = vst.msk [vmem:[#allocation2 + $0x60] sm:$0xf] %vm3913, %v3866
      %3939 = vst.msk [vmem:[#allocation2 + $0x64] sm:$0xf] %vm3913, %v3868
      %3940 = vst.msk [vmem:[#allocation2 + $0x68] sm:$0xf] %vm3913, %v3870
      %3941 = vst.msk [vmem:[#allocation2 + $0x6c] sm:$0xf] %vm3913, %v3872
      %3942 = vst.msk [vmem:[#allocation2 + $0x70] sm:$0xf] %vm3913, %v3874
      %3943 = vst.msk [vmem:[#allocation2 + $0x74] sm:$0xf] %vm3913, %v3876
      %3944 = vst.msk [vmem:[#allocation2 + $0x78] sm:$0xf] %vm3913, %v3878
      %3945 = vst.msk [vmem:[#allocation2 + $0x7c] sm:$0xf] %vm3913, %v3880
      %s3946 = scalar_lea.vmem %s3, 192
      %v3947 = vld [vmem:[%s3946] sm:$0xff]
      %v3948 = vld [vmem:[%s3946 + $0x8] sm:$0xff]
      %v3949 = vld [vmem:[%s3946 + $0x10] sm:$0xff]
      %v3950 = vld [vmem:[%s3946 + $0x18] sm:$0xff]
      %v3951 = vld [vmem:[%s3946 + $0x20] sm:$0xff]
      %v3952 = vld [vmem:[%s3946 + $0x28] sm:$0xff]
      %v3953 = vld [vmem:[%s3946 + $0x30] sm:$0xff]
      %v3954 = vld [vmem:[%s3946 + $0x38] sm:$0xff]
      %3955 = vrot.lane.b32.xlu0 %v587, 104
      %v3956 = vpop.permute.xlu0 %3955
      %3957 = vrot.lane.b32.xlu0 %v588, 104
      %v3958 = vpop.permute.xlu0 %3957
      %3959 = vrot.lane.b32.xlu0 %v589, 104
      %v3960 = vpop.permute.xlu0 %3959
      %3961 = vrot.lane.b32.xlu0 %v590, 104
      %v3962 = vpop.permute.xlu0 %3961
      %3963 = vrot.lane.b32.xlu0 %v587, 72
      %v3964 = vpop.permute.xlu0 %3963
      %3965 = vrot.lane.b32.xlu0 %v588, 72
      %v3966 = vpop.permute.xlu0 %3965
      %3967 = vrot.lane.b32.xlu0 %v589, 72
      %v3968 = vpop.permute.xlu0 %3967
      %3969 = vrot.lane.b32.xlu0 %v590, 72
      %v3970 = vpop.permute.xlu0 %3969
      %v3972 = vsel %vm599, %v3956, 0
      %v3975 = vsel %vm599, %v3958, 0
      %v3978 = vsel %vm599, %v3960, 0
      %v3981 = vsel %vm599, %v3962, 0
      %v3984 = vsel %vm599, %v3964, 0
      %v3987 = vsel %vm599, %v3966, 0
      %v3990 = vsel %vm599, %v3968, 0
      %v3993 = vsel %vm599, %v3970, 0
      %3995 = vmatpush.bf16.xpose.msra.mxu0 0
      %3996 = vmatpush.bf16.xpose.msra.mxu0 0
      %3997 = vmatpush.bf16.xpose.msra.mxu0 0
      %3998 = vmatpush.bf16.xpose.msra.mxu0 0
      %3999 = vmatpush.bf16.xpose.msra.mxu0 %v3993
      %4000 = vmatpush.bf16.xpose.msra.mxu0 %v3990
      %4001 = vmatpush.bf16.xpose.msra.mxu0 %v3987
      %4002 = vmatpush.bf16.xpose.msra.mxu0 %v3984
      %4003 = vmatmul.bf16.gmra.mxu0 %v3972
      %v4004 = vpop.f32.mrf.mxu0
      %v4005 = vadd.f32 %v3947, %v4004
      %v4006 = vpop.f32.mrf.mxu0
      %v4007 = vadd.f32 %v3948, %v4006
      %4008 = vmatmul.bf16.gmra.mxu0 %v3975
      %v4009 = vpop.f32.mrf.mxu0
      %v4010 = vadd.f32 %v3949, %v4009
      %v4011 = vpop.f32.mrf.mxu0
      %v4012 = vadd.f32 %v3950, %v4011
      %4013 = vmatmul.bf16.gmra.mxu0 %v3978
      %v4014 = vpop.f32.mrf.mxu0
      %v4015 = vadd.f32 %v3951, %v4014
      %v4016 = vpop.f32.mrf.mxu0
      %v4017 = vadd.f32 %v3952, %v4016
      %4018 = vmatmul.bf16.gmra.mxu0 %v3981
      %v4019 = vpop.f32.mrf.mxu0
      %v4020 = vadd.f32 %v3953, %v4019
      %v4021 = vpop.f32.mrf.mxu0
      %v4022 = vadd.f32 %v3954, %v4021
      %4023 = vdwg.mxu0
      %4024 = vrot.lane.b32.xlu0 %v669, 104
      %v4025 = vpop.permute.xlu0 %4024
      %4026 = vrot.lane.b32.xlu0 %v670, 104
      %v4027 = vpop.permute.xlu0 %4026
      %4028 = vrot.lane.b32.xlu0 %v671, 104
      %v4029 = vpop.permute.xlu0 %4028
      %4030 = vrot.lane.b32.xlu0 %v672, 104
      %v4031 = vpop.permute.xlu0 %4030
      %4032 = vrot.lane.b32.xlu0 %v669, 72
      %v4033 = vpop.permute.xlu0 %4032
      %4034 = vrot.lane.b32.xlu0 %v670, 72
      %v4035 = vpop.permute.xlu0 %4034
      %4036 = vrot.lane.b32.xlu0 %v671, 72
      %v4037 = vpop.permute.xlu0 %4036
      %4038 = vrot.lane.b32.xlu0 %v672, 72
      %v4039 = vpop.permute.xlu0 %4038
      %v4041 = vsel %vm599, %v4025, 0
      %v4044 = vsel %vm599, %v4027, 0
      %v4047 = vsel %vm599, %v4029, 0
      %v4050 = vsel %vm599, %v4031, 0
      %v4053 = vsel %vm599, %v4033, 0
      %v4056 = vsel %vm599, %v4035, 0
      %v4059 = vsel %vm599, %v4037, 0
      %v4062 = vsel %vm599, %v4039, 0
      %4064 = vmatpush.bf16.xpose.msra.mxu0 0
      %4065 = vmatpush.bf16.xpose.msra.mxu0 0
      %4066 = vmatpush.bf16.xpose.msra.mxu0 0
      %4067 = vmatpush.bf16.xpose.msra.mxu0 0
      %4068 = vmatpush.bf16.xpose.msra.mxu0 %v4062
      %4069 = vmatpush.bf16.xpose.msra.mxu0 %v4059
      %4070 = vmatpush.bf16.xpose.msra.mxu0 %v4056
      %4071 = vmatpush.bf16.xpose.msra.mxu0 %v4053
      %4072 = vmatmul.bf16.gmra.mxu0 %v4041
      %v4073 = vpop.f32.mrf.mxu0
      %v4074 = vadd.f32 %v3947, %v4073
      %v4075 = vpop.f32.mrf.mxu0
      %v4076 = vadd.f32 %v3948, %v4075
      %4077 = vmatmul.bf16.gmra.mxu0 %v4044
      %v4078 = vpop.f32.mrf.mxu0
      %v4079 = vadd.f32 %v3949, %v4078
      %v4080 = vpop.f32.mrf.mxu0
      %v4081 = vadd.f32 %v3950, %v4080
      %4082 = vmatmul.bf16.gmra.mxu0 %v4047
      %v4083 = vpop.f32.mrf.mxu0
      %v4084 = vadd.f32 %v3951, %v4083
      %v4085 = vpop.f32.mrf.mxu0
      %v4086 = vadd.f32 %v3952, %v4085
      %4087 = vmatmul.bf16.gmra.mxu0 %v4050
      %v4088 = vpop.f32.mrf.mxu0
      %v4089 = vadd.f32 %v3953, %v4088
      %v4090 = vpop.f32.mrf.mxu0
      %v4091 = vadd.f32 %v3954, %v4090
      %4092 = vdwg.mxu0
      %4093 = vrot.lane.b32.xlu0 %v750, 104
      %v4094 = vpop.permute.xlu0 %4093
      %4095 = vrot.lane.b32.xlu0 %v751, 104
      %v4096 = vpop.permute.xlu0 %4095
      %4097 = vrot.lane.b32.xlu0 %v752, 104
      %v4098 = vpop.permute.xlu0 %4097
      %4099 = vrot.lane.b32.xlu0 %v753, 104
      %v4100 = vpop.permute.xlu0 %4099
      %4101 = vrot.lane.b32.xlu0 %v750, 72
      %v4102 = vpop.permute.xlu0 %4101
      %4103 = vrot.lane.b32.xlu0 %v751, 72
      %v4104 = vpop.permute.xlu0 %4103
      %4105 = vrot.lane.b32.xlu0 %v752, 72
      %v4106 = vpop.permute.xlu0 %4105
      %4107 = vrot.lane.b32.xlu0 %v753, 72
      %v4108 = vpop.permute.xlu0 %4107
      %v4110 = vsel %vm599, %v4094, 0
      %v4113 = vsel %vm599, %v4096, 0
      %v4116 = vsel %vm599, %v4098, 0
      %v4119 = vsel %vm599, %v4100, 0
      %v4122 = vsel %vm599, %v4102, 0
      %v4125 = vsel %vm599, %v4104, 0
      %v4128 = vsel %vm599, %v4106, 0
      %v4131 = vsel %vm599, %v4108, 0
      %4133 = vmatpush.bf16.xpose.msra.mxu0 0
      %4134 = vmatpush.bf16.xpose.msra.mxu0 0
      %4135 = vmatpush.bf16.xpose.msra.mxu0 0
      %4136 = vmatpush.bf16.xpose.msra.mxu0 0
      %4137 = vmatpush.bf16.xpose.msra.mxu0 %v4131
      %4138 = vmatpush.bf16.xpose.msra.mxu0 %v4128
      %4139 = vmatpush.bf16.xpose.msra.mxu0 %v4125
      %4140 = vmatpush.bf16.xpose.msra.mxu0 %v4122
      %4141 = vmatmul.bf16.gmra.mxu0 %v4110
      %v4142 = vpop.f32.mrf.mxu0
      %v4143 = vadd.f32 %v3947, %v4142
      %v4144 = vpop.f32.mrf.mxu0
      %v4145 = vadd.f32 %v3948, %v4144
      %4146 = vmatmul.bf16.gmra.mxu0 %v4113
      %v4147 = vpop.f32.mrf.mxu0
      %v4148 = vadd.f32 %v3949, %v4147
      %v4149 = vpop.f32.mrf.mxu0
      %v4150 = vadd.f32 %v3950, %v4149
      %4151 = vmatmul.bf16.gmra.mxu0 %v4116
      %v4152 = vpop.f32.mrf.mxu0
      %v4153 = vadd.f32 %v3951, %v4152
      %v4154 = vpop.f32.mrf.mxu0
      %v4155 = vadd.f32 %v3952, %v4154
      %4156 = vmatmul.bf16.gmra.mxu0 %v4119
      %v4157 = vpop.f32.mrf.mxu0
      %v4158 = vadd.f32 %v3953, %v4157
      %v4159 = vpop.f32.mrf.mxu0
      %v4160 = vadd.f32 %v3954, %v4159
      %4161 = vdwg.mxu0
      %4162 = vrot.lane.b32.xlu0 %v831, 104
      %v4163 = vpop.permute.xlu0 %4162
      %4164 = vrot.lane.b32.xlu0 %v832, 104
      %v4165 = vpop.permute.xlu0 %4164
      %4166 = vrot.lane.b32.xlu0 %v833, 104
      %v4167 = vpop.permute.xlu0 %4166
      %4168 = vrot.lane.b32.xlu0 %v834, 104
      %v4169 = vpop.permute.xlu0 %4168
      %4170 = vrot.lane.b32.xlu0 %v831, 72
      %v4171 = vpop.permute.xlu0 %4170
      %4172 = vrot.lane.b32.xlu0 %v832, 72
      %v4173 = vpop.permute.xlu0 %4172
      %4174 = vrot.lane.b32.xlu0 %v833, 72
      %v4175 = vpop.permute.xlu0 %4174
      %4176 = vrot.lane.b32.xlu0 %v834, 72
      %v4177 = vpop.permute.xlu0 %4176
      %v4179 = vsel %vm599, %v4163, 0
      %v4182 = vsel %vm599, %v4165, 0
      %v4185 = vsel %vm599, %v4167, 0
      %v4188 = vsel %vm599, %v4169, 0
      %v4191 = vsel %vm599, %v4171, 0
      %v4194 = vsel %vm599, %v4173, 0
      %v4197 = vsel %vm599, %v4175, 0
      %v4200 = vsel %vm599, %v4177, 0
      %4202 = vmatpush.bf16.xpose.msra.mxu0 0
      %4203 = vmatpush.bf16.xpose.msra.mxu0 0
      %4204 = vmatpush.bf16.xpose.msra.mxu0 0
      %4205 = vmatpush.bf16.xpose.msra.mxu0 0
      %4206 = vmatpush.bf16.xpose.msra.mxu0 %v4200
      %4207 = vmatpush.bf16.xpose.msra.mxu0 %v4197
      %4208 = vmatpush.bf16.xpose.msra.mxu0 %v4194
      %4209 = vmatpush.bf16.xpose.msra.mxu0 %v4191
      %4210 = vmatmul.bf16.gmra.mxu0 %v4179
      %v4211 = vpop.f32.mrf.mxu0
      %v4212 = vadd.f32 %v3947, %v4211
      %v4213 = vpop.f32.mrf.mxu0
      %v4214 = vadd.f32 %v3948, %v4213
      %4215 = vmatmul.bf16.gmra.mxu0 %v4182
      %v4216 = vpop.f32.mrf.mxu0
      %v4217 = vadd.f32 %v3949, %v4216
      %v4218 = vpop.f32.mrf.mxu0
      %v4219 = vadd.f32 %v3950, %v4218
      %4220 = vmatmul.bf16.gmra.mxu0 %v4185
      %v4221 = vpop.f32.mrf.mxu0
      %v4222 = vadd.f32 %v3951, %v4221
      %v4223 = vpop.f32.mrf.mxu0
      %v4224 = vadd.f32 %v3952, %v4223
      %4225 = vmatmul.bf16.gmra.mxu0 %v4188
      %v4226 = vpop.f32.mrf.mxu0
      %v4227 = vadd.f32 %v3953, %v4226
      %v4228 = vpop.f32.mrf.mxu0
      %v4229 = vadd.f32 %v3954, %v4228
      %4230 = vdwg.mxu0
      %v4231 = vsel %vm896, %v4005, -inf
      %4232 = vmax.xlane.f32.xlu0 %v4231
      %v4233 = vpop.xlane.xlu0 %4232
      %v4234 = vsel %vm896, %v4007, -inf
      %4235 = vmax.xlane.f32.xlu0 %v4234
      %v4236 = vpop.xlane.xlu0 %4235
      %v4237 = vsel %vm896, %v4010, -inf
      %4238 = vmax.xlane.f32.xlu0 %v4237
      %v4239 = vpop.xlane.xlu0 %4238
      %v4240 = vsel %vm896, %v4012, -inf
      %4241 = vmax.xlane.f32.xlu0 %v4240
      %v4242 = vpop.xlane.xlu0 %4241
      %v4243 = vsel %vm896, %v4015, -inf
      %4244 = vmax.xlane.f32.xlu0 %v4243
      %v4245 = vpop.xlane.xlu0 %4244
      %v4246 = vsel %vm896, %v4017, -inf
      %4247 = vmax.xlane.f32.xlu0 %v4246
      %v4248 = vpop.xlane.xlu0 %4247
      %v4249 = vsel %vm896, %v4020, -inf
      %4250 = vmax.xlane.f32.xlu0 %v4249
      %v4251 = vpop.xlane.xlu0 %4250
      %v4252 = vsel %vm896, %v4022, -inf
      %4253 = vmax.xlane.f32.xlu0 %v4252
      %v4254 = vpop.xlane.xlu0 %4253
      %v4255 = vsel %vm896, %v4074, -inf
      %4256 = vmax.xlane.f32.xlu0 %v4255
      %v4257 = vpop.xlane.xlu0 %4256
      %v4258 = vsel %vm896, %v4076, -inf
      %4259 = vmax.xlane.f32.xlu0 %v4258
      %v4260 = vpop.xlane.xlu0 %4259
      %v4261 = vsel %vm896, %v4079, -inf
      %4262 = vmax.xlane.f32.xlu0 %v4261
      %v4263 = vpop.xlane.xlu0 %4262
      %v4264 = vsel %vm896, %v4081, -inf
      %4265 = vmax.xlane.f32.xlu0 %v4264
      %v4266 = vpop.xlane.xlu0 %4265
      %v4267 = vsel %vm896, %v4084, -inf
      %4268 = vmax.xlane.f32.xlu0 %v4267
      %v4269 = vpop.xlane.xlu0 %4268
      %v4270 = vsel %vm896, %v4086, -inf
      %4271 = vmax.xlane.f32.xlu0 %v4270
      %v4272 = vpop.xlane.xlu0 %4271
      %v4273 = vsel %vm896, %v4089, -inf
      %4274 = vmax.xlane.f32.xlu0 %v4273
      %v4275 = vpop.xlane.xlu0 %4274
      %v4276 = vsel %vm896, %v4091, -inf
      %4277 = vmax.xlane.f32.xlu0 %v4276
      %v4278 = vpop.xlane.xlu0 %4277
      %v4279 = vsel %vm896, %v4143, -inf
      %4280 = vmax.xlane.f32.xlu0 %v4279
      %v4281 = vpop.xlane.xlu0 %4280
      %v4282 = vsel %vm896, %v4145, -inf
      %4283 = vmax.xlane.f32.xlu0 %v4282
      %v4284 = vpop.xlane.xlu0 %4283
      %v4285 = vsel %vm896, %v4148, -inf
      %4286 = vmax.xlane.f32.xlu0 %v4285
      %v4287 = vpop.xlane.xlu0 %4286
      %v4288 = vsel %vm896, %v4150, -inf
      %4289 = vmax.xlane.f32.xlu0 %v4288
      %v4290 = vpop.xlane.xlu0 %4289
      %v4291 = vsel %vm896, %v4153, -inf
      %4292 = vmax.xlane.f32.xlu0 %v4291
      %v4293 = vpop.xlane.xlu0 %4292
      %v4294 = vsel %vm896, %v4155, -inf
      %4295 = vmax.xlane.f32.xlu0 %v4294
      %v4296 = vpop.xlane.xlu0 %4295
      %v4297 = vsel %vm896, %v4158, -inf
      %4298 = vmax.xlane.f32.xlu0 %v4297
      %v4299 = vpop.xlane.xlu0 %4298
      %v4300 = vsel %vm896, %v4160, -inf
      %4301 = vmax.xlane.f32.xlu0 %v4300
      %v4302 = vpop.xlane.xlu0 %4301
      %v4303 = vsel %vm896, %v4212, -inf
      %4304 = vmax.xlane.f32.xlu0 %v4303
      %v4305 = vpop.xlane.xlu0 %4304
      %v4306 = vsel %vm896, %v4214, -inf
      %4307 = vmax.xlane.f32.xlu0 %v4306
      %v4308 = vpop.xlane.xlu0 %4307
      %v4309 = vsel %vm896, %v4217, -inf
      %4310 = vmax.xlane.f32.xlu0 %v4309
      %v4311 = vpop.xlane.xlu0 %4310
      %v4312 = vsel %vm896, %v4219, -inf
      %4313 = vmax.xlane.f32.xlu0 %v4312
      %v4314 = vpop.xlane.xlu0 %4313
      %v4315 = vsel %vm896, %v4222, -inf
      %4316 = vmax.xlane.f32.xlu0 %v4315
      %v4317 = vpop.xlane.xlu0 %4316
      %v4318 = vsel %vm896, %v4224, -inf
      %4319 = vmax.xlane.f32.xlu0 %v4318
      %v4320 = vpop.xlane.xlu0 %4319
      %v4321 = vsel %vm896, %v4227, -inf
      %4322 = vmax.xlane.f32.xlu0 %v4321
      %v4323 = vpop.xlane.xlu0 %4322
      %v4324 = vsel %vm896, %v4229, -inf
      %4325 = vmax.xlane.f32.xlu0 %v4324
      %v4326 = vpop.xlane.xlu0 %4325
      %v4327 = vsub.f32 %v4005, %v4233
      %v4328 = vsub.f32 %v4007, %v4236
      %v4329 = vsub.f32 %v4010, %v4239
      %v4330 = vsub.f32 %v4012, %v4242
      %v4331 = vsub.f32 %v4015, %v4245
      %v4332 = vsub.f32 %v4017, %v4248
      %v4333 = vsub.f32 %v4020, %v4251
      %v4334 = vsub.f32 %v4022, %v4254
      %v4335 = vsub.f32 %v4074, %v4257
      %v4336 = vsub.f32 %v4076, %v4260
      %v4337 = vsub.f32 %v4079, %v4263
      %v4338 = vsub.f32 %v4081, %v4266
      %v4339 = vsub.f32 %v4084, %v4269
      %v4340 = vsub.f32 %v4086, %v4272
      %v4341 = vsub.f32 %v4089, %v4275
      %v4342 = vsub.f32 %v4091, %v4278
      %v4343 = vsub.f32 %v4143, %v4281
      %v4344 = vsub.f32 %v4145, %v4284
      %v4345 = vsub.f32 %v4148, %v4287
      %v4346 = vsub.f32 %v4150, %v4290
      %v4347 = vsub.f32 %v4153, %v4293
      %v4348 = vsub.f32 %v4155, %v4296
      %v4349 = vsub.f32 %v4158, %v4299
      %v4350 = vsub.f32 %v4160, %v4302
      %v4351 = vsub.f32 %v4212, %v4305
      %v4352 = vsub.f32 %v4214, %v4308
      %v4353 = vsub.f32 %v4217, %v4311
      %v4354 = vsub.f32 %v4219, %v4314
      %v4355 = vsub.f32 %v4222, %v4317
      %v4356 = vsub.f32 %v4224, %v4320
      %v4357 = vsub.f32 %v4227, %v4323
      %v4358 = vsub.f32 %v4229, %v4326
      %v4359 = vmul.f32 %v4327, 1.442695
      %v4360 = vpow.pop %v4359
      %v4361 = vmul.f32 %v4328, 1.442695
      %v4362 = vpow.pop %v4361
      %v4363 = vmul.f32 %v4329, 1.442695
      %v4364 = vpow.pop %v4363
      %v4365 = vmul.f32 %v4330, 1.442695
      %v4366 = vpow.pop %v4365
      %v4367 = vmul.f32 %v4331, 1.442695
      %v4368 = vpow.pop %v4367
      %v4369 = vmul.f32 %v4332, 1.442695
      %v4370 = vpow.pop %v4369
      %v4371 = vmul.f32 %v4333, 1.442695
      %v4372 = vpow.pop %v4371
      %v4373 = vmul.f32 %v4334, 1.442695
      %v4374 = vpow.pop %v4373
      %v4375 = vmul.f32 %v4335, 1.442695
      %v4376 = vpow.pop %v4375
      %v4377 = vmul.f32 %v4336, 1.442695
      %v4378 = vpow.pop %v4377
      %v4379 = vmul.f32 %v4337, 1.442695
      %v4380 = vpow.pop %v4379
      %v4381 = vmul.f32 %v4338, 1.442695
      %v4382 = vpow.pop %v4381
      %v4383 = vmul.f32 %v4339, 1.442695
      %v4384 = vpow.pop %v4383
      %v4385 = vmul.f32 %v4340, 1.442695
      %v4386 = vpow.pop %v4385
      %v4387 = vmul.f32 %v4341, 1.442695
      %v4388 = vpow.pop %v4387
      %v4389 = vmul.f32 %v4342, 1.442695
      %v4390 = vpow.pop %v4389
      %v4391 = vmul.f32 %v4343, 1.442695
      %v4392 = vpow.pop %v4391
      %v4393 = vmul.f32 %v4344, 1.442695
      %v4394 = vpow.pop %v4393
      %v4395 = vmul.f32 %v4345, 1.442695
      %v4396 = vpow.pop %v4395
      %v4397 = vmul.f32 %v4346, 1.442695
      %v4398 = vpow.pop %v4397
      %v4399 = vmul.f32 %v4347, 1.442695
      %v4400 = vpow.pop %v4399
      %v4401 = vmul.f32 %v4348, 1.442695
      %v4402 = vpow.pop %v4401
      %v4403 = vmul.f32 %v4349, 1.442695
      %v4404 = vpow.pop %v4403
      %v4405 = vmul.f32 %v4350, 1.442695
      %v4406 = vpow.pop %v4405
      %v4407 = vmul.f32 %v4351, 1.442695
      %v4408 = vpow.pop %v4407
      %v4409 = vmul.f32 %v4352, 1.442695
      %v4410 = vpow.pop %v4409
      %v4411 = vmul.f32 %v4353, 1.442695
      %v4412 = vpow.pop %v4411
      %v4413 = vmul.f32 %v4354, 1.442695
      %v4414 = vpow.pop %v4413
      %v4415 = vmul.f32 %v4355, 1.442695
      %v4416 = vpow.pop %v4415
      %v4417 = vmul.f32 %v4356, 1.442695
      %v4418 = vpow.pop %v4417
      %v4419 = vmul.f32 %v4357, 1.442695
      %v4420 = vpow.pop %v4419
      %v4421 = vmul.f32 %v4358, 1.442695
      %v4422 = vpow.pop %v4421
      %v4423 = vsel %vm896, %v4360, 0.0
      %4424 = vadd.xlane.f32.xlu0 %v4423
      %v4425 = vpop.xlane.xlu0 %4424
      %v4426 = vsel %vm896, %v4362, 0.0
      %4427 = vadd.xlane.f32.xlu0 %v4426
      %v4428 = vpop.xlane.xlu0 %4427
      %v4429 = vsel %vm896, %v4364, 0.0
      %4430 = vadd.xlane.f32.xlu0 %v4429
      %v4431 = vpop.xlane.xlu0 %4430
      %v4432 = vsel %vm896, %v4366, 0.0
      %4433 = vadd.xlane.f32.xlu0 %v4432
      %v4434 = vpop.xlane.xlu0 %4433
      %v4435 = vsel %vm896, %v4368, 0.0
      %4436 = vadd.xlane.f32.xlu0 %v4435
      %v4437 = vpop.xlane.xlu0 %4436
      %v4438 = vsel %vm896, %v4370, 0.0
      %4439 = vadd.xlane.f32.xlu0 %v4438
      %v4440 = vpop.xlane.xlu0 %4439
      %v4441 = vsel %vm896, %v4372, 0.0
      %4442 = vadd.xlane.f32.xlu0 %v4441
      %v4443 = vpop.xlane.xlu0 %4442
      %v4444 = vsel %vm896, %v4374, 0.0
      %4445 = vadd.xlane.f32.xlu0 %v4444
      %v4446 = vpop.xlane.xlu0 %4445
      %v4447 = vsel %vm896, %v4376, 0.0
      %4448 = vadd.xlane.f32.xlu0 %v4447
      %v4449 = vpop.xlane.xlu0 %4448
      %v4450 = vsel %vm896, %v4378, 0.0
      %4451 = vadd.xlane.f32.xlu0 %v4450
      %v4452 = vpop.xlane.xlu0 %4451
      %v4453 = vsel %vm896, %v4380, 0.0
      %4454 = vadd.xlane.f32.xlu0 %v4453
      %v4455 = vpop.xlane.xlu0 %4454
      %v4456 = vsel %vm896, %v4382, 0.0
      %4457 = vadd.xlane.f32.xlu0 %v4456
      %v4458 = vpop.xlane.xlu0 %4457
      %v4459 = vsel %vm896, %v4384, 0.0
      %4460 = vadd.xlane.f32.xlu0 %v4459
      %v4461 = vpop.xlane.xlu0 %4460
      %v4462 = vsel %vm896, %v4386, 0.0
      %4463 = vadd.xlane.f32.xlu0 %v4462
      %v4464 = vpop.xlane.xlu0 %4463
      %v4465 = vsel %vm896, %v4388, 0.0
      %4466 = vadd.xlane.f32.xlu0 %v4465
      %v4467 = vpop.xlane.xlu0 %4466
      %v4468 = vsel %vm896, %v4390, 0.0
      %4469 = vadd.xlane.f32.xlu0 %v4468
      %v4470 = vpop.xlane.xlu0 %4469
      %v4471 = vsel %vm896, %v4392, 0.0
      %4472 = vadd.xlane.f32.xlu0 %v4471
      %v4473 = vpop.xlane.xlu0 %4472
      %v4474 = vsel %vm896, %v4394, 0.0
      %4475 = vadd.xlane.f32.xlu0 %v4474
      %v4476 = vpop.xlane.xlu0 %4475
      %v4477 = vsel %vm896, %v4396, 0.0
      %4478 = vadd.xlane.f32.xlu0 %v4477
      %v4479 = vpop.xlane.xlu0 %4478
      %v4480 = vsel %vm896, %v4398, 0.0
      %4481 = vadd.xlane.f32.xlu0 %v4480
      %v4482 = vpop.xlane.xlu0 %4481
      %v4483 = vsel %vm896, %v4400, 0.0
      %4484 = vadd.xlane.f32.xlu0 %v4483
      %v4485 = vpop.xlane.xlu0 %4484
      %v4486 = vsel %vm896, %v4402, 0.0
      %4487 = vadd.xlane.f32.xlu0 %v4486
      %v4488 = vpop.xlane.xlu0 %4487
      %v4489 = vsel %vm896, %v4404, 0.0
      %4490 = vadd.xlane.f32.xlu0 %v4489
      %v4491 = vpop.xlane.xlu0 %4490
      %v4492 = vsel %vm896, %v4406, 0.0
      %4493 = vadd.xlane.f32.xlu0 %v4492
      %v4494 = vpop.xlane.xlu0 %4493
      %v4495 = vsel %vm896, %v4408, 0.0
      %4496 = vadd.xlane.f32.xlu0 %v4495
      %v4497 = vpop.xlane.xlu0 %4496
      %v4498 = vsel %vm896, %v4410, 0.0
      %4499 = vadd.xlane.f32.xlu0 %v4498
      %v4500 = vpop.xlane.xlu0 %4499
      %v4501 = vsel %vm896, %v4412, 0.0
      %4502 = vadd.xlane.f32.xlu0 %v4501
      %v4503 = vpop.xlane.xlu0 %4502
      %v4504 = vsel %vm896, %v4414, 0.0
      %4505 = vadd.xlane.f32.xlu0 %v4504
      %v4506 = vpop.xlane.xlu0 %4505
      %v4507 = vsel %vm896, %v4416, 0.0
      %4508 = vadd.xlane.f32.xlu0 %v4507
      %v4509 = vpop.xlane.xlu0 %4508
      %v4510 = vsel %vm896, %v4418, 0.0
      %4511 = vadd.xlane.f32.xlu0 %v4510
      %v4512 = vpop.xlane.xlu0 %4511
      %v4513 = vsel %vm896, %v4420, 0.0
      %4514 = vadd.xlane.f32.xlu0 %v4513
      %v4515 = vpop.xlane.xlu0 %4514
      %v4516 = vsel %vm896, %v4422, 0.0
      %4517 = vadd.xlane.f32.xlu0 %v4516
      %v4518 = vpop.xlane.xlu0 %4517
      %v4519 = vrcp.pop %v4425
      %v4520 = vrcp.pop %v4428
      %v4521 = vrcp.pop %v4431
      %v4522 = vrcp.pop %v4434
      %v4523 = vrcp.pop %v4437
      %v4524 = vrcp.pop %v4440
      %v4525 = vrcp.pop %v4443
      %v4526 = vrcp.pop %v4446
      %v4527 = vrcp.pop %v4449
      %v4528 = vrcp.pop %v4452
      %v4529 = vrcp.pop %v4455
      %v4530 = vrcp.pop %v4458
      %v4531 = vrcp.pop %v4461
      %v4532 = vrcp.pop %v4464
      %v4533 = vrcp.pop %v4467
      %v4534 = vrcp.pop %v4470
      %v4535 = vrcp.pop %v4473
      %v4536 = vrcp.pop %v4476
      %v4537 = vrcp.pop %v4479
      %v4538 = vrcp.pop %v4482
      %v4539 = vrcp.pop %v4485
      %v4540 = vrcp.pop %v4488
      %v4541 = vrcp.pop %v4491
      %v4542 = vrcp.pop %v4494
      %v4543 = vrcp.pop %v4497
      %v4544 = vrcp.pop %v4500
      %v4545 = vrcp.pop %v4503
      %v4546 = vrcp.pop %v4506
      %v4547 = vrcp.pop %v4509
      %v4548 = vrcp.pop %v4512
      %v4549 = vrcp.pop %v4515
      %v4550 = vrcp.pop %v4518
      %v4551 = vmul.f32 %v4360, %v4519
      %v4552 = vmul.f32 %v4362, %v4520
      %v4553 = vmul.f32 %v4364, %v4521
      %v4554 = vmul.f32 %v4366, %v4522
      %v4555 = vmul.f32 %v4368, %v4523
      %v4556 = vmul.f32 %v4370, %v4524
      %v4557 = vmul.f32 %v4372, %v4525
      %v4558 = vmul.f32 %v4374, %v4526
      %v4559 = vmul.f32 %v4376, %v4527
      %v4560 = vmul.f32 %v4378, %v4528
      %v4561 = vmul.f32 %v4380, %v4529
      %v4562 = vmul.f32 %v4382, %v4530
      %v4563 = vmul.f32 %v4384, %v4531
      %v4564 = vmul.f32 %v4386, %v4532
      %v4565 = vmul.f32 %v4388, %v4533
      %v4566 = vmul.f32 %v4390, %v4534
      %v4567 = vmul.f32 %v4392, %v4535
      %v4568 = vmul.f32 %v4394, %v4536
      %v4569 = vmul.f32 %v4396, %v4537
      %v4570 = vmul.f32 %v4398, %v4538
      %v4571 = vmul.f32 %v4400, %v4539
      %v4572 = vmul.f32 %v4402, %v4540
      %v4573 = vmul.f32 %v4404, %v4541
      %v4574 = vmul.f32 %v4406, %v4542
      %v4575 = vmul.f32 %v4408, %v4543
      %v4576 = vmul.f32 %v4410, %v4544
      %v4577 = vmul.f32 %v4412, %v4545
      %v4578 = vmul.f32 %v4414, %v4546
      %v4579 = vmul.f32 %v4416, %v4547
      %v4580 = vmul.f32 %v4418, %v4548
      %v4581 = vmul.f32 %v4420, %v4549
      %v4582 = vmul.f32 %v4422, %v4550
      %v4583 = vpack.c.bf16 %v4551, %v4551
      %v4584 = vpack.c.bf16 %v4552, %v4552
      %v4585 = vpack.c.bf16 %v4553, %v4553
      %v4586 = vpack.c.bf16 %v4554, %v4554
      %v4587 = vpack.c.bf16 %v4555, %v4555
      %v4588 = vpack.c.bf16 %v4556, %v4556
      %v4589 = vpack.c.bf16 %v4557, %v4557
      %v4590 = vpack.c.bf16 %v4558, %v4558
      %v4591 = vpack.c.bf16 %v4559, %v4559
      %v4592 = vpack.c.bf16 %v4560, %v4560
      %v4593 = vpack.c.bf16 %v4561, %v4561
      %v4594 = vpack.c.bf16 %v4562, %v4562
      %v4595 = vpack.c.bf16 %v4563, %v4563
      %v4596 = vpack.c.bf16 %v4564, %v4564
      %v4597 = vpack.c.bf16 %v4565, %v4565
      %v4598 = vpack.c.bf16 %v4566, %v4566
      %v4599 = vpack.c.bf16 %v4567, %v4567
      %v4600 = vpack.c.bf16 %v4568, %v4568
      %v4601 = vpack.c.bf16 %v4569, %v4569
      %v4602 = vpack.c.bf16 %v4570, %v4570
      %v4603 = vpack.c.bf16 %v4571, %v4571
      %v4604 = vpack.c.bf16 %v4572, %v4572
      %v4605 = vpack.c.bf16 %v4573, %v4573
      %v4606 = vpack.c.bf16 %v4574, %v4574
      %v4607 = vpack.c.bf16 %v4575, %v4575
      %v4608 = vpack.c.bf16 %v4576, %v4576
      %v4609 = vpack.c.bf16 %v4577, %v4577
      %v4610 = vpack.c.bf16 %v4578, %v4578
      %v4611 = vpack.c.bf16 %v4579, %v4579
      %v4612 = vpack.c.bf16 %v4580, %v4580
      %v4613 = vpack.c.bf16 %v4581, %v4581
      %v4614 = vpack.c.bf16 %v4582, %v4582
      %v4623 = vunpack.c.l.b16 %v4583
      %v4624 = vunpack.c.l.b16 %v4584
      %v4625 = vunpack.c.l.b16 %v4585
      %v4626 = vunpack.c.l.b16 %v4586
      %v4627 = vunpack.c.l.b16 %v4587
      %v4628 = vunpack.c.l.b16 %v4588
      %v4629 = vunpack.c.l.b16 %v4589
      %v4630 = vunpack.c.l.b16 %v4590
      %v4631 = vpack.c.b16 %v4624, %v4623
      %v4632 = vpack.c.b16 %v4626, %v4625
      %v4633 = vpack.c.b16 %v4628, %v4627
      %v4634 = vpack.c.b16 %v4630, %v4629
      %4635 = vrot.lane.b32.xlu0 %v587, 40
      %v4636 = vpop.permute.xlu0 %4635
      %4637 = vrot.lane.b32.xlu0 %v588, 40
      %v4638 = vpop.permute.xlu0 %4637
      %4639 = vrot.lane.b32.xlu0 %v589, 40
      %v4640 = vpop.permute.xlu0 %4639
      %4641 = vrot.lane.b32.xlu0 %v590, 40
      %v4642 = vpop.permute.xlu0 %4641
      %v4648 = vsel %vm896, %v4631, 0
      %v4651 = vsel %vm896, %v4632, 0
      %v4654 = vsel %vm896, %v4633, 0
      %v4657 = vsel %vm896, %v4634, 0
      %4659 = vmatpush.bf16.msra.mxu0 0
      %4660 = vmatpush.bf16.msra.mxu0 0
      %4661 = vmatpush.bf16.msra.mxu0 0
      %4662 = vmatpush.bf16.msra.mxu0 0
      %4663 = vmatpush.bf16.msra.mxu0 %v4642
      %4664 = vmatpush.bf16.msra.mxu0 %v4640
      %4665 = vmatpush.bf16.msra.mxu0 %v4638
      %4666 = vmatpush.bf16.msra.mxu0 %v4636
      %4667 = vmatmul.bf16.gmra.mxu0 %v4648
      %v4668 = vpop.f32.mrf.mxu0
      %v4669 = vadd.f32 0.0, %v4668
      %v4670 = vpop.f32.mrf.mxu0
      %v4671 = vadd.f32 0.0, %v4670
      %4672 = vmatmul.bf16.gmra.mxu0 %v4651
      %v4673 = vpop.f32.mrf.mxu0
      %v4674 = vadd.f32 0.0, %v4673
      %v4675 = vpop.f32.mrf.mxu0
      %v4676 = vadd.f32 0.0, %v4675
      %4677 = vmatmul.bf16.gmra.mxu0 %v4654
      %v4678 = vpop.f32.mrf.mxu0
      %v4679 = vadd.f32 0.0, %v4678
      %v4680 = vpop.f32.mrf.mxu0
      %v4681 = vadd.f32 0.0, %v4680
      %4682 = vmatmul.bf16.gmra.mxu0 %v4657
      %v4683 = vpop.f32.mrf.mxu0
      %v4684 = vadd.f32 0.0, %v4683
      %v4685 = vpop.f32.mrf.mxu0
      %v4686 = vadd.f32 0.0, %v4685
      %4687 = vdwg.mxu0
      %v4696 = vunpack.c.l.b16 %v4591
      %v4697 = vunpack.c.l.b16 %v4592
      %v4698 = vunpack.c.l.b16 %v4593
      %v4699 = vunpack.c.l.b16 %v4594
      %v4700 = vunpack.c.l.b16 %v4595
      %v4701 = vunpack.c.l.b16 %v4596
      %v4702 = vunpack.c.l.b16 %v4597
      %v4703 = vunpack.c.l.b16 %v4598
      %v4704 = vpack.c.b16 %v4697, %v4696
      %v4705 = vpack.c.b16 %v4699, %v4698
      %v4706 = vpack.c.b16 %v4701, %v4700
      %v4707 = vpack.c.b16 %v4703, %v4702
      %4708 = vrot.lane.b32.xlu0 %v669, 40
      %v4709 = vpop.permute.xlu0 %4708
      %4710 = vrot.lane.b32.xlu0 %v670, 40
      %v4711 = vpop.permute.xlu0 %4710
      %4712 = vrot.lane.b32.xlu0 %v671, 40
      %v4713 = vpop.permute.xlu0 %4712
      %4714 = vrot.lane.b32.xlu0 %v672, 40
      %v4715 = vpop.permute.xlu0 %4714
      %v4721 = vsel %vm896, %v4704, 0
      %v4724 = vsel %vm896, %v4705, 0
      %v4727 = vsel %vm896, %v4706, 0
      %v4730 = vsel %vm896, %v4707, 0
      %4732 = vmatpush.bf16.msra.mxu0 0
      %4733 = vmatpush.bf16.msra.mxu0 0
      %4734 = vmatpush.bf16.msra.mxu0 0
      %4735 = vmatpush.bf16.msra.mxu0 0
      %4736 = vmatpush.bf16.msra.mxu0 %v4715
      %4737 = vmatpush.bf16.msra.mxu0 %v4713
      %4738 = vmatpush.bf16.msra.mxu0 %v4711
      %4739 = vmatpush.bf16.msra.mxu0 %v4709
      %4740 = vmatmul.bf16.gmra.mxu0 %v4721
      %v4741 = vpop.f32.mrf.mxu0
      %v4742 = vadd.f32 0.0, %v4741
      %v4743 = vpop.f32.mrf.mxu0
      %v4744 = vadd.f32 0.0, %v4743
      %4745 = vmatmul.bf16.gmra.mxu0 %v4724
      %v4746 = vpop.f32.mrf.mxu0
      %v4747 = vadd.f32 0.0, %v4746
      %v4748 = vpop.f32.mrf.mxu0
      %v4749 = vadd.f32 0.0, %v4748
      %4750 = vmatmul.bf16.gmra.mxu0 %v4727
      %v4751 = vpop.f32.mrf.mxu0
      %v4752 = vadd.f32 0.0, %v4751
      %v4753 = vpop.f32.mrf.mxu0
      %v4754 = vadd.f32 0.0, %v4753
      %4755 = vmatmul.bf16.gmra.mxu0 %v4730
      %v4756 = vpop.f32.mrf.mxu0
      %v4757 = vadd.f32 0.0, %v4756
      %v4758 = vpop.f32.mrf.mxu0
      %v4759 = vadd.f32 0.0, %v4758
      %4760 = vdwg.mxu0
      %v4769 = vunpack.c.l.b16 %v4599
      %v4770 = vunpack.c.l.b16 %v4600
      %v4771 = vunpack.c.l.b16 %v4601
      %v4772 = vunpack.c.l.b16 %v4602
      %v4773 = vunpack.c.l.b16 %v4603
      %v4774 = vunpack.c.l.b16 %v4604
      %v4775 = vunpack.c.l.b16 %v4605
      %v4776 = vunpack.c.l.b16 %v4606
      %v4777 = vpack.c.b16 %v4770, %v4769
      %v4778 = vpack.c.b16 %v4772, %v4771
      %v4779 = vpack.c.b16 %v4774, %v4773
      %v4780 = vpack.c.b16 %v4776, %v4775
      %4781 = vrot.lane.b32.xlu0 %v750, 40
      %v4782 = vpop.permute.xlu0 %4781
      %4783 = vrot.lane.b32.xlu0 %v751, 40
      %v4784 = vpop.permute.xlu0 %4783
      %4785 = vrot.lane.b32.xlu0 %v752, 40
      %v4786 = vpop.permute.xlu0 %4785
      %4787 = vrot.lane.b32.xlu0 %v753, 40
      %v4788 = vpop.permute.xlu0 %4787
      %v4794 = vsel %vm896, %v4777, 0
      %v4797 = vsel %vm896, %v4778, 0
      %v4800 = vsel %vm896, %v4779, 0
      %v4803 = vsel %vm896, %v4780, 0
      %4805 = vmatpush.bf16.msra.mxu0 0
      %4806 = vmatpush.bf16.msra.mxu0 0
      %4807 = vmatpush.bf16.msra.mxu0 0
      %4808 = vmatpush.bf16.msra.mxu0 0
      %4809 = vmatpush.bf16.msra.mxu0 %v4788
      %4810 = vmatpush.bf16.msra.mxu0 %v4786
      %4811 = vmatpush.bf16.msra.mxu0 %v4784
      %4812 = vmatpush.bf16.msra.mxu0 %v4782
      %4813 = vmatmul.bf16.gmra.mxu0 %v4794
      %v4814 = vpop.f32.mrf.mxu0
      %v4815 = vadd.f32 0.0, %v4814
      %v4816 = vpop.f32.mrf.mxu0
      %v4817 = vadd.f32 0.0, %v4816
      %4818 = vmatmul.bf16.gmra.mxu0 %v4797
      %v4819 = vpop.f32.mrf.mxu0
      %v4820 = vadd.f32 0.0, %v4819
      %v4821 = vpop.f32.mrf.mxu0
      %v4822 = vadd.f32 0.0, %v4821
      %4823 = vmatmul.bf16.gmra.mxu0 %v4800
      %v4824 = vpop.f32.mrf.mxu0
      %v4825 = vadd.f32 0.0, %v4824
      %v4826 = vpop.f32.mrf.mxu0
      %v4827 = vadd.f32 0.0, %v4826
      %4828 = vmatmul.bf16.gmra.mxu0 %v4803
      %v4829 = vpop.f32.mrf.mxu0
      %v4830 = vadd.f32 0.0, %v4829
      %v4831 = vpop.f32.mrf.mxu0
      %v4832 = vadd.f32 0.0, %v4831
      %4833 = vdwg.mxu0
      %v4842 = vunpack.c.l.b16 %v4607
      %v4843 = vunpack.c.l.b16 %v4608
      %v4844 = vunpack.c.l.b16 %v4609
      %v4845 = vunpack.c.l.b16 %v4610
      %v4846 = vunpack.c.l.b16 %v4611
      %v4847 = vunpack.c.l.b16 %v4612
      %v4848 = vunpack.c.l.b16 %v4613
      %v4849 = vunpack.c.l.b16 %v4614
      %v4850 = vpack.c.b16 %v4843, %v4842
      %v4851 = vpack.c.b16 %v4845, %v4844
      %v4852 = vpack.c.b16 %v4847, %v4846
      %v4853 = vpack.c.b16 %v4849, %v4848
      %4854 = vrot.lane.b32.xlu0 %v831, 40
      %v4855 = vpop.permute.xlu0 %4854
      %4856 = vrot.lane.b32.xlu0 %v832, 40
      %v4857 = vpop.permute.xlu0 %4856
      %4858 = vrot.lane.b32.xlu0 %v833, 40
      %v4859 = vpop.permute.xlu0 %4858
      %4860 = vrot.lane.b32.xlu0 %v834, 40
      %v4861 = vpop.permute.xlu0 %4860
      %v4867 = vsel %vm896, %v4850, 0
      %v4870 = vsel %vm896, %v4851, 0
      %v4873 = vsel %vm896, %v4852, 0
      %v4876 = vsel %vm896, %v4853, 0
      %4878 = vmatpush.bf16.msra.mxu0 0
      %4879 = vmatpush.bf16.msra.mxu0 0
      %4880 = vmatpush.bf16.msra.mxu0 0
      %4881 = vmatpush.bf16.msra.mxu0 0
      %4882 = vmatpush.bf16.msra.mxu0 %v4861
      %4883 = vmatpush.bf16.msra.mxu0 %v4859
      %4884 = vmatpush.bf16.msra.mxu0 %v4857
      %4885 = vmatpush.bf16.msra.mxu0 %v4855
      %4886 = vmatmul.bf16.gmra.mxu0 %v4867
      %v4887 = vpop.f32.mrf.mxu0
      %v4888 = vadd.f32 0.0, %v4887
      %v4889 = vpop.f32.mrf.mxu0
      %v4890 = vadd.f32 0.0, %v4889
      %4891 = vmatmul.bf16.gmra.mxu0 %v4870
      %v4892 = vpop.f32.mrf.mxu0
      %v4893 = vadd.f32 0.0, %v4892
      %v4894 = vpop.f32.mrf.mxu0
      %v4895 = vadd.f32 0.0, %v4894
      %4896 = vmatmul.bf16.gmra.mxu0 %v4873
      %v4897 = vpop.f32.mrf.mxu0
      %v4898 = vadd.f32 0.0, %v4897
      %v4899 = vpop.f32.mrf.mxu0
      %v4900 = vadd.f32 0.0, %v4899
      %4901 = vmatmul.bf16.gmra.mxu0 %v4876
      %v4902 = vpop.f32.mrf.mxu0
      %v4903 = vadd.f32 0.0, %v4902
      %v4904 = vpop.f32.mrf.mxu0
      %v4905 = vadd.f32 0.0, %v4904
      %4906 = vdwg.mxu0
      %v4907 = vpack.c.bf16 %v4669, %v4669
      %v4908 = vpack.c.bf16 %v4671, %v4671
      %v4909 = vpack.c.bf16 %v4674, %v4674
      %v4910 = vpack.c.bf16 %v4676, %v4676
      %v4911 = vpack.c.bf16 %v4679, %v4679
      %v4912 = vpack.c.bf16 %v4681, %v4681
      %v4913 = vpack.c.bf16 %v4684, %v4684
      %v4914 = vpack.c.bf16 %v4686, %v4686
      %v4915 = vpack.c.bf16 %v4742, %v4742
      %v4916 = vpack.c.bf16 %v4744, %v4744
      %v4917 = vpack.c.bf16 %v4747, %v4747
      %v4918 = vpack.c.bf16 %v4749, %v4749
      %v4919 = vpack.c.bf16 %v4752, %v4752
      %v4920 = vpack.c.bf16 %v4754, %v4754
      %v4921 = vpack.c.bf16 %v4757, %v4757
      %v4922 = vpack.c.bf16 %v4759, %v4759
      %v4923 = vpack.c.bf16 %v4815, %v4815
      %v4924 = vpack.c.bf16 %v4817, %v4817
      %v4925 = vpack.c.bf16 %v4820, %v4820
      %v4926 = vpack.c.bf16 %v4822, %v4822
      %v4927 = vpack.c.bf16 %v4825, %v4825
      %v4928 = vpack.c.bf16 %v4827, %v4827
      %v4929 = vpack.c.bf16 %v4830, %v4830
      %v4930 = vpack.c.bf16 %v4832, %v4832
      %v4931 = vpack.c.bf16 %v4888, %v4888
      %v4932 = vpack.c.bf16 %v4890, %v4890
      %v4933 = vpack.c.bf16 %v4893, %v4893
      %v4934 = vpack.c.bf16 %v4895, %v4895
      %v4935 = vpack.c.bf16 %v4898, %v4898
      %v4936 = vpack.c.bf16 %v4900, %v4900
      %v4937 = vpack.c.bf16 %v4903, %v4903
      %v4938 = vpack.c.bf16 %v4905, %v4905
      %4971 = vrot.lane.b32.xlu0 %v4907, 24
      %v4972 = vpop.permute.xlu0 %4971
      %4973 = vrot.lane.b32.xlu0 %v4908, 24
      %v4974 = vpop.permute.xlu0 %4973
      %4975 = vrot.lane.b32.xlu0 %v4909, 24
      %v4976 = vpop.permute.xlu0 %4975
      %4977 = vrot.lane.b32.xlu0 %v4910, 24
      %v4978 = vpop.permute.xlu0 %4977
      %4979 = vrot.lane.b32.xlu0 %v4911, 24
      %v4980 = vpop.permute.xlu0 %4979
      %4981 = vrot.lane.b32.xlu0 %v4912, 24
      %v4982 = vpop.permute.xlu0 %4981
      %4983 = vrot.lane.b32.xlu0 %v4913, 24
      %v4984 = vpop.permute.xlu0 %4983
      %4985 = vrot.lane.b32.xlu0 %v4914, 24
      %v4986 = vpop.permute.xlu0 %4985
      %4987 = vrot.lane.b32.xlu0 %v4915, 24
      %v4988 = vpop.permute.xlu0 %4987
      %4989 = vrot.lane.b32.xlu0 %v4916, 24
      %v4990 = vpop.permute.xlu0 %4989
      %4991 = vrot.lane.b32.xlu0 %v4917, 24
      %v4992 = vpop.permute.xlu0 %4991
      %4993 = vrot.lane.b32.xlu0 %v4918, 24
      %v4994 = vpop.permute.xlu0 %4993
      %4995 = vrot.lane.b32.xlu0 %v4919, 24
      %v4996 = vpop.permute.xlu0 %4995
      %4997 = vrot.lane.b32.xlu0 %v4920, 24
      %v4998 = vpop.permute.xlu0 %4997
      %4999 = vrot.lane.b32.xlu0 %v4921, 24
      %v5000 = vpop.permute.xlu0 %4999
      %5001 = vrot.lane.b32.xlu0 %v4922, 24
      %v5002 = vpop.permute.xlu0 %5001
      %5003 = vrot.lane.b32.xlu0 %v4923, 24
      %v5004 = vpop.permute.xlu0 %5003
      %5005 = vrot.lane.b32.xlu0 %v4924, 24
      %v5006 = vpop.permute.xlu0 %5005
      %5007 = vrot.lane.b32.xlu0 %v4925, 24
      %v5008 = vpop.permute.xlu0 %5007
      %5009 = vrot.lane.b32.xlu0 %v4926, 24
      %v5010 = vpop.permute.xlu0 %5009
      %5011 = vrot.lane.b32.xlu0 %v4927, 24
      %v5012 = vpop.permute.xlu0 %5011
      %5013 = vrot.lane.b32.xlu0 %v4928, 24
      %v5014 = vpop.permute.xlu0 %5013
      %5015 = vrot.lane.b32.xlu0 %v4929, 24
      %v5016 = vpop.permute.xlu0 %5015
      %5017 = vrot.lane.b32.xlu0 %v4930, 24
      %v5018 = vpop.permute.xlu0 %5017
      %5019 = vrot.lane.b32.xlu0 %v4931, 24
      %v5020 = vpop.permute.xlu0 %5019
      %5021 = vrot.lane.b32.xlu0 %v4932, 24
      %v5022 = vpop.permute.xlu0 %5021
      %5023 = vrot.lane.b32.xlu0 %v4933, 24
      %v5024 = vpop.permute.xlu0 %5023
      %5025 = vrot.lane.b32.xlu0 %v4934, 24
      %v5026 = vpop.permute.xlu0 %5025
      %5027 = vrot.lane.b32.xlu0 %v4935, 24
      %v5028 = vpop.permute.xlu0 %5027
      %5029 = vrot.lane.b32.xlu0 %v4936, 24
      %v5030 = vpop.permute.xlu0 %5029
      %5031 = vrot.lane.b32.xlu0 %v4937, 24
      %v5032 = vpop.permute.xlu0 %5031
      %5033 = vrot.lane.b32.xlu0 %v4938, 24
      %v5034 = vpop.permute.xlu0 %5033
      %vm5067 = vcmask 257216
      %5068 = vst.msk [vmem:[#allocation2] sm:$0xf] %vm5067, %v4972
      %5069 = vst.msk [vmem:[#allocation2 + $0x4] sm:$0xf] %vm5067, %v4974
      %5070 = vst.msk [vmem:[#allocation2 + $0x8] sm:$0xf] %vm5067, %v4976
      %5071 = vst.msk [vmem:[#allocation2 + $0xc] sm:$0xf] %vm5067, %v4978
      %5072 = vst.msk [vmem:[#allocation2 + $0x10] sm:$0xf] %vm5067, %v4980
      %5073 = vst.msk [vmem:[#allocation2 + $0x14] sm:$0xf] %vm5067, %v4982
      %5074 = vst.msk [vmem:[#allocation2 + $0x18] sm:$0xf] %vm5067, %v4984
      %5075 = vst.msk [vmem:[#allocation2 + $0x1c] sm:$0xf] %vm5067, %v4986
      %5076 = vst.msk [vmem:[#allocation2 + $0x20] sm:$0xf] %vm5067, %v4988
      %5077 = vst.msk [vmem:[#allocation2 + $0x24] sm:$0xf] %vm5067, %v4990
      %5078 = vst.msk [vmem:[#allocation2 + $0x28] sm:$0xf] %vm5067, %v4992
      %5079 = vst.msk [vmem:[#allocation2 + $0x2c] sm:$0xf] %vm5067, %v4994
      %5080 = vst.msk [vmem:[#allocation2 + $0x30] sm:$0xf] %vm5067, %v4996
      %5081 = vst.msk [vmem:[#allocation2 + $0x34] sm:$0xf] %vm5067, %v4998
      %5082 = vst.msk [vmem:[#allocation2 + $0x38] sm:$0xf] %vm5067, %v5000
      %5083 = vst.msk [vmem:[#allocation2 + $0x3c] sm:$0xf] %vm5067, %v5002
      %5084 = vst.msk [vmem:[#allocation2 + $0x40] sm:$0xf] %vm5067, %v5004
      %5085 = vst.msk [vmem:[#allocation2 + $0x44] sm:$0xf] %vm5067, %v5006
      %5086 = vst.msk [vmem:[#allocation2 + $0x48] sm:$0xf] %vm5067, %v5008
      %5087 = vst.msk [vmem:[#allocation2 + $0x4c] sm:$0xf] %vm5067, %v5010
      %5088 = vst.msk [vmem:[#allocation2 + $0x50] sm:$0xf] %vm5067, %v5012
      %5089 = vst.msk [vmem:[#allocation2 + $0x54] sm:$0xf] %vm5067, %v5014
      %5090 = vst.msk [vmem:[#allocation2 + $0x58] sm:$0xf] %vm5067, %v5016
      %5091 = vst.msk [vmem:[#allocation2 + $0x5c] sm:$0xf] %vm5067, %v5018
      %5092 = vst.msk [vmem:[#allocation2 + $0x60] sm:$0xf] %vm5067, %v5020
      %5093 = vst.msk [vmem:[#allocation2 + $0x64] sm:$0xf] %vm5067, %v5022
      %5094 = vst.msk [vmem:[#allocation2 + $0x68] sm:$0xf] %vm5067, %v5024
      %5095 = vst.msk [vmem:[#allocation2 + $0x6c] sm:$0xf] %vm5067, %v5026
      %5096 = vst.msk [vmem:[#allocation2 + $0x70] sm:$0xf] %vm5067, %v5028
      %5097 = vst.msk [vmem:[#allocation2 + $0x74] sm:$0xf] %vm5067, %v5030
      %5098 = vst.msk [vmem:[#allocation2 + $0x78] sm:$0xf] %vm5067, %v5032
      %5099 = vst.msk [vmem:[#allocation2 + $0x7c] sm:$0xf] %vm5067, %v5034
      %v5100 = vld [vmem:[#allocation2] sm:$0xf]
      %v5101 = vld [vmem:[#allocation2 + $0x4] sm:$0xf]
      %v5102 = vld [vmem:[#allocation2 + $0x8] sm:$0xf]
      %v5103 = vld [vmem:[#allocation2 + $0xc] sm:$0xf]
      %v5104 = vld [vmem:[#allocation2 + $0x10] sm:$0xf]
      %v5105 = vld [vmem:[#allocation2 + $0x14] sm:$0xf]
      %v5106 = vld [vmem:[#allocation2 + $0x18] sm:$0xf]
      %v5107 = vld [vmem:[#allocation2 + $0x1c] sm:$0xf]
      %v5108 = vld [vmem:[#allocation2 + $0x20] sm:$0xf]
      %v5109 = vld [vmem:[#allocation2 + $0x24] sm:$0xf]
      %v5110 = vld [vmem:[#allocation2 + $0x28] sm:$0xf]
      %v5111 = vld [vmem:[#allocation2 + $0x2c] sm:$0xf]
      %v5112 = vld [vmem:[#allocation2 + $0x30] sm:$0xf]
      %v5113 = vld [vmem:[#allocation2 + $0x34] sm:$0xf]
      %v5114 = vld [vmem:[#allocation2 + $0x38] sm:$0xf]
      %v5115 = vld [vmem:[#allocation2 + $0x3c] sm:$0xf]
      %v5116 = vld [vmem:[#allocation2 + $0x40] sm:$0xf]
      %v5117 = vld [vmem:[#allocation2 + $0x44] sm:$0xf]
      %v5118 = vld [vmem:[#allocation2 + $0x48] sm:$0xf]
      %v5119 = vld [vmem:[#allocation2 + $0x4c] sm:$0xf]
      %v5120 = vld [vmem:[#allocation2 + $0x50] sm:$0xf]
      %v5121 = vld [vmem:[#allocation2 + $0x54] sm:$0xf]
      %v5122 = vld [vmem:[#allocation2 + $0x58] sm:$0xf]
      %v5123 = vld [vmem:[#allocation2 + $0x5c] sm:$0xf]
      %v5124 = vld [vmem:[#allocation2 + $0x60] sm:$0xf]
      %v5125 = vld [vmem:[#allocation2 + $0x64] sm:$0xf]
      %v5126 = vld [vmem:[#allocation2 + $0x68] sm:$0xf]
      %v5127 = vld [vmem:[#allocation2 + $0x6c] sm:$0xf]
      %v5128 = vld [vmem:[#allocation2 + $0x70] sm:$0xf]
      %v5129 = vld [vmem:[#allocation2 + $0x74] sm:$0xf]
      %v5130 = vld [vmem:[#allocation2 + $0x78] sm:$0xf]
      %v5131 = vld [vmem:[#allocation2 + $0x7c] sm:$0xf]
      %v5132 = vld [vmem:[%s4] sm:$0xf]
      %v5133 = vld [vmem:[%s4 + $0x4] sm:$0xf]
      %v5134 = vld [vmem:[%s4 + $0x8] sm:$0xf]
      %v5135 = vld [vmem:[%s4 + $0xc] sm:$0xf]
      %v5136 = vld [vmem:[%s5] sm:$0x1]
      %v5138 = vperm.slane %v5136, 0
      %v5172 = vunpack.c.l.b16 %v5100
      %v5173 = vunpack.c.l.b16 %v5101
      %v5174 = vunpack.c.l.b16 %v5102
      %v5175 = vunpack.c.l.b16 %v5103
      %v5176 = vunpack.c.l.b16 %v5104
      %v5177 = vunpack.c.l.b16 %v5105
      %v5178 = vunpack.c.l.b16 %v5106
      %v5179 = vunpack.c.l.b16 %v5107
      %v5180 = vunpack.c.l.b16 %v5108
      %v5181 = vunpack.c.l.b16 %v5109
      %v5182 = vunpack.c.l.b16 %v5110
      %v5183 = vunpack.c.l.b16 %v5111
      %v5184 = vunpack.c.l.b16 %v5112
      %v5185 = vunpack.c.l.b16 %v5113
      %v5186 = vunpack.c.l.b16 %v5114
      %v5187 = vunpack.c.l.b16 %v5115
      %v5188 = vunpack.c.l.b16 %v5116
      %v5189 = vunpack.c.l.b16 %v5117
      %v5190 = vunpack.c.l.b16 %v5118
      %v5191 = vunpack.c.l.b16 %v5119
      %v5192 = vunpack.c.l.b16 %v5120
      %v5193 = vunpack.c.l.b16 %v5121
      %v5194 = vunpack.c.l.b16 %v5122
      %v5195 = vunpack.c.l.b16 %v5123
      %v5196 = vunpack.c.l.b16 %v5124
      %v5197 = vunpack.c.l.b16 %v5125
      %v5198 = vunpack.c.l.b16 %v5126
      %v5199 = vunpack.c.l.b16 %v5127
      %v5200 = vunpack.c.l.b16 %v5128
      %v5201 = vunpack.c.l.b16 %v5129
      %v5202 = vunpack.c.l.b16 %v5130
      %v5203 = vunpack.c.l.b16 %v5131
      %v5204 = vpack.c.b16 %v5173, %v5172
      %v5205 = vpack.c.b16 %v5175, %v5174
      %v5206 = vpack.c.b16 %v5177, %v5176
      %v5207 = vpack.c.b16 %v5179, %v5178
      %v5208 = vpack.c.b16 %v5181, %v5180
      %v5209 = vpack.c.b16 %v5183, %v5182
      %v5210 = vpack.c.b16 %v5185, %v5184
      %v5211 = vpack.c.b16 %v5187, %v5186
      %v5212 = vpack.c.b16 %v5189, %v5188
      %v5213 = vpack.c.b16 %v5191, %v5190
      %v5214 = vpack.c.b16 %v5193, %v5192
      %v5215 = vpack.c.b16 %v5195, %v5194
      %v5216 = vpack.c.b16 %v5197, %v5196
      %v5217 = vpack.c.b16 %v5199, %v5198
      %v5218 = vpack.c.b16 %v5201, %v5200
      %v5219 = vpack.c.b16 %v5203, %v5202
      %v5224 = vunpack.c.l.b16 %v5132
      %v5225 = vunpack.c.l.b16 %v5133
      %v5226 = vunpack.c.l.b16 %v5134
      %v5227 = vunpack.c.l.b16 %v5135
      %v5228 = vpack.c.b16 %v5225, %v5224
      %v5229 = vpack.c.b16 %v5227, %v5226
      %v5233 = vsel %vm393, %v5204, 0
      %v5236 = vsel %vm393, %v5205, 0
      %v5239 = vsel %vm393, %v5206, 0
      %v5242 = vsel %vm393, %v5207, 0
      %v5245 = vsel %vm393, %v5208, 0
      %v5248 = vsel %vm393, %v5209, 0
      %v5251 = vsel %vm393, %v5210, 0
      %v5254 = vsel %vm393, %v5211, 0
      %v5257 = vsel %vm393, %v5212, 0
      %v5260 = vsel %vm393, %v5213, 0
      %v5263 = vsel %vm393, %v5214, 0
      %v5266 = vsel %vm393, %v5215, 0
      %v5269 = vsel %vm393, %v5216, 0
      %v5272 = vsel %vm393, %v5217, 0
      %v5275 = vsel %vm393, %v5218, 0
      %v5278 = vsel %vm393, %v5219, 0
      %5280 = vmatpush.bf16.msra.mxu0 0
      %5281 = vmatpush.bf16.msra.mxu0 0
      %5282 = vmatpush.bf16.msra.mxu0 0
      %5283 = vmatpush.bf16.msra.mxu0 0
      %5284 = vmatpush.bf16.msra.mxu0 0
      %5285 = vmatpush.bf16.msra.mxu0 0
      %5286 = vmatpush.bf16.msra.mxu0 %v5229
      %5287 = vmatpush.bf16.msra.mxu0 %v5228
      %5288 = vmatmul.bf16.gmra.mxu0 %v5233
      %v5289 = vpop.f32.mrf.mxu0
      %v5290 = vadd.f32 %v5138, %v5289
      %v5291 = vpop.f32.mrf.mxu0
      %v5292 = vadd.f32 %v5138, %v5291
      %5293 = vmatmul.bf16.gmra.mxu0 %v5236
      %v5294 = vpop.f32.mrf.mxu0
      %v5295 = vadd.f32 %v5138, %v5294
      %v5296 = vpop.f32.mrf.mxu0
      %v5297 = vadd.f32 %v5138, %v5296
      %5298 = vmatmul.bf16.gmra.mxu0 %v5239
      %v5299 = vpop.f32.mrf.mxu0
      %v5300 = vadd.f32 %v5138, %v5299
      %v5301 = vpop.f32.mrf.mxu0
      %v5302 = vadd.f32 %v5138, %v5301
      %5303 = vmatmul.bf16.gmra.mxu0 %v5242
      %v5304 = vpop.f32.mrf.mxu0
      %v5305 = vadd.f32 %v5138, %v5304
      %v5306 = vpop.f32.mrf.mxu0
      %v5307 = vadd.f32 %v5138, %v5306
      %5308 = vmatmul.bf16.gmra.mxu0 %v5245
      %v5309 = vpop.f32.mrf.mxu0
      %v5310 = vadd.f32 %v5138, %v5309
      %v5311 = vpop.f32.mrf.mxu0
      %v5312 = vadd.f32 %v5138, %v5311
      %5313 = vmatmul.bf16.gmra.mxu0 %v5248
      %v5314 = vpop.f32.mrf.mxu0
      %v5315 = vadd.f32 %v5138, %v5314
      %v5316 = vpop.f32.mrf.mxu0
      %v5317 = vadd.f32 %v5138, %v5316
      %5318 = vmatmul.bf16.gmra.mxu0 %v5251
      %v5319 = vpop.f32.mrf.mxu0
      %v5320 = vadd.f32 %v5138, %v5319
      %v5321 = vpop.f32.mrf.mxu0
      %v5322 = vadd.f32 %v5138, %v5321
      %5323 = vmatmul.bf16.gmra.mxu0 %v5254
      %v5324 = vpop.f32.mrf.mxu0
      %v5325 = vadd.f32 %v5138, %v5324
      %v5326 = vpop.f32.mrf.mxu0
      %v5327 = vadd.f32 %v5138, %v5326
      %5328 = vmatmul.bf16.gmra.mxu0 %v5257
      %v5329 = vpop.f32.mrf.mxu0
      %v5330 = vadd.f32 %v5138, %v5329
      %v5331 = vpop.f32.mrf.mxu0
      %v5332 = vadd.f32 %v5138, %v5331
      %5333 = vmatmul.bf16.gmra.mxu0 %v5260
      %v5334 = vpop.f32.mrf.mxu0
      %v5335 = vadd.f32 %v5138, %v5334
      %v5336 = vpop.f32.mrf.mxu0
      %v5337 = vadd.f32 %v5138, %v5336
      %5338 = vmatmul.bf16.gmra.mxu0 %v5263
      %v5339 = vpop.f32.mrf.mxu0
      %v5340 = vadd.f32 %v5138, %v5339
      %v5341 = vpop.f32.mrf.mxu0
      %v5342 = vadd.f32 %v5138, %v5341
      %5343 = vmatmul.bf16.gmra.mxu0 %v5266
      %v5344 = vpop.f32.mrf.mxu0
      %v5345 = vadd.f32 %v5138, %v5344
      %v5346 = vpop.f32.mrf.mxu0
      %v5347 = vadd.f32 %v5138, %v5346
      %5348 = vmatmul.bf16.gmra.mxu0 %v5269
      %v5349 = vpop.f32.mrf.mxu0
      %v5350 = vadd.f32 %v5138, %v5349
      %v5351 = vpop.f32.mrf.mxu0
      %v5352 = vadd.f32 %v5138, %v5351
      %5353 = vmatmul.bf16.gmra.mxu0 %v5272
      %v5354 = vpop.f32.mrf.mxu0
      %v5355 = vadd.f32 %v5138, %v5354
      %v5356 = vpop.f32.mrf.mxu0
      %v5357 = vadd.f32 %v5138, %v5356
      %5358 = vmatmul.bf16.gmra.mxu0 %v5275
      %v5359 = vpop.f32.mrf.mxu0
      %v5360 = vadd.f32 %v5138, %v5359
      %v5361 = vpop.f32.mrf.mxu0
      %v5362 = vadd.f32 %v5138, %v5361
      %5363 = vmatmul.bf16.gmra.mxu0 %v5278
      %v5364 = vpop.f32.mrf.mxu0
      %v5365 = vadd.f32 %v5138, %v5364
      %v5366 = vpop.f32.mrf.mxu0
      %v5367 = vadd.f32 %v5138, %v5366
      %5368 = vdwg.mxu0
      %5369 = vst.msk [vmem:[%s258] sm:$0xff] %vm393, %v5290
      %5370 = vst.msk [vmem:[%s258 + $0x8] sm:$0xff] %vm393, %v5292
      %5371 = vst.msk [vmem:[%s258 + $0x10] sm:$0xff] %vm393, %v5295
      %5372 = vst.msk [vmem:[%s258 + $0x18] sm:$0xff] %vm393, %v5297
      %5373 = vst.msk [vmem:[%s258 + $0x20] sm:$0xff] %vm393, %v5300
      %5374 = vst.msk [vmem:[%s258 + $0x28] sm:$0xff] %vm393, %v5302
      %5375 = vst.msk [vmem:[%s258 + $0x30] sm:$0xff] %vm393, %v5305
      %5376 = vst.msk [vmem:[%s258 + $0x38] sm:$0xff] %vm393, %v5307
      %5377 = vst.msk [vmem:[%s258 + $0x40] sm:$0xff] %vm393, %v5310
      %5378 = vst.msk [vmem:[%s258 + $0x48] sm:$0xff] %vm393, %v5312
      %5379 = vst.msk [vmem:[%s258 + $0x50] sm:$0xff] %vm393, %v5315
      %5380 = vst.msk [vmem:[%s258 + $0x58] sm:$0xff] %vm393, %v5317
      %5381 = vst.msk [vmem:[%s258 + $0x60] sm:$0xff] %vm393, %v5320
      %5382 = vst.msk [vmem:[%s258 + $0x68] sm:$0xff] %vm393, %v5322
      %5383 = vst.msk [vmem:[%s258 + $0x70] sm:$0xff] %vm393, %v5325
      %5384 = vst.msk [vmem:[%s258 + $0x78] sm:$0xff] %vm393, %v5327
      %5385 = vst.msk [vmem:[%s258 + $0x80] sm:$0xff] %vm393, %v5330
      %5386 = vst.msk [vmem:[%s258 + $0x88] sm:$0xff] %vm393, %v5332
      %5387 = vst.msk [vmem:[%s258 + $0x90] sm:$0xff] %vm393, %v5335
      %5388 = vst.msk [vmem:[%s258 + $0x98] sm:$0xff] %vm393, %v5337
      %5389 = vst.msk [vmem:[%s258 + $0xa0] sm:$0xff] %vm393, %v5340
      %5390 = vst.msk [vmem:[%s258 + $0xa8] sm:$0xff] %vm393, %v5342
      %5391 = vst.msk [vmem:[%s258 + $0xb0] sm:$0xff] %vm393, %v5345
      %5392 = vst.msk [vmem:[%s258 + $0xb8] sm:$0xff] %vm393, %v5347
      %5393 = vst.msk [vmem:[%s258 + $0xc0] sm:$0xff] %vm393, %v5350
      %5394 = vst.msk [vmem:[%s258 + $0xc8] sm:$0xff] %vm393, %v5352
      %5395 = vst.msk [vmem:[%s258 + $0xd0] sm:$0xff] %vm393, %v5355
      %5396 = vst.msk [vmem:[%s258 + $0xd8] sm:$0xff] %vm393, %v5357
      %5397 = vst.msk [vmem:[%s258 + $0xe0] sm:$0xff] %vm393, %v5360
      %5398 = vst.msk [vmem:[%s258 + $0xe8] sm:$0xff] %vm393, %v5362
      %5399 = vst.msk [vmem:[%s258 + $0xf0] sm:$0xff] %vm393, %v5365
      %5400 = vst.msk [vmem:[%s258 + $0xf8] sm:$0xff] %vm393, %v5367
      %s5401 = smul.u32 4, %s17
      %p5402 = scmp.lt.s32.totalorder %s5401, 7
      %s5403 = scalar_select %p5402, %s5401, 7
      %s5404 = smul.addr %s5403, 8
      %s5405 = smul.addr %s5404, 8
      %s5406 = scalar_lea.vmem %s6, %s5405
      // Predicated region
      $region45: #{tpu_custom_call.1} parent=43 // pred_check
        %p5407 = pneg %p166
      $region46: #{tpu_custom_call.1} parent=43 // pred_check_branch
        %5409 = sbr.rel (%p5407) target = $region48
      $region47: #{tpu_custom_call.1} parent=43 // pred_region
        %s5410 = smul.u32 4, %s17
      $region48: #{tpu_custom_call.1} parent=43 // pred_fallthru
        _
    $region44: #{tpu_custom_call.1} parent=5 // pred_fallthru
      _
    %p5411 = scmp.le.s32.totalorder 2, %s12
    // Predicated region
    $region49: #{tpu_custom_call.1} parent=5 // pred_check
      %p5412 = pneg %p5411
    $region50: #{tpu_custom_call.1} parent=5 // pred_check_branch
      %5414 = sbr.rel (%p5412) target = $region52
    $region51: #{tpu_custom_call.1} parent=5 // pred_region
      %s5415 = ssub.s32 %s12, 2
      // Predicated region
      $region53: #{tpu_custom_call.1} parent=51 // pred_check
        %p5416 = pneg %p172
      $region54: #{tpu_custom_call.1} parent=51 // pred_check_branch
        %5418 = sbr.rel (%p5416) target = $region56
      $region55: #{tpu_custom_call.1} parent=51 // pred_region
        %s5419 = smul.u32 4, %s18
        %p5420 = scmp.lt.s32.totalorder %s5419, 7
        %s5421 = scalar_select %p5420, %s5419, 7
        %s5422 = smul.addr %s5421, 8
        %s5423 = smul.addr %s5422, 8
        %s5424 = scalar_lea.vmem %s6, %s5423
      $region56: #{tpu_custom_call.1} parent=51 // pred_fallthru
        _
    $region52: #{tpu_custom_call.1} parent=5 // pred_fallthru
      _
  $region6: #{tpu_custom_call.1} parent=0 // loop_footer
    %s16 = sadd.s32 1, %s12
  $region7: #{tpu_custom_call.1} parent=0 // loop_footer_branch
    %11 = sbr.rel target = $region3
  $region8: #{tpu_custom_call.1} parent=0 // loop_exit
    _

</llo_original>
